<compile_context>
chip_gen: v7x
topology: tpu7x:2x2x1
jax: 0.10.0
libtpu: 0.0.40
codegen_flags: <defaults>
</compile_context>

<pallas_src>
import functools

import jax
import jax.numpy as jnp
from jax.experimental import pallas as pl
from jax.experimental.pallas import tpu as pltpu

LANES = 128


def _round_up(n, m):
    return ((n + m - 1) // m) * m


def _dla_kernel(x_ref, y_ref, w1_ref, b1_ref, w2_ref, b2_ref, s_ref, py_ref,
                pt_ref, o_ref, *, pack, classes, approx_recip, precision,
                sum_on_mxu):
    """One block of folded rows. In-kernel layout: lane = class*pack + sample."""
    nsteps = classes.bit_length() - 1          # log2(classes)

    def dot(a, b):
        return jnp.dot(a, b, preferred_element_type=jnp.float32,
                       precision=precision)

    def seg_max(z):
        # All-reduce max over each sample's `classes` lanes (residue class mod
        # `pack`): cyclic rolls by pack*2^k stay inside the residue class,
        # visit every member, and leave the result broadcast to all lanes.
        for k in range(nsteps):
            z = jnp.maximum(z, pltpu.roll(z, shift=pack << k, axis=1))
        return z

    def seg_sum_xlu(z):
        for k in range(nsteps):
            z = z + pltpu.roll(z, shift=pack << k, axis=1)
        return z

    def seg_exp_recip(z):
        # Returns (e, r): e = exp(z - per-sample max), r = 1/sum(e) broadcast
        # to every lane of the sample.  Note max_c softmax(z)_c == r.
        e = jnp.exp(z - seg_max(z))
        if sum_on_mxu:
            s = dot(e, s_ref[...])             # per-sample sum on the MXU
        else:
            s = seg_sum_xlu(e)                 # v5e fallback: keep sum on XLU
        return e, pl.reciprocal(s, approx=approx_recip)

    x = x_ref[...]                             # [fb, 128] f32, sample-major
    y = y_ref[...]                             # [fb, 128] f32, sample-major

    # linear1 + softmax1 (sample->class lane permutation pre-folded into W1)
    h = dot(x, w1_ref[...]) + b1_ref[...]
    e1, r1 = seg_exp_recip(h)
    # linear2
    h = dot(e1 * r1, w2_ref[...]) + b2_ref[...]
    # softmax2 + residual:
    #   out1 = e2*r2 ; max(out1) = r2 ; out2 = y*(r2*classes)
    #   out1 + out2 = (e2 + classes*y_cm) * r2   (`classes` folded into py)
    e2, r2 = seg_exp_recip(h)
    z = (e2 + dot(y, py_ref[...])) * r2
    # final softmax, then permute back to sample-major for a lane-dense,
    # transpose-free store.
    e3, r3 = seg_exp_recip(z)
    o_ref[...] = dot(e3 * r3, pt_ref[...])


def make_dla_forward(w1, b1, w2, b2, classes, *, block_rows=2048, exact=False,
                     sum_on_mxu=True):
    """Builds a jitted forward(x, y) with all constant weight prep hoisted."""
    C = int(classes)
    assert LANES % C == 0 and (C & (C - 1)) == 0, (
        "lane-packed kernel requires classes to be a power of two dividing 128")
    # TODO(synk): for classes that don't divide 128, add an unpacked [B, C]
    # fallback path (same math, masked stores).
    P = LANES // C                             # samples packed per 128-lane row
    f32 = jnp.float32

    # ---- constant layout plumbing (computed once, closed over by the jit) ----
    jj = jnp.arange(P)
    cc = jnp.arange(C)
    sm_lane = (jj[:, None] * C + cc[None, :]).reshape(-1)   # sample-major lane
    cm_lane = (cc[None, :] * P + jj[:, None]).reshape(-1)   # class-major lane
    perm_sm_to_cm = jnp.zeros((LANES,), jnp.int32).at[sm_lane].set(cm_lane)
    pm = jnp.zeros((LANES, LANES), f32).at[sm_lane, cm_lane].set(1.0)

    eye_p = jnp.eye(P, dtype=f32)
    # Block-interleaved weights (x_cm @ kron(W.T, I_P) == fold_cm(x @ W.T)).
    w1_if = jnp.kron(w1.astype(f32).T, eye_p)                # [128,128]
    w2_f = jnp.kron(w2.astype(f32).T, eye_p)                 # [128,128]
    # Fold the sample->class permutation into W1 (exact row gather, no matmul).
    w1_eff = jnp.take(w1_if, perm_sm_to_cm, axis=0)          # [128,128]
    # Per-sample sum-and-broadcast matrix (stays within residue class mod P).
    s_mat = jnp.kron(jnp.ones((C, C), f32), eye_p)           # [128,128]
    # y permutation with `factor` folded in, and the inverse output permutation.
    py_mat = pm * float(C)                                   # [128,128]
    pt_mat = pm.T                                            # [128,128]
    # Biases, class-major broadcast: lane c*P + j -> b[c].
    b1_cm = jnp.repeat(b1.reshape(1, C).astype(f32), P, axis=1)   # [1,128]
    b2_cm = jnp.repeat(b2.reshape(1, C).astype(f32), P, axis=1)   # [1,128]

    precision = jax.lax.Precision.HIGHEST if exact else None
    kernel = functools.partial(_dla_kernel, pack=P, classes=C,
                               approx_recip=not exact, precision=precision,
                               sum_on_mxu=sum_on_mxu)

    @jax.jit
    def forward(x, y):
        B = x.shape[0]
        x = x.astype(f32)
        y = y.astype(f32)

        rows = -(-B // P)                      # folded rows needed
        if rows > 8:
            # At least 2 grid steps so the "parallel" axis can shard across
            # v7x's two TensorCores; cap at block_rows, multiple of 8.
            fb = min(block_rows, _round_up(-(-rows // 2), 8))
        else:
            fb = 8
        fb = max(8, (fb // 8) * 8)
        rows_pad = _round_up(rows, fb)
        b_pad = rows_pad * P

        xp = jnp.zeros((b_pad, C), f32).at[:B].set(x)
        yp = jnp.zeros((b_pad, C), f32).at[:B].set(y)
        # Sample-major fold is a plain reshape — no HBM transpose.
        x_sm = xp.reshape(rows_pad, LANES)
        y_sm = yp.reshape(rows_pad, LANES)

        out_sm = pl.pallas_call(
            kernel,
            out_shape=jax.ShapeDtypeStruct((rows_pad, LANES), f32),
            grid=(rows_pad // fb,),
            in_specs=[
                pl.BlockSpec((fb, LANES), lambda i: (i, 0)),     # x (sample-major)
                pl.BlockSpec((fb, LANES), lambda i: (i, 0)),     # y (sample-major)
                pl.BlockSpec((LANES, LANES), lambda i: (0, 0)),  # W1 (perm-folded)
                pl.BlockSpec((1, LANES), lambda i: (0, 0)),      # b1 (class-major)
                pl.BlockSpec((LANES, LANES), lambda i: (0, 0)),  # W2 (interleaved)
                pl.BlockSpec((1, LANES), lambda i: (0, 0)),      # b2
                pl.BlockSpec((LANES, LANES), lambda i: (0, 0)),  # sum matrix
                pl.BlockSpec((LANES, LANES), lambda i: (0, 0)),  # y perm * factor
                pl.BlockSpec((LANES, LANES), lambda i: (0, 0)),  # out perm back
            ],
            out_specs=pl.BlockSpec((fb, LANES), lambda i: (i, 0)),
            compiler_params=pltpu.CompilerParams(
                dimension_semantics=("parallel",),
                vmem_limit_bytes=32 * 1024 * 1024),
        )(x_sm, y_sm, w1_eff, b1_cm, w2_f, b2_cm, s_mat, py_mat, pt_mat)

        # Sample-major unfold is a plain reshape — no HBM transpose.
        return out_sm.reshape(b_pad, C)[:B]

    return forward


if __name__ == "__main__":
    classes = 16

    key = jax.random.PRNGKey(0)
    kx, ky, kw1, kw2, kxl, kyl, kxm, kym = jax.random.split(key, 8)

    # _init_weights: weights ~ N(0, 1), biases zero.
    w1 = jax.random.normal(kw1, (classes, classes), dtype=jnp.float32)
    b1 = jnp.zeros((classes,), dtype=jnp.float32)
    w2 = jax.random.normal(kw2, (classes, classes), dtype=jnp.float32)
    b2 = jnp.zeros((classes,), dtype=jnp.float32)

    hp = jax.lax.Precision.HIGHEST

    def ref(x, y):
        h = jax.nn.softmax(jnp.dot(x, w1.T, precision=hp) + b1, axis=1)
        o1 = jax.nn.softmax(jnp.dot(h, w2.T, precision=hp) + b2, axis=1)
        o2 = y * (jnp.max(o1, axis=1, keepdims=True) * classes)
        return jax.nn.softmax(o1 + o2, axis=1)

    fwd_exact = make_dla_forward(w1, b1, w2, b2, classes, exact=True)
    fwd_fast = make_dla_forward(w1, b1, w2, b2, classes)          # default fast

    # --- small run (module-scale shape), exact path: f32-roundoff-level check
    B = 8
    x = jax.random.normal(kx, (B, classes), dtype=jnp.float32)
    y = jax.random.normal(ky, (B, classes), dtype=jnp.float32)
    out = fwd_exact(x, y)
    jax.block_until_ready(out)
    expected = ref(x, y)
    assert jnp.allclose(out, expected, atol=5e-5, rtol=5e-5), (
        float(jnp.max(jnp.abs(out - expected))))

    # --- same inputs, default fast path (EUP approx reciprocal). Its small
    # relative error is amplified by the max(out1)*classes*y residual, so
    # validate against a correspondingly looser (documented) bound. ---
    out_f = fwd_fast(x, y)
    jax.block_until_ready(out_f)
    assert jnp.allclose(out_f, expected, atol=5e-2, rtol=5e-2), (
        float(jnp.max(jnp.abs(out_f - expected))))

    # --- ragged batch (B not a multiple of the lane pack): padded samples
    # share folded rows with real ones; reductions must stay per-sample. ---
    Bm = 37
    xm = jax.random.normal(kxm, (Bm, classes), dtype=jnp.float32)
    ym = jax.random.normal(kym, (Bm, classes), dtype=jnp.float32)
    out_m = fwd_exact(xm, ym)
    jax.block_until_ready(out_m)
    expected_m = ref(xm, ym)
    assert jnp.allclose(out_m, expected_m, atol=5e-5, rtol=5e-5), (
        float(jnp.max(jnp.abs(out_m - expected_m))))

    # --- batched run exercising a multi-step "parallel" grid (2 blocks) ---
    BL = 4096
    xl = jax.random.normal(kxl, (BL, classes), dtype=jnp.float32)
    yl = jax.random.normal(kyl, (BL, classes), dtype=jnp.float32)
    out_l = fwd_exact(xl, yl)
    jax.block_until_ready(out_l)
    expected_l = ref(xl, yl)
    assert jnp.allclose(out_l, expected_l, atol=5e-5, rtol=5e-5), (
        float(jnp.max(jnp.abs(out_l - expected_l))))

    print("KERNEL_OK")
</pallas_src>

<mosaic_0001>
module attributes {stable_mosaic.version = 11 : i64} {
  func.func @_dla_kernel(%arg0: i32, %arg1: memref<8x128xf32, #tpu.memory_space<vmem>>, %arg2: memref<8x128xf32, #tpu.memory_space<vmem>>, %arg3: memref<128x128xf32, #tpu.memory_space<vmem>>, %arg4: memref<1x128xf32, #tpu.memory_space<vmem>>, %arg5: memref<128x128xf32, #tpu.memory_space<vmem>>, %arg6: memref<1x128xf32, #tpu.memory_space<vmem>>, %arg7: memref<128x128xf32, #tpu.memory_space<vmem>>, %arg8: memref<128x128xf32, #tpu.memory_space<vmem>>, %arg9: memref<128x128xf32, #tpu.memory_space<vmem>>, %arg10: memref<8x128xf32, #tpu.memory_space<vmem>>) attributes {dimension_semantics = [#tpu.dimension_semantics<parallel>], iteration_bounds = array<i64: 1>, scalar_prefetch = 0 : i64, scratch_operands = 0 : i64, tpu.core_type = #tpu.core_type<tc>, window_params = [{transform_indices = @transform_0, window_bounds = array<i64: 8, 128>}, {transform_indices = @transform_1, window_bounds = array<i64: 8, 128>}, {pipeline_mode = #tpu.pipeline_mode<synchronous>, transform_indices = @transform_2, window_bounds = array<i64: 128, 128>}, {pipeline_mode = #tpu.pipeline_mode<synchronous>, transform_indices = @transform_3, window_bounds = array<i64: 1, 128>}, {pipeline_mode = #tpu.pipeline_mode<synchronous>, transform_indices = @transform_4, window_bounds = array<i64: 128, 128>}, {pipeline_mode = #tpu.pipeline_mode<synchronous>, transform_indices = @transform_5, window_bounds = array<i64: 1, 128>}, {pipeline_mode = #tpu.pipeline_mode<synchronous>, transform_indices = @transform_6, window_bounds = array<i64: 128, 128>}, {pipeline_mode = #tpu.pipeline_mode<synchronous>, transform_indices = @transform_7, window_bounds = array<i64: 128, 128>}, {pipeline_mode = #tpu.pipeline_mode<synchronous>, transform_indices = @transform_8, window_bounds = array<i64: 128, 128>}, {transform_indices = @transform_9, window_bounds = array<i64: 8, 128>}]} {
    %c0 = arith.constant 0 : index
    %c0_0 = arith.constant 0 : index
    %0 = vector.load %arg1[%c0, %c0_0] : memref<8x128xf32, #tpu.memory_space<vmem>>, vector<8x128xf32>
    %c0_1 = arith.constant 0 : index
    %c0_2 = arith.constant 0 : index
    %1 = vector.load %arg2[%c0_1, %c0_2] : memref<8x128xf32, #tpu.memory_space<vmem>>, vector<8x128xf32>
    %c0_3 = arith.constant 0 : index
    %c0_4 = arith.constant 0 : index
    %2 = vector.load %arg3[%c0_3, %c0_4] : memref<128x128xf32, #tpu.memory_space<vmem>>, vector<128x128xf32>
    %cst = arith.constant dense<0.000000e+00> : vector<8x128xf32>
    %3 = tpu.matmul %0, %2, %cst {dimension_numbers = #tpu.dot_dimension_numbers<[1], [0], [0], [1], [0, 0, 1, 1], [], []>, precision = #tpu.contract_precision<fp32>} : vector<8x128xf32>, vector<128x128xf32>, vector<8x128xf32> -> vector<8x128xf32>
    %c0_5 = arith.constant 0 : index
    %c0_6 = arith.constant 0 : index
    %4 = vector.load %arg4[%c0_5, %c0_6] : memref<1x128xf32, #tpu.memory_space<vmem>>, vector<1x128xf32>
    %5 = vector.broadcast %4 : vector<1x128xf32> to vector<8x128xf32>
    %6 = arith.addf %3, %5 : vector<8x128xf32>
    %c8_i32 = arith.constant 8 : i32
    %7 = tpu.dynamic_rotate %6 by %c8_i32 dim 1 : vector<8x128xf32>, i32 -> vector<8x128xf32>
    %8 = arith.maximumf %6, %7 : vector<8x128xf32>
    %c16_i32 = arith.constant 16 : i32
    %9 = tpu.dynamic_rotate %8 by %c16_i32 dim 1 : vector<8x128xf32>, i32 -> vector<8x128xf32>
    %10 = arith.maximumf %8, %9 : vector<8x128xf32>
    %c32_i32 = arith.constant 32 : i32
    %11 = tpu.dynamic_rotate %10 by %c32_i32 dim 1 : vector<8x128xf32>, i32 -> vector<8x128xf32>
    %12 = arith.maximumf %10, %11 : vector<8x128xf32>
    %c64_i32 = arith.constant 64 : i32
    %13 = tpu.dynamic_rotate %12 by %c64_i32 dim 1 : vector<8x128xf32>, i32 -> vector<8x128xf32>
    %14 = arith.maximumf %12, %13 : vector<8x128xf32>
    %15 = arith.subf %6, %14 : vector<8x128xf32>
    %16 = math.exp %15 : vector<8x128xf32>
    %c0_7 = arith.constant 0 : index
    %c0_8 = arith.constant 0 : index
    %17 = vector.load %arg7[%c0_7, %c0_8] : memref<128x128xf32, #tpu.memory_space<vmem>>, vector<128x128xf32>
    %cst_9 = arith.constant dense<0.000000e+00> : vector<8x128xf32>
    %18 = tpu.matmul %16, %17, %cst_9 {dimension_numbers = #tpu.dot_dimension_numbers<[1], [0], [0], [1], [0, 0, 1, 1], [], []>, precision = #tpu.contract_precision<fp32>} : vector<8x128xf32>, vector<128x128xf32>, vector<8x128xf32> -> vector<8x128xf32>
    %19 = tpu.reciprocal %18 : vector<8x128xf32> -> vector<8x128xf32>
    %20 = arith.mulf %16, %19 : vector<8x128xf32>
    %c0_10 = arith.constant 0 : index
    %c0_11 = arith.constant 0 : index
    %21 = vector.load %arg5[%c0_10, %c0_11] : memref<128x128xf32, #tpu.memory_space<vmem>>, vector<128x128xf32>
    %cst_12 = arith.constant dense<0.000000e+00> : vector<8x128xf32>
    %22 = tpu.matmul %20, %21, %cst_12 {dimension_numbers = #tpu.dot_dimension_numbers<[1], [0], [0], [1], [0, 0, 1, 1], [], []>, precision = #tpu.contract_precision<fp32>} : vector<8x128xf32>, vector<128x128xf32>, vector<8x128xf32> -> vector<8x128xf32>
    %c0_13 = arith.constant 0 : index
    %c0_14 = arith.constant 0 : index
    %23 = vector.load %arg6[%c0_13, %c0_14] : memref<1x128xf32, #tpu.memory_space<vmem>>, vector<1x128xf32>
    %24 = vector.broadcast %23 : vector<1x128xf32> to vector<8x128xf32>
    %25 = arith.addf %22, %24 : vector<8x128xf32>
    %c8_i32_15 = arith.constant 8 : i32
    %26 = tpu.dynamic_rotate %25 by %c8_i32_15 dim 1 : vector<8x128xf32>, i32 -> vector<8x128xf32>
    %27 = arith.maximumf %25, %26 : vector<8x128xf32>
    %c16_i32_16 = arith.constant 16 : i32
    %28 = tpu.dynamic_rotate %27 by %c16_i32_16 dim 1 : vector<8x128xf32>, i32 -> vector<8x128xf32>
    %29 = arith.maximumf %27, %28 : vector<8x128xf32>
    %c32_i32_17 = arith.constant 32 : i32
    %30 = tpu.dynamic_rotate %29 by %c32_i32_17 dim 1 : vector<8x128xf32>, i32 -> vector<8x128xf32>
    %31 = arith.maximumf %29, %30 : vector<8x128xf32>
    %c64_i32_18 = arith.constant 64 : i32
    %32 = tpu.dynamic_rotate %31 by %c64_i32_18 dim 1 : vector<8x128xf32>, i32 -> vector<8x128xf32>
    %33 = arith.maximumf %31, %32 : vector<8x128xf32>
    %34 = arith.subf %25, %33 : vector<8x128xf32>
    %35 = math.exp %34 : vector<8x128xf32>
    %c0_19 = arith.constant 0 : index
    %c0_20 = arith.constant 0 : index
    %36 = vector.load %arg7[%c0_19, %c0_20] : memref<128x128xf32, #tpu.memory_space<vmem>>, vector<128x128xf32>
    %cst_21 = arith.constant dense<0.000000e+00> : vector<8x128xf32>
    %37 = tpu.matmul %35, %36, %cst_21 {dimension_numbers = #tpu.dot_dimension_numbers<[1], [0], [0], [1], [0, 0, 1, 1], [], []>, precision = #tpu.contract_precision<fp32>} : vector<8x128xf32>, vector<128x128xf32>, vector<8x128xf32> -> vector<8x128xf32>
    %38 = tpu.reciprocal %37 : vector<8x128xf32> -> vector<8x128xf32>
    %c0_22 = arith.constant 0 : index
    %c0_23 = arith.constant 0 : index
    %39 = vector.load %arg8[%c0_22, %c0_23] : memref<128x128xf32, #tpu.memory_space<vmem>>, vector<128x128xf32>
    %cst_24 = arith.constant dense<0.000000e+00> : vector<8x128xf32>
    %40 = tpu.matmul %1, %39, %cst_24 {dimension_numbers = #tpu.dot_dimension_numbers<[1], [0], [0], [1], [0, 0, 1, 1], [], []>, precision = #tpu.contract_precision<fp32>} : vector<8x128xf32>, vector<128x128xf32>, vector<8x128xf32> -> vector<8x128xf32>
    %41 = arith.addf %35, %40 : vector<8x128xf32>
    %42 = arith.mulf %41, %38 : vector<8x128xf32>
    %c8_i32_25 = arith.constant 8 : i32
    %43 = tpu.dynamic_rotate %42 by %c8_i32_25 dim 1 : vector<8x128xf32>, i32 -> vector<8x128xf32>
    %44 = arith.maximumf %42, %43 : vector<8x128xf32>
    %c16_i32_26 = arith.constant 16 : i32
    %45 = tpu.dynamic_rotate %44 by %c16_i32_26 dim 1 : vector<8x128xf32>, i32 -> vector<8x128xf32>
    %46 = arith.maximumf %44, %45 : vector<8x128xf32>
    %c32_i32_27 = arith.constant 32 : i32
    %47 = tpu.dynamic_rotate %46 by %c32_i32_27 dim 1 : vector<8x128xf32>, i32 -> vector<8x128xf32>
    %48 = arith.maximumf %46, %47 : vector<8x128xf32>
    %c64_i32_28 = arith.constant 64 : i32
    %49 = tpu.dynamic_rotate %48 by %c64_i32_28 dim 1 : vector<8x128xf32>, i32 -> vector<8x128xf32>
    %50 = arith.maximumf %48, %49 : vector<8x128xf32>
    %51 = arith.subf %42, %50 : vector<8x128xf32>
    %52 = math.exp %51 : vector<8x128xf32>
    %c0_29 = arith.constant 0 : index
    %c0_30 = arith.constant 0 : index
    %53 = vector.load %arg7[%c0_29, %c0_30] : memref<128x128xf32, #tpu.memory_space<vmem>>, vector<128x128xf32>
    %cst_31 = arith.constant dense<0.000000e+00> : vector<8x128xf32>
    %54 = tpu.matmul %52, %53, %cst_31 {dimension_numbers = #tpu.dot_dimension_numbers<[1], [0], [0], [1], [0, 0, 1, 1], [], []>, precision = #tpu.contract_precision<fp32>} : vector<8x128xf32>, vector<128x128xf32>, vector<8x128xf32> -> vector<8x128xf32>
    %55 = tpu.reciprocal %54 : vector<8x128xf32> -> vector<8x128xf32>
    %56 = arith.mulf %52, %55 : vector<8x128xf32>
    %c0_32 = arith.constant 0 : index
    %c0_33 = arith.constant 0 : index
    %57 = vector.load %arg9[%c0_32, %c0_33] : memref<128x128xf32, #tpu.memory_space<vmem>>, vector<128x128xf32>
    %cst_34 = arith.constant dense<0.000000e+00> : vector<8x128xf32>
    %58 = tpu.matmul %56, %57, %cst_34 {dimension_numbers = #tpu.dot_dimension_numbers<[1], [0], [0], [1], [0, 0, 1, 1], [], []>, precision = #tpu.contract_precision<fp32>} : vector<8x128xf32>, vector<128x128xf32>, vector<8x128xf32> -> vector<8x128xf32>
    %c0_35 = arith.constant 0 : index
    %c0_36 = arith.constant 0 : index
    %59 = vector.load %arg10[%c0_35, %c0_36] : memref<8x128xf32, #tpu.memory_space<vmem>>, vector<8x128xf32>
    tpu.vector_store %arg10[%c0_35, %c0_36], %58 {strides = array<i32>} : memref<8x128xf32, #tpu.memory_space<vmem>>, vector<8x128xf32>,
    return
  }
  func.func @transform_0(%arg0: i32) -> (i32, i32) {
    %c0_i32 = arith.constant 0 : i32
    %c0_i32_0 = arith.constant 0 : i32
    return %arg0, %c0_i32 : i32, i32
  }
  func.func @transform_1(%arg0: i32) -> (i32, i32) {
    %c0_i32 = arith.constant 0 : i32
    %c0_i32_0 = arith.constant 0 : i32
    return %arg0, %c0_i32 : i32, i32
  }
  func.func @transform_2(%arg0: i32) -> (i32, i32) {
    %c0_i32 = arith.constant 0 : i32
    %c0_i32_0 = arith.constant 0 : i32
    %c0_i32_1 = arith.constant 0 : i32
    return %c0_i32, %c0_i32_0 : i32, i32
  }
  func.func @transform_3(%arg0: i32) -> (i32, i32) {
    %c0_i32 = arith.constant 0 : i32
    %c0_i32_0 = arith.constant 0 : i32
    %c0_i32_1 = arith.constant 0 : i32
    return %c0_i32, %c0_i32_0 : i32, i32
  }
  func.func @transform_4(%arg0: i32) -> (i32, i32) {
    %c0_i32 = arith.constant 0 : i32
    %c0_i32_0 = arith.constant 0 : i32
    %c0_i32_1 = arith.constant 0 : i32
    return %c0_i32, %c0_i32_0 : i32, i32
  }
  func.func @transform_5(%arg0: i32) -> (i32, i32) {
    %c0_i32 = arith.constant 0 : i32
    %c0_i32_0 = arith.constant 0 : i32
    %c0_i32_1 = arith.constant 0 : i32
    return %c0_i32, %c0_i32_0 : i32, i32
  }
  func.func @transform_6(%arg0: i32) -> (i32, i32) {
    %c0_i32 = arith.constant 0 : i32
    %c0_i32_0 = arith.constant 0 : i32
    %c0_i32_1 = arith.constant 0 : i32
    return %c0_i32, %c0_i32_0 : i32, i32
  }
  func.func @transform_7(%arg0: i32) -> (i32, i32) {
    %c0_i32 = arith.constant 0 : i32
    %c0_i32_0 = arith.constant 0 : i32
    %c0_i32_1 = arith.constant 0 : i32
    return %c0_i32, %c0_i32_0 : i32, i32
  }
  func.func @transform_8(%arg0: i32) -> (i32, i32) {
    %c0_i32 = arith.constant 0 : i32
    %c0_i32_0 = arith.constant 0 : i32
    %c0_i32_1 = arith.constant 0 : i32
    return %c0_i32, %c0_i32_0 : i32, i32
  }
  func.func @transform_9(%arg0: i32) -> (i32, i32) {
    %c0_i32 = arith.constant 0 : i32
    %c0_i32_0 = arith.constant 0 : i32
    return %arg0, %c0_i32 : i32, i32
  }
}

</mosaic_0001>

<llo_original>
// kernel: forward.1
$region0: #{forward.1}
  #allocation0 [shape = 'u32[]', space=smem, size = 0x4, offset = 0x4, fixed_abs, tag = 'smem constant byte address 0x4 - core index']
  #allocation1 [shape = 'u32[144,128]{1,0:T(1,128)}', space=vmem, size = 0x12000, scoped, tag = 'internal scratch']
  %s0 = inlined_call_operand.vmem [shape: f32[8,128], index: 0, kind: input, shape index: {}]
  %s1 = inlined_call_operand.vmem [shape: f32[8,128], index: 1, kind: input, shape index: {}]
  %s2 = inlined_call_operand.hbm [shape: f32[128,128], index: 2, kind: input, shape index: {}]
  %s3 = inlined_call_operand.vmem [shape: f32[1,128], index: 3, kind: input, shape index: {}, may-alias: {3,5}]
  %s4 = inlined_call_operand.vmem [shape: f32[128,128], index: 4, kind: input, shape index: {}]
  %s5 = inlined_call_operand.vmem [shape: f32[1,128], index: 5, kind: input, shape index: {}, may-alias: {3,5}]
  %s6 = inlined_call_operand.vmem [shape: f32[128,128], index: 6, kind: input, shape index: {}]
  %s7 = inlined_call_operand.hbm [shape: f32[128,128], index: 7, kind: input, shape index: {}]
  %s8 = inlined_call_operand.hbm [shape: f32[128,128], index: 8, kind: input, shape index: {}]
  %s9 = inlined_call_operand.vmem [shape: f32[8,128], index: 9, kind: output, shape index: {}]
  %s10 = sld [smem:[#allocation0]]
  $region58: #{forward.1} parent=0
    _
  %s12 = ssub.s32 1, %s10
  %s13 = scalar_select 0, %s12, %s10
  $region1: #{forward.1} parent=0
    #allocation2 [shape = 'u8[65536]{0}', space=vmem, size = 0x10000, scoped, tag = 'input window, operand 2, single buffered']
    #allocation3 [shape = 's32[1]{0}', space=sflag, size = 0x4, scoped, tag = 'scoped memory for forward.1']
    #allocation4 [shape = 'u8[65536]{0}', space=vmem, size = 0x10000, scoped, tag = 'input window, operand 7, single buffered']
    #allocation5 [shape = 's32[1]{0}', space=sflag, size = 0x4, scoped, tag = 'scoped memory for forward.1']
    #allocation6 [shape = 'u8[65536]{0}', space=vmem, size = 0x10000, scoped, tag = 'input window, operand 8, single buffered']
    %14 = vsyncpa [#allocation3], 0
    %15 = vsyncpa [#allocation5], 0
    // Predicated region
    $region2: #{forward.1} parent=1 // pred_check
      _
    $region3: #{forward.1} parent=1 // pred_check_branch
      %17 = sbr.rel (0) target = $region5
    $region4: #{forward.1} parent=1 // pred_region
      _
    $region5: #{forward.1} parent=1 // pred_fallthru
      _
    // Predicated region
    $region6: #{forward.1} parent=1 // pred_check
      _
    $region7: #{forward.1} parent=1 // pred_check_branch
      %19 = sbr.rel (0) target = $region9
    $region8: #{forward.1} parent=1 // pred_region
      _
    $region9: #{forward.1} parent=1 // pred_fallthru
      _
    // Predicated region
    $region10: #{forward.1} parent=1 // pred_check
      _
    $region11: #{forward.1} parent=1 // pred_check_branch
      %21 = sbr.rel (0) target = $region13
    $region12: #{forward.1} parent=1 // pred_region
      %s23 = ssub.s32 2048, 2048
      %24 = vsyncadd [#allocation3], %s23
      %s25 = sshll.u32 [#allocation2], 4
      %s26 = int_to_ptr.vmem [resolvable:$true] %s25
      %31 = dma.hbm_to_vmem [thread:$0]  %s2, 2048, %s26, [#allocation3], 128, 128, 8
    $region13: #{forward.1} parent=1 // pred_fallthru
      _
    // Predicated region
    $region14: #{forward.1} parent=1 // pred_check
      _
    $region15: #{forward.1} parent=1 // pred_check_branch
      %33 = sbr.rel (0) target = $region17
    $region16: #{forward.1} parent=1 // pred_region
      _
    $region17: #{forward.1} parent=1 // pred_fallthru
      _
    // Predicated region
    $region18: #{forward.1} parent=1 // pred_check
      _
    $region19: #{forward.1} parent=1 // pred_check_branch
      %35 = sbr.rel (0) target = $region21
    $region20: #{forward.1} parent=1 // pred_region
      _
    $region21: #{forward.1} parent=1 // pred_fallthru
      _
    // Predicated region
    $region22: #{forward.1} parent=1 // pred_check
      _
    $region23: #{forward.1} parent=1 // pred_check_branch
      %37 = sbr.rel (0) target = $region25
    $region24: #{forward.1} parent=1 // pred_region
      _
    $region25: #{forward.1} parent=1 // pred_fallthru
      _
    // Predicated region
    $region26: #{forward.1} parent=1 // pred_check
      _
    $region27: #{forward.1} parent=1 // pred_check_branch
      %39 = sbr.rel (0) target = $region29
    $region28: #{forward.1} parent=1 // pred_region
      _
    $region29: #{forward.1} parent=1 // pred_fallthru
      _
    // Predicated region
    $region30: #{forward.1} parent=1 // pred_check
      _
    $region31: #{forward.1} parent=1 // pred_check_branch
      %41 = sbr.rel (0) target = $region33
    $region32: #{forward.1} parent=1 // pred_region
      %s43 = ssub.s32 2048, 2048
      %44 = vsyncadd [#allocation5], %s43
      %s45 = sshll.u32 [#allocation4], 4
      %s46 = int_to_ptr.vmem [resolvable:$true] %s45
      %51 = dma.hbm_to_vmem [thread:$0]  %s7, 2048, %s46, [#allocation5], 128, 128, 8
    $region33: #{forward.1} parent=1 // pred_fallthru
      _
    // Predicated region
    $region34: #{forward.1} parent=1 // pred_check
      _
    $region35: #{forward.1} parent=1 // pred_check_branch
      %53 = sbr.rel (0) target = $region37
    $region36: #{forward.1} parent=1 // pred_region
      %s55 = ssub.s32 2048, 2048
      %56 = vsyncadd [#allocation5], %s55
      %s57 = sshll.u32 [#allocation6], 4
      %s58 = int_to_ptr.vmem [resolvable:$true] %s57
      %63 = dma.hbm_to_vmem [thread:$0]  %s8, 2048, %s58, [#allocation5], 128, 128, 8
    $region37: #{forward.1} parent=1 // pred_fallthru
      _
    // Predicated region
    $region38: #{forward.1} parent=1 // pred_check
      _
    $region39: #{forward.1} parent=1 // pred_check_branch
      %65 = sbr.rel (0) target = $region41
    $region40: #{forward.1} parent=1 // pred_region
      %66 = dma.done [#allocation3], 2048
    $region41: #{forward.1} parent=1 // pred_fallthru
      _
    // Predicated region
    $region42: #{forward.1} parent=1 // pred_check
      _
    $region43: #{forward.1} parent=1 // pred_check_branch
      %68 = sbr.rel (0) target = $region45
    $region44: #{forward.1} parent=1 // pred_region
      %69 = dma.done [#allocation5], 2048
    $region45: #{forward.1} parent=1 // pred_fallthru
      _
    // Predicated region
    $region46: #{forward.1} parent=1 // pred_check
      _
    $region47: #{forward.1} parent=1 // pred_check_branch
      %71 = sbr.rel (0) target = $region49
    $region48: #{forward.1} parent=1 // pred_region
      %72 = dma.done [#allocation5], 2048
    $region49: #{forward.1} parent=1 // pred_fallthru
      _
    %v73 = vld [vmem:[%s0] sm:$0xff]
    %v74 = vld [vmem:[%s1] sm:$0xff]
    %v75 = vld [vmem:[#allocation2] sm:$0xff]
    %v76 = vld [vmem:[#allocation2 + $0x8] sm:$0xff]
    %v77 = vld [vmem:[#allocation2 + $0x10] sm:$0xff]
    %v78 = vld [vmem:[#allocation2 + $0x18] sm:$0xff]
    %v79 = vld [vmem:[#allocation2 + $0x20] sm:$0xff]
    %v80 = vld [vmem:[#allocation2 + $0x28] sm:$0xff]
    %v81 = vld [vmem:[#allocation2 + $0x30] sm:$0xff]
    %v82 = vld [vmem:[#allocation2 + $0x38] sm:$0xff]
    %v83 = vld [vmem:[#allocation2 + $0x40] sm:$0xff]
    %v84 = vld [vmem:[#allocation2 + $0x48] sm:$0xff]
    %v85 = vld [vmem:[#allocation2 + $0x50] sm:$0xff]
    %v86 = vld [vmem:[#allocation2 + $0x58] sm:$0xff]
    %v87 = vld [vmem:[#allocation2 + $0x60] sm:$0xff]
    %v88 = vld [vmem:[#allocation2 + $0x68] sm:$0xff]
    %v89 = vld [vmem:[#allocation2 + $0x70] sm:$0xff]
    %v90 = vld [vmem:[#allocation2 + $0x78] sm:$0xff]
    %v91 = vld [vmem:[%s3] sm:$0x1]
    %v93 = vlaneseq
    %v94 = vshrl.u32 %v93, 7
    %v95 = vsub.s32 0, %v94
    %v96 = vrot.slane %v91, %v95
    %98 = vmatprep.subr.mxu0 0.0
    %v99 = vand.u32 %v75, 4294901760
    %100 = vmatpush1.msra.mxu0 %v99
    %101 = vmatprep.subr.mxu0 0.0
    %v102 = vand.u32 %v76, 4294901760
    %103 = vmatpush1.msra.mxu0 %v102
    %104 = vmatprep.subr.mxu0 0.0
    %v105 = vand.u32 %v77, 4294901760
    %106 = vmatpush1.msra.mxu0 %v105
    %107 = vmatprep.subr.mxu0 0.0
    %v108 = vand.u32 %v78, 4294901760
    %109 = vmatpush1.msra.mxu0 %v108
    %110 = vmatprep.subr.mxu0 0.0
    %v111 = vand.u32 %v79, 4294901760
    %112 = vmatpush1.msra.mxu0 %v111
    %113 = vmatprep.subr.mxu0 0.0
    %v114 = vand.u32 %v80, 4294901760
    %115 = vmatpush1.msra.mxu0 %v114
    %116 = vmatprep.subr.mxu0 0.0
    %v117 = vand.u32 %v81, 4294901760
    %118 = vmatpush1.msra.mxu0 %v117
    %119 = vmatprep.subr.mxu0 0.0
    %v120 = vand.u32 %v82, 4294901760
    %121 = vmatpush1.msra.mxu0 %v120
    %122 = vmatprep.subr.mxu0 0.0
    %v123 = vand.u32 %v83, 4294901760
    %124 = vmatpush1.msra.mxu0 %v123
    %125 = vmatprep.subr.mxu0 0.0
    %v126 = vand.u32 %v84, 4294901760
    %127 = vmatpush1.msra.mxu0 %v126
    %128 = vmatprep.subr.mxu0 0.0
    %v129 = vand.u32 %v85, 4294901760
    %130 = vmatpush1.msra.mxu0 %v129
    %131 = vmatprep.subr.mxu0 0.0
    %v132 = vand.u32 %v86, 4294901760
    %133 = vmatpush1.msra.mxu0 %v132
    %134 = vmatprep.subr.mxu0 0.0
    %v135 = vand.u32 %v87, 4294901760
    %136 = vmatpush1.msra.mxu0 %v135
    %137 = vmatprep.subr.mxu0 0.0
    %v138 = vand.u32 %v88, 4294901760
    %139 = vmatpush1.msra.mxu0 %v138
    %140 = vmatprep.subr.mxu0 0.0
    %v141 = vand.u32 %v89, 4294901760
    %142 = vmatpush1.msra.mxu0 %v141
    %143 = vmatprep.subr.mxu0 0.0
    %v144 = vand.u32 %v90, 4294901760
    %145 = vmatpush1.msra.mxu0 %v144
    %146 = vmatprep.subr.mxu0 0.0
    %147 = vmatpush1.msra.mxu0 0.0
    %148 = vmatprep.subr.mxu0 0.0
    %149 = vmatpush1.msra.mxu0 0.0
    %150 = vmatprep.subr.mxu0 0.0
    %151 = vmatpush1.msra.mxu0 0.0
    %152 = vmatprep.subr.mxu0 0.0
    %153 = vmatpush1.msra.mxu0 0.0
    %154 = vmatprep.subr.mxu0 0.0
    %155 = vmatpush1.msra.mxu0 0.0
    %156 = vmatprep.subr.mxu0 0.0
    %157 = vmatpush1.msra.mxu0 0.0
    %158 = vmatprep.subr.mxu0 0.0
    %159 = vmatpush1.msra.mxu0 0.0
    %160 = vmatprep.subr.mxu0 0.0
    %161 = vmatpush1.msra.mxu0 0.0
    %162 = vmatprep.subr.mxu0 0.0
    %163 = vmatpush1.msra.mxu0 0.0
    %164 = vmatprep.subr.mxu0 0.0
    %165 = vmatpush1.msra.mxu0 0.0
    %166 = vmatprep.subr.mxu0 0.0
    %167 = vmatpush1.msra.mxu0 0.0
    %168 = vmatprep.subr.mxu0 0.0
    %169 = vmatpush1.msra.mxu0 0.0
    %170 = vmatprep.subr.mxu0 0.0
    %171 = vmatpush1.msra.mxu0 0.0
    %172 = vmatprep.subr.mxu0 0.0
    %173 = vmatpush1.msra.mxu0 0.0
    %174 = vmatprep.subr.mxu0 0.0
    %175 = vmatpush1.msra.mxu0 0.0
    %176 = vmatprep.subr.mxu0 0.0
    %177 = vmatpush1.msra.mxu0 0.0
    %178 = vmatprep.mubr.f32.mxu0 0.0
    %v179 = vand.u32 %v73, 4294901760
    %v180 = vsub.f32 %v73, %v179
    %v181 = vand.u32 %v180, 4294901760
    %v182 = vsub.f32 %v180, %v181
    %v183 = vand.u32 %v182, 4294901760
    %184 = vmatmul.mubr.f32.gmra.mrb[0].mxu0 %v183
    %v185 = vpop.f32.mrb[0].mxu0
    %v186 = vadd.f32 %v96, %v185
    %v187 = vpop.f32.mrb[0].mxu0
    %188 = vdwg.mxu0
    %189 = vmatprep.subr.mxu0 0.0
    %v190 = vand.u32 %v75, 4294901760
    %v191 = vsub.f32 %v75, %v190
    %v192 = vand.u32 %v191, 4294901760
    %v193 = vsub.f32 %v191, %v192
    %v194 = vand.u32 %v193, 4294901760
    %195 = vmatpush1.msra.mxu0 %v194
    %196 = vmatprep.subr.mxu0 0.0
    %v197 = vand.u32 %v76, 4294901760
    %v198 = vsub.f32 %v76, %v197
    %v199 = vand.u32 %v198, 4294901760
    %v200 = vsub.f32 %v198, %v199
    %v201 = vand.u32 %v200, 4294901760
    %202 = vmatpush1.msra.mxu0 %v201
    %203 = vmatprep.subr.mxu0 0.0
    %v204 = vand.u32 %v77, 4294901760
    %v205 = vsub.f32 %v77, %v204
    %v206 = vand.u32 %v205, 4294901760
    %v207 = vsub.f32 %v205, %v206
    %v208 = vand.u32 %v207, 4294901760
    %209 = vmatpush1.msra.mxu0 %v208
    %210 = vmatprep.subr.mxu0 0.0
    %v211 = vand.u32 %v78, 4294901760
    %v212 = vsub.f32 %v78, %v211
    %v213 = vand.u32 %v212, 4294901760
    %v214 = vsub.f32 %v212, %v213
    %v215 = vand.u32 %v214, 4294901760
    %216 = vmatpush1.msra.mxu0 %v215
    %217 = vmatprep.subr.mxu0 0.0
    %v218 = vand.u32 %v79, 4294901760
    %v219 = vsub.f32 %v79, %v218
    %v220 = vand.u32 %v219, 4294901760
    %v221 = vsub.f32 %v219, %v220
    %v222 = vand.u32 %v221, 4294901760
    %223 = vmatpush1.msra.mxu0 %v222
    %224 = vmatprep.subr.mxu0 0.0
    %v225 = vand.u32 %v80, 4294901760
    %v226 = vsub.f32 %v80, %v225
    %v227 = vand.u32 %v226, 4294901760
    %v228 = vsub.f32 %v226, %v227
    %v229 = vand.u32 %v228, 4294901760
    %230 = vmatpush1.msra.mxu0 %v229
    %231 = vmatprep.subr.mxu0 0.0
    %v232 = vand.u32 %v81, 4294901760
    %v233 = vsub.f32 %v81, %v232
    %v234 = vand.u32 %v233, 4294901760
    %v235 = vsub.f32 %v233, %v234
    %v236 = vand.u32 %v235, 4294901760
    %237 = vmatpush1.msra.mxu0 %v236
    %238 = vmatprep.subr.mxu0 0.0
    %v239 = vand.u32 %v82, 4294901760
    %v240 = vsub.f32 %v82, %v239
    %v241 = vand.u32 %v240, 4294901760
    %v242 = vsub.f32 %v240, %v241
    %v243 = vand.u32 %v242, 4294901760
    %244 = vmatpush1.msra.mxu0 %v243
    %245 = vmatprep.subr.mxu0 0.0
    %v246 = vand.u32 %v83, 4294901760
    %v247 = vsub.f32 %v83, %v246
    %v248 = vand.u32 %v247, 4294901760
    %v249 = vsub.f32 %v247, %v248
    %v250 = vand.u32 %v249, 4294901760
    %251 = vmatpush1.msra.mxu0 %v250
    %252 = vmatprep.subr.mxu0 0.0
    %v253 = vand.u32 %v84, 4294901760
    %v254 = vsub.f32 %v84, %v253
    %v255 = vand.u32 %v254, 4294901760
    %v256 = vsub.f32 %v254, %v255
    %v257 = vand.u32 %v256, 4294901760
    %258 = vmatpush1.msra.mxu0 %v257
    %259 = vmatprep.subr.mxu0 0.0
    %v260 = vand.u32 %v85, 4294901760
    %v261 = vsub.f32 %v85, %v260
    %v262 = vand.u32 %v261, 4294901760
    %v263 = vsub.f32 %v261, %v262
    %v264 = vand.u32 %v263, 4294901760
    %265 = vmatpush1.msra.mxu0 %v264
    %266 = vmatprep.subr.mxu0 0.0
    %v267 = vand.u32 %v86, 4294901760
    %v268 = vsub.f32 %v86, %v267
    %v269 = vand.u32 %v268, 4294901760
    %v270 = vsub.f32 %v268, %v269
    %v271 = vand.u32 %v270, 4294901760
    %272 = vmatpush1.msra.mxu0 %v271
    %273 = vmatprep.subr.mxu0 0.0
    %v274 = vand.u32 %v87, 4294901760
    %v275 = vsub.f32 %v87, %v274
    %v276 = vand.u32 %v275, 4294901760
    %v277 = vsub.f32 %v275, %v276
    %v278 = vand.u32 %v277, 4294901760
    %279 = vmatpush1.msra.mxu0 %v278
    %280 = vmatprep.subr.mxu0 0.0
    %v281 = vand.u32 %v88, 4294901760
    %v282 = vsub.f32 %v88, %v281
    %v283 = vand.u32 %v282, 4294901760
    %v284 = vsub.f32 %v282, %v283
    %v285 = vand.u32 %v284, 4294901760
    %286 = vmatpush1.msra.mxu0 %v285
    %287 = vmatprep.subr.mxu0 0.0
    %v288 = vand.u32 %v89, 4294901760
    %v289 = vsub.f32 %v89, %v288
    %v290 = vand.u32 %v289, 4294901760
    %v291 = vsub.f32 %v289, %v290
    %v292 = vand.u32 %v291, 4294901760
    %293 = vmatpush1.msra.mxu0 %v292
    %294 = vmatprep.subr.mxu0 0.0
    %v295 = vand.u32 %v90, 4294901760
    %v296 = vsub.f32 %v90, %v295
    %v297 = vand.u32 %v296, 4294901760
    %v298 = vsub.f32 %v296, %v297
    %v299 = vand.u32 %v298, 4294901760
    %300 = vmatpush1.msra.mxu0 %v299
    %301 = vmatprep.subr.mxu0 0.0
    %302 = vmatpush1.msra.mxu0 0.0
    %303 = vmatprep.subr.mxu0 0.0
    %304 = vmatpush1.msra.mxu0 0.0
    %305 = vmatprep.subr.mxu0 0.0
    %306 = vmatpush1.msra.mxu0 0.0
    %307 = vmatprep.subr.mxu0 0.0
    %308 = vmatpush1.msra.mxu0 0.0
    %309 = vmatprep.subr.mxu0 0.0
    %310 = vmatpush1.msra.mxu0 0.0
    %311 = vmatprep.subr.mxu0 0.0
    %312 = vmatpush1.msra.mxu0 0.0
    %313 = vmatprep.subr.mxu0 0.0
    %314 = vmatpush1.msra.mxu0 0.0
    %315 = vmatprep.subr.mxu0 0.0
    %316 = vmatpush1.msra.mxu0 0.0
    %317 = vmatprep.subr.mxu0 0.0
    %318 = vmatpush1.msra.mxu0 0.0
    %319 = vmatprep.subr.mxu0 0.0
    %320 = vmatpush1.msra.mxu0 0.0
    %321 = vmatprep.subr.mxu0 0.0
    %322 = vmatpush1.msra.mxu0 0.0
    %323 = vmatprep.subr.mxu0 0.0
    %324 = vmatpush1.msra.mxu0 0.0
    %325 = vmatprep.subr.mxu0 0.0
    %326 = vmatpush1.msra.mxu0 0.0
    %327 = vmatprep.subr.mxu0 0.0
    %328 = vmatpush1.msra.mxu0 0.0
    %329 = vmatprep.subr.mxu0 0.0
    %330 = vmatpush1.msra.mxu0 0.0
    %331 = vmatprep.subr.mxu0 0.0
    %332 = vmatpush1.msra.mxu0 0.0
    %333 = vmatprep.mubr.f32.mxu0 0.0
    %v334 = vand.u32 %v73, 4294901760
    %335 = vmatmul.mubr.f32.gmra.mrb[0].mxu0 %v334
    %v336 = vpop.f32.mrb[0].mxu0
    %v337 = vadd.f32 %v186, %v336
    %v338 = vpop.f32.mrb[0].mxu0
    %339 = vdwg.mxu0
    %340 = vmatprep.subr.mxu0 0.0
    %v341 = vand.u32 %v75, 4294901760
    %v342 = vsub.f32 %v75, %v341
    %343 = vmatpush1.msra.mxu0 %v342
    %344 = vmatprep.subr.mxu0 0.0
    %v345 = vand.u32 %v76, 4294901760
    %v346 = vsub.f32 %v76, %v345
    %347 = vmatpush1.msra.mxu0 %v346
    %348 = vmatprep.subr.mxu0 0.0
    %v349 = vand.u32 %v77, 4294901760
    %v350 = vsub.f32 %v77, %v349
    %351 = vmatpush1.msra.mxu0 %v350
    %352 = vmatprep.subr.mxu0 0.0
    %v353 = vand.u32 %v78, 4294901760
    %v354 = vsub.f32 %v78, %v353
    %355 = vmatpush1.msra.mxu0 %v354
    %356 = vmatprep.subr.mxu0 0.0
    %v357 = vand.u32 %v79, 4294901760
    %v358 = vsub.f32 %v79, %v357
    %359 = vmatpush1.msra.mxu0 %v358
    %360 = vmatprep.subr.mxu0 0.0
    %v361 = vand.u32 %v80, 4294901760
    %v362 = vsub.f32 %v80, %v361
    %363 = vmatpush1.msra.mxu0 %v362
    %364 = vmatprep.subr.mxu0 0.0
    %v365 = vand.u32 %v81, 4294901760
    %v366 = vsub.f32 %v81, %v365
    %367 = vmatpush1.msra.mxu0 %v366
    %368 = vmatprep.subr.mxu0 0.0
    %v369 = vand.u32 %v82, 4294901760
    %v370 = vsub.f32 %v82, %v369
    %371 = vmatpush1.msra.mxu0 %v370
    %372 = vmatprep.subr.mxu0 0.0
    %v373 = vand.u32 %v83, 4294901760
    %v374 = vsub.f32 %v83, %v373
    %375 = vmatpush1.msra.mxu0 %v374
    %376 = vmatprep.subr.mxu0 0.0
    %v377 = vand.u32 %v84, 4294901760
    %v378 = vsub.f32 %v84, %v377
    %379 = vmatpush1.msra.mxu0 %v378
    %380 = vmatprep.subr.mxu0 0.0
    %v381 = vand.u32 %v85, 4294901760
    %v382 = vsub.f32 %v85, %v381
    %383 = vmatpush1.msra.mxu0 %v382
    %384 = vmatprep.subr.mxu0 0.0
    %v385 = vand.u32 %v86, 4294901760
    %v386 = vsub.f32 %v86, %v385
    %387 = vmatpush1.msra.mxu0 %v386
    %388 = vmatprep.subr.mxu0 0.0
    %v389 = vand.u32 %v87, 4294901760
    %v390 = vsub.f32 %v87, %v389
    %391 = vmatpush1.msra.mxu0 %v390
    %392 = vmatprep.subr.mxu0 0.0
    %v393 = vand.u32 %v88, 4294901760
    %v394 = vsub.f32 %v88, %v393
    %395 = vmatpush1.msra.mxu0 %v394
    %396 = vmatprep.subr.mxu0 0.0
    %v397 = vand.u32 %v89, 4294901760
    %v398 = vsub.f32 %v89, %v397
    %399 = vmatpush1.msra.mxu0 %v398
    %400 = vmatprep.subr.mxu0 0.0
    %v401 = vand.u32 %v90, 4294901760
    %v402 = vsub.f32 %v90, %v401
    %403 = vmatpush1.msra.mxu0 %v402
    %404 = vmatprep.subr.mxu0 0.0
    %405 = vmatpush1.msra.mxu0 0.0
    %406 = vmatprep.subr.mxu0 0.0
    %407 = vmatpush1.msra.mxu0 0.0
    %408 = vmatprep.subr.mxu0 0.0
    %409 = vmatpush1.msra.mxu0 0.0
    %410 = vmatprep.subr.mxu0 0.0
    %411 = vmatpush1.msra.mxu0 0.0
    %412 = vmatprep.subr.mxu0 0.0
    %413 = vmatpush1.msra.mxu0 0.0
    %414 = vmatprep.subr.mxu0 0.0
    %415 = vmatpush1.msra.mxu0 0.0
    %416 = vmatprep.subr.mxu0 0.0
    %417 = vmatpush1.msra.mxu0 0.0
    %418 = vmatprep.subr.mxu0 0.0
    %419 = vmatpush1.msra.mxu0 0.0
    %420 = vmatprep.subr.mxu0 0.0
    %421 = vmatpush1.msra.mxu0 0.0
    %422 = vmatprep.subr.mxu0 0.0
    %423 = vmatpush1.msra.mxu0 0.0
    %424 = vmatprep.subr.mxu0 0.0
    %425 = vmatpush1.msra.mxu0 0.0
    %426 = vmatprep.subr.mxu0 0.0
    %427 = vmatpush1.msra.mxu0 0.0
    %428 = vmatprep.subr.mxu0 0.0
    %429 = vmatpush1.msra.mxu0 0.0
    %430 = vmatprep.subr.mxu0 0.0
    %431 = vmatpush1.msra.mxu0 0.0
    %432 = vmatprep.subr.mxu0 0.0
    %433 = vmatpush1.msra.mxu0 0.0
    %434 = vmatprep.subr.mxu0 0.0
    %435 = vmatpush1.msra.mxu0 0.0
    %436 = vmatprep.mubr.f32.mxu0 0.0
    %v437 = vand.u32 %v73, 4294901760
    %v438 = vsub.f32 %v73, %v437
    %439 = vmatmul.mubr.f32.gmra.mrb[0].mxu0 %v438
    %v440 = vpop.f32.mrb[0].mxu0
    %v441 = vadd.f32 %v337, %v440
    %v442 = vpop.f32.mrb[0].mxu0
    %443 = vdwg.mxu0
    %444 = vmatprep.subr.mxu0 0.0
    %v445 = vand.u32 %v75, 4294901760
    %446 = vmatpush1.msra.mxu0 %v445
    %447 = vmatprep.subr.mxu0 0.0
    %v448 = vand.u32 %v76, 4294901760
    %449 = vmatpush1.msra.mxu0 %v448
    %450 = vmatprep.subr.mxu0 0.0
    %v451 = vand.u32 %v77, 4294901760
    %452 = vmatpush1.msra.mxu0 %v451
    %453 = vmatprep.subr.mxu0 0.0
    %v454 = vand.u32 %v78, 4294901760
    %455 = vmatpush1.msra.mxu0 %v454
    %456 = vmatprep.subr.mxu0 0.0
    %v457 = vand.u32 %v79, 4294901760
    %458 = vmatpush1.msra.mxu0 %v457
    %459 = vmatprep.subr.mxu0 0.0
    %v460 = vand.u32 %v80, 4294901760
    %461 = vmatpush1.msra.mxu0 %v460
    %462 = vmatprep.subr.mxu0 0.0
    %v463 = vand.u32 %v81, 4294901760
    %464 = vmatpush1.msra.mxu0 %v463
    %465 = vmatprep.subr.mxu0 0.0
    %v466 = vand.u32 %v82, 4294901760
    %467 = vmatpush1.msra.mxu0 %v466
    %468 = vmatprep.subr.mxu0 0.0
    %v469 = vand.u32 %v83, 4294901760
    %470 = vmatpush1.msra.mxu0 %v469
    %471 = vmatprep.subr.mxu0 0.0
    %v472 = vand.u32 %v84, 4294901760
    %473 = vmatpush1.msra.mxu0 %v472
    %474 = vmatprep.subr.mxu0 0.0
    %v475 = vand.u32 %v85, 4294901760
    %476 = vmatpush1.msra.mxu0 %v475
    %477 = vmatprep.subr.mxu0 0.0
    %v478 = vand.u32 %v86, 4294901760
    %479 = vmatpush1.msra.mxu0 %v478
    %480 = vmatprep.subr.mxu0 0.0
    %v481 = vand.u32 %v87, 4294901760
    %482 = vmatpush1.msra.mxu0 %v481
    %483 = vmatprep.subr.mxu0 0.0
    %v484 = vand.u32 %v88, 4294901760
    %485 = vmatpush1.msra.mxu0 %v484
    %486 = vmatprep.subr.mxu0 0.0
    %v487 = vand.u32 %v89, 4294901760
    %488 = vmatpush1.msra.mxu0 %v487
    %489 = vmatprep.subr.mxu0 0.0
    %v490 = vand.u32 %v90, 4294901760
    %491 = vmatpush1.msra.mxu0 %v490
    %492 = vmatprep.subr.mxu0 0.0
    %493 = vmatpush1.msra.mxu0 0.0
    %494 = vmatprep.subr.mxu0 0.0
    %495 = vmatpush1.msra.mxu0 0.0
    %496 = vmatprep.subr.mxu0 0.0
    %497 = vmatpush1.msra.mxu0 0.0
    %498 = vmatprep.subr.mxu0 0.0
    %499 = vmatpush1.msra.mxu0 0.0
    %500 = vmatprep.subr.mxu0 0.0
    %501 = vmatpush1.msra.mxu0 0.0
    %502 = vmatprep.subr.mxu0 0.0
    %503 = vmatpush1.msra.mxu0 0.0
    %504 = vmatprep.subr.mxu0 0.0
    %505 = vmatpush1.msra.mxu0 0.0
    %506 = vmatprep.subr.mxu0 0.0
    %507 = vmatpush1.msra.mxu0 0.0
    %508 = vmatprep.subr.mxu0 0.0
    %509 = vmatpush1.msra.mxu0 0.0
    %510 = vmatprep.subr.mxu0 0.0
    %511 = vmatpush1.msra.mxu0 0.0
    %512 = vmatprep.subr.mxu0 0.0
    %513 = vmatpush1.msra.mxu0 0.0
    %514 = vmatprep.subr.mxu0 0.0
    %515 = vmatpush1.msra.mxu0 0.0
    %516 = vmatprep.subr.mxu0 0.0
    %517 = vmatpush1.msra.mxu0 0.0
    %518 = vmatprep.subr.mxu0 0.0
    %519 = vmatpush1.msra.mxu0 0.0
    %520 = vmatprep.subr.mxu0 0.0
    %521 = vmatpush1.msra.mxu0 0.0
    %522 = vmatprep.subr.mxu0 0.0
    %523 = vmatpush1.msra.mxu0 0.0
    %524 = vmatprep.mubr.f32.mxu0 0.0
    %v525 = vand.u32 %v73, 4294901760
    %v526 = vsub.f32 %v73, %v525
    %v527 = vand.u32 %v526, 4294901760
    %528 = vmatmul.mubr.f32.gmra.mrb[0].mxu0 %v527
    %v529 = vpop.f32.mrb[0].mxu0
    %v530 = vadd.f32 %v441, %v529
    %v531 = vpop.f32.mrb[0].mxu0
    %532 = vdwg.mxu0
    %533 = vmatprep.subr.mxu0 0.0
    %v534 = vand.u32 %v75, 4294901760
    %v535 = vsub.f32 %v75, %v534
    %v536 = vand.u32 %v535, 4294901760
    %537 = vmatpush1.msra.mxu0 %v536
    %538 = vmatprep.subr.mxu0 0.0
    %v539 = vand.u32 %v76, 4294901760
    %v540 = vsub.f32 %v76, %v539
    %v541 = vand.u32 %v540, 4294901760
    %542 = vmatpush1.msra.mxu0 %v541
    %543 = vmatprep.subr.mxu0 0.0
    %v544 = vand.u32 %v77, 4294901760
    %v545 = vsub.f32 %v77, %v544
    %v546 = vand.u32 %v545, 4294901760
    %547 = vmatpush1.msra.mxu0 %v546
    %548 = vmatprep.subr.mxu0 0.0
    %v549 = vand.u32 %v78, 4294901760
    %v550 = vsub.f32 %v78, %v549
    %v551 = vand.u32 %v550, 4294901760
    %552 = vmatpush1.msra.mxu0 %v551
    %553 = vmatprep.subr.mxu0 0.0
    %v554 = vand.u32 %v79, 4294901760
    %v555 = vsub.f32 %v79, %v554
    %v556 = vand.u32 %v555, 4294901760
    %557 = vmatpush1.msra.mxu0 %v556
    %558 = vmatprep.subr.mxu0 0.0
    %v559 = vand.u32 %v80, 4294901760
    %v560 = vsub.f32 %v80, %v559
    %v561 = vand.u32 %v560, 4294901760
    %562 = vmatpush1.msra.mxu0 %v561
    %563 = vmatprep.subr.mxu0 0.0
    %v564 = vand.u32 %v81, 4294901760
    %v565 = vsub.f32 %v81, %v564
    %v566 = vand.u32 %v565, 4294901760
    %567 = vmatpush1.msra.mxu0 %v566
    %568 = vmatprep.subr.mxu0 0.0
    %v569 = vand.u32 %v82, 4294901760
    %v570 = vsub.f32 %v82, %v569
    %v571 = vand.u32 %v570, 4294901760
    %572 = vmatpush1.msra.mxu0 %v571
    %573 = vmatprep.subr.mxu0 0.0
    %v574 = vand.u32 %v83, 4294901760
    %v575 = vsub.f32 %v83, %v574
    %v576 = vand.u32 %v575, 4294901760
    %577 = vmatpush1.msra.mxu0 %v576
    %578 = vmatprep.subr.mxu0 0.0
    %v579 = vand.u32 %v84, 4294901760
    %v580 = vsub.f32 %v84, %v579
    %v581 = vand.u32 %v580, 4294901760
    %582 = vmatpush1.msra.mxu0 %v581
    %583 = vmatprep.subr.mxu0 0.0
    %v584 = vand.u32 %v85, 4294901760
    %v585 = vsub.f32 %v85, %v584
    %v586 = vand.u32 %v585, 4294901760
    %587 = vmatpush1.msra.mxu0 %v586
    %588 = vmatprep.subr.mxu0 0.0
    %v589 = vand.u32 %v86, 4294901760
    %v590 = vsub.f32 %v86, %v589
    %v591 = vand.u32 %v590, 4294901760
    %592 = vmatpush1.msra.mxu0 %v591
    %593 = vmatprep.subr.mxu0 0.0
    %v594 = vand.u32 %v87, 4294901760
    %v595 = vsub.f32 %v87, %v594
    %v596 = vand.u32 %v595, 4294901760
    %597 = vmatpush1.msra.mxu0 %v596
    %598 = vmatprep.subr.mxu0 0.0
    %v599 = vand.u32 %v88, 4294901760
    %v600 = vsub.f32 %v88, %v599
    %v601 = vand.u32 %v600, 4294901760
    %602 = vmatpush1.msra.mxu0 %v601
    %603 = vmatprep.subr.mxu0 0.0
    %v604 = vand.u32 %v89, 4294901760
    %v605 = vsub.f32 %v89, %v604
    %v606 = vand.u32 %v605, 4294901760
    %607 = vmatpush1.msra.mxu0 %v606
    %608 = vmatprep.subr.mxu0 0.0
    %v609 = vand.u32 %v90, 4294901760
    %v610 = vsub.f32 %v90, %v609
    %v611 = vand.u32 %v610, 4294901760
    %612 = vmatpush1.msra.mxu0 %v611
    %613 = vmatprep.subr.mxu0 0.0
    %614 = vmatpush1.msra.mxu0 0.0
    %615 = vmatprep.subr.mxu0 0.0
    %616 = vmatpush1.msra.mxu0 0.0
    %617 = vmatprep.subr.mxu0 0.0
    %618 = vmatpush1.msra.mxu0 0.0
    %619 = vmatprep.subr.mxu0 0.0
    %620 = vmatpush1.msra.mxu0 0.0
    %621 = vmatprep.subr.mxu0 0.0
    %622 = vmatpush1.msra.mxu0 0.0
    %623 = vmatprep.subr.mxu0 0.0
    %624 = vmatpush1.msra.mxu0 0.0
    %625 = vmatprep.subr.mxu0 0.0
    %626 = vmatpush1.msra.mxu0 0.0
    %627 = vmatprep.subr.mxu0 0.0
    %628 = vmatpush1.msra.mxu0 0.0
    %629 = vmatprep.subr.mxu0 0.0
    %630 = vmatpush1.msra.mxu0 0.0
    %631 = vmatprep.subr.mxu0 0.0
    %632 = vmatpush1.msra.mxu0 0.0
    %633 = vmatprep.subr.mxu0 0.0
    %634 = vmatpush1.msra.mxu0 0.0
    %635 = vmatprep.subr.mxu0 0.0
    %636 = vmatpush1.msra.mxu0 0.0
    %637 = vmatprep.subr.mxu0 0.0
    %638 = vmatpush1.msra.mxu0 0.0
    %639 = vmatprep.subr.mxu0 0.0
    %640 = vmatpush1.msra.mxu0 0.0
    %641 = vmatprep.subr.mxu0 0.0
    %642 = vmatpush1.msra.mxu0 0.0
    %643 = vmatprep.subr.mxu0 0.0
    %644 = vmatpush1.msra.mxu0 0.0
    %645 = vmatprep.mubr.f32.mxu0 0.0
    %v646 = vand.u32 %v73, 4294901760
    %647 = vmatmul.mubr.f32.gmra.mrb[0].mxu0 %v646
    %v648 = vpop.f32.mrb[0].mxu0
    %v649 = vadd.f32 %v530, %v648
    %v650 = vpop.f32.mrb[0].mxu0
    %651 = vdwg.mxu0
    %652 = vmatprep.subr.mxu0 0.0
    %v653 = vand.u32 %v75, 4294901760
    %654 = vmatpush1.msra.mxu0 %v653
    %655 = vmatprep.subr.mxu0 0.0
    %v656 = vand.u32 %v76, 4294901760
    %657 = vmatpush1.msra.mxu0 %v656
    %658 = vmatprep.subr.mxu0 0.0
    %v659 = vand.u32 %v77, 4294901760
    %660 = vmatpush1.msra.mxu0 %v659
    %661 = vmatprep.subr.mxu0 0.0
    %v662 = vand.u32 %v78, 4294901760
    %663 = vmatpush1.msra.mxu0 %v662
    %664 = vmatprep.subr.mxu0 0.0
    %v665 = vand.u32 %v79, 4294901760
    %666 = vmatpush1.msra.mxu0 %v665
    %667 = vmatprep.subr.mxu0 0.0
    %v668 = vand.u32 %v80, 4294901760
    %669 = vmatpush1.msra.mxu0 %v668
    %670 = vmatprep.subr.mxu0 0.0
    %v671 = vand.u32 %v81, 4294901760
    %672 = vmatpush1.msra.mxu0 %v671
    %673 = vmatprep.subr.mxu0 0.0
    %v674 = vand.u32 %v82, 4294901760
    %675 = vmatpush1.msra.mxu0 %v674
    %676 = vmatprep.subr.mxu0 0.0
    %v677 = vand.u32 %v83, 4294901760
    %678 = vmatpush1.msra.mxu0 %v677
    %679 = vmatprep.subr.mxu0 0.0
    %v680 = vand.u32 %v84, 4294901760
    %681 = vmatpush1.msra.mxu0 %v680
    %682 = vmatprep.subr.mxu0 0.0
    %v683 = vand.u32 %v85, 4294901760
    %684 = vmatpush1.msra.mxu0 %v683
    %685 = vmatprep.subr.mxu0 0.0
    %v686 = vand.u32 %v86, 4294901760
    %687 = vmatpush1.msra.mxu0 %v686
    %688 = vmatprep.subr.mxu0 0.0
    %v689 = vand.u32 %v87, 4294901760
    %690 = vmatpush1.msra.mxu0 %v689
    %691 = vmatprep.subr.mxu0 0.0
    %v692 = vand.u32 %v88, 4294901760
    %693 = vmatpush1.msra.mxu0 %v692
    %694 = vmatprep.subr.mxu0 0.0
    %v695 = vand.u32 %v89, 4294901760
    %696 = vmatpush1.msra.mxu0 %v695
    %697 = vmatprep.subr.mxu0 0.0
    %v698 = vand.u32 %v90, 4294901760
    %699 = vmatpush1.msra.mxu0 %v698
    %700 = vmatprep.subr.mxu0 0.0
    %701 = vmatpush1.msra.mxu0 0.0
    %702 = vmatprep.subr.mxu0 0.0
    %703 = vmatpush1.msra.mxu0 0.0
    %704 = vmatprep.subr.mxu0 0.0
    %705 = vmatpush1.msra.mxu0 0.0
    %706 = vmatprep.subr.mxu0 0.0
    %707 = vmatpush1.msra.mxu0 0.0
    %708 = vmatprep.subr.mxu0 0.0
    %709 = vmatpush1.msra.mxu0 0.0
    %710 = vmatprep.subr.mxu0 0.0
    %711 = vmatpush1.msra.mxu0 0.0
    %712 = vmatprep.subr.mxu0 0.0
    %713 = vmatpush1.msra.mxu0 0.0
    %714 = vmatprep.subr.mxu0 0.0
    %715 = vmatpush1.msra.mxu0 0.0
    %716 = vmatprep.subr.mxu0 0.0
    %717 = vmatpush1.msra.mxu0 0.0
    %718 = vmatprep.subr.mxu0 0.0
    %719 = vmatpush1.msra.mxu0 0.0
    %720 = vmatprep.subr.mxu0 0.0
    %721 = vmatpush1.msra.mxu0 0.0
    %722 = vmatprep.subr.mxu0 0.0
    %723 = vmatpush1.msra.mxu0 0.0
    %724 = vmatprep.subr.mxu0 0.0
    %725 = vmatpush1.msra.mxu0 0.0
    %726 = vmatprep.subr.mxu0 0.0
    %727 = vmatpush1.msra.mxu0 0.0
    %728 = vmatprep.subr.mxu0 0.0
    %729 = vmatpush1.msra.mxu0 0.0
    %730 = vmatprep.subr.mxu0 0.0
    %731 = vmatpush1.msra.mxu0 0.0
    %732 = vmatprep.mubr.f32.mxu0 0.0
    %v733 = vand.u32 %v73, 4294901760
    %734 = vmatmul.mubr.f32.gmra.mrb[0].mxu0 %v733
    %v735 = vpop.f32.mrb[0].mxu0
    %v736 = vadd.f32 %v649, %v735
    %v737 = vpop.f32.mrb[0].mxu0
    %738 = vdwg.mxu0
    %739 = vrot.lane.b32.xlu0 %v736, 8
    %v740 = vpop.permute.xlu0 %739
    %v741 = vmax.f32 %v736, %v740
    %742 = vrot.lane.b32.xlu0 %v741, 16
    %v743 = vpop.permute.xlu0 %742
    %v744 = vmax.f32 %v741, %v743
    %745 = vrot.lane.b32.xlu0 %v744, 32
    %v746 = vpop.permute.xlu0 %745
    %v747 = vmax.f32 %v744, %v746
    %748 = vrot.lane.b32.xlu0 %v747, 64
    %v749 = vpop.permute.xlu0 %748
    %v750 = vmax.f32 %v747, %v749
    %v751 = vsub.f32 %v736, %v750
    %v752 = vmul.f32 %v751, 1.442695
    %v753 = vpow.pop %v752
    %v754 = vld [vmem:[%s6] sm:$0xff]
    %v755 = vld [vmem:[%s6 + $0x8] sm:$0xff]
    %v756 = vld [vmem:[%s6 + $0x10] sm:$0xff]
    %v757 = vld [vmem:[%s6 + $0x18] sm:$0xff]
    %v758 = vld [vmem:[%s6 + $0x20] sm:$0xff]
    %v759 = vld [vmem:[%s6 + $0x28] sm:$0xff]
    %v760 = vld [vmem:[%s6 + $0x30] sm:$0xff]
    %v761 = vld [vmem:[%s6 + $0x38] sm:$0xff]
    %v762 = vld [vmem:[%s6 + $0x40] sm:$0xff]
    %v763 = vld [vmem:[%s6 + $0x48] sm:$0xff]
    %v764 = vld [vmem:[%s6 + $0x50] sm:$0xff]
    %v765 = vld [vmem:[%s6 + $0x58] sm:$0xff]
    %v766 = vld [vmem:[%s6 + $0x60] sm:$0xff]
    %v767 = vld [vmem:[%s6 + $0x68] sm:$0xff]
    %v768 = vld [vmem:[%s6 + $0x70] sm:$0xff]
    %v769 = vld [vmem:[%s6 + $0x78] sm:$0xff]
    %770 = vmatprep.subr.mxu0 0.0
    %v771 = vand.u32 %v754, 4294901760
    %772 = vmatpush1.msra.mxu0 %v771
    %773 = vmatprep.subr.mxu0 0.0
    %v774 = vand.u32 %v755, 4294901760
    %775 = vmatpush1.msra.mxu0 %v774
    %776 = vmatprep.subr.mxu0 0.0
    %v777 = vand.u32 %v756, 4294901760
    %778 = vmatpush1.msra.mxu0 %v777
    %779 = vmatprep.subr.mxu0 0.0
    %v780 = vand.u32 %v757, 4294901760
    %781 = vmatpush1.msra.mxu0 %v780
    %782 = vmatprep.subr.mxu0 0.0
    %v783 = vand.u32 %v758, 4294901760
    %784 = vmatpush1.msra.mxu0 %v783
    %785 = vmatprep.subr.mxu0 0.0
    %v786 = vand.u32 %v759, 4294901760
    %787 = vmatpush1.msra.mxu0 %v786
    %788 = vmatprep.subr.mxu0 0.0
    %v789 = vand.u32 %v760, 4294901760
    %790 = vmatpush1.msra.mxu0 %v789
    %791 = vmatprep.subr.mxu0 0.0
    %v792 = vand.u32 %v761, 4294901760
    %793 = vmatpush1.msra.mxu0 %v792
    %794 = vmatprep.subr.mxu0 0.0
    %v795 = vand.u32 %v762, 4294901760
    %796 = vmatpush1.msra.mxu0 %v795
    %797 = vmatprep.subr.mxu0 0.0
    %v798 = vand.u32 %v763, 4294901760
    %799 = vmatpush1.msra.mxu0 %v798
    %800 = vmatprep.subr.mxu0 0.0
    %v801 = vand.u32 %v764, 4294901760
    %802 = vmatpush1.msra.mxu0 %v801
    %803 = vmatprep.subr.mxu0 0.0
    %v804 = vand.u32 %v765, 4294901760
    %805 = vmatpush1.msra.mxu0 %v804
    %806 = vmatprep.subr.mxu0 0.0
    %v807 = vand.u32 %v766, 4294901760
    %808 = vmatpush1.msra.mxu0 %v807
    %809 = vmatprep.subr.mxu0 0.0
    %v810 = vand.u32 %v767, 4294901760
    %811 = vmatpush1.msra.mxu0 %v810
    %812 = vmatprep.subr.mxu0 0.0
    %v813 = vand.u32 %v768, 4294901760
    %814 = vmatpush1.msra.mxu0 %v813
    %815 = vmatprep.subr.mxu0 0.0
    %v816 = vand.u32 %v769, 4294901760
    %817 = vmatpush1.msra.mxu0 %v816
    %818 = vmatprep.subr.mxu0 0.0
    %819 = vmatpush1.msra.mxu0 0.0
    %820 = vmatprep.subr.mxu0 0.0
    %821 = vmatpush1.msra.mxu0 0.0
    %822 = vmatprep.subr.mxu0 0.0
    %823 = vmatpush1.msra.mxu0 0.0
    %824 = vmatprep.subr.mxu0 0.0
    %825 = vmatpush1.msra.mxu0 0.0
    %826 = vmatprep.subr.mxu0 0.0
    %827 = vmatpush1.msra.mxu0 0.0
    %828 = vmatprep.subr.mxu0 0.0
    %829 = vmatpush1.msra.mxu0 0.0
    %830 = vmatprep.subr.mxu0 0.0
    %831 = vmatpush1.msra.mxu0 0.0
    %832 = vmatprep.subr.mxu0 0.0
    %833 = vmatpush1.msra.mxu0 0.0
    %834 = vmatprep.subr.mxu0 0.0
    %835 = vmatpush1.msra.mxu0 0.0
    %836 = vmatprep.subr.mxu0 0.0
    %837 = vmatpush1.msra.mxu0 0.0
    %838 = vmatprep.subr.mxu0 0.0
    %839 = vmatpush1.msra.mxu0 0.0
    %840 = vmatprep.subr.mxu0 0.0
    %841 = vmatpush1.msra.mxu0 0.0
    %842 = vmatprep.subr.mxu0 0.0
    %843 = vmatpush1.msra.mxu0 0.0
    %844 = vmatprep.subr.mxu0 0.0
    %845 = vmatpush1.msra.mxu0 0.0
    %846 = vmatprep.subr.mxu0 0.0
    %847 = vmatpush1.msra.mxu0 0.0
    %848 = vmatprep.subr.mxu0 0.0
    %849 = vmatpush1.msra.mxu0 0.0
    %850 = vmatprep.mubr.f32.mxu0 0.0
    %v851 = vand.u32 %v753, 4294901760
    %v852 = vsub.f32 %v753, %v851
    %v853 = vand.u32 %v852, 4294901760
    %v854 = vsub.f32 %v852, %v853
    %v855 = vand.u32 %v854, 4294901760
    %856 = vmatmul.mubr.f32.gmra.mrb[0].mxu0 %v855
    %v857 = vpop.f32.mrb[0].mxu0
    %v858 = vadd.f32 0.0, %v857
    %v859 = vpop.f32.mrb[0].mxu0
    %860 = vdwg.mxu0
    %861 = vmatprep.subr.mxu0 0.0
    %v862 = vand.u32 %v754, 4294901760
    %v863 = vsub.f32 %v754, %v862
    %v864 = vand.u32 %v863, 4294901760
    %v865 = vsub.f32 %v863, %v864
    %v866 = vand.u32 %v865, 4294901760
    %867 = vmatpush1.msra.mxu0 %v866
    %868 = vmatprep.subr.mxu0 0.0
    %v869 = vand.u32 %v755, 4294901760
    %v870 = vsub.f32 %v755, %v869
    %v871 = vand.u32 %v870, 4294901760
    %v872 = vsub.f32 %v870, %v871
    %v873 = vand.u32 %v872, 4294901760
    %874 = vmatpush1.msra.mxu0 %v873
    %875 = vmatprep.subr.mxu0 0.0
    %v876 = vand.u32 %v756, 4294901760
    %v877 = vsub.f32 %v756, %v876
    %v878 = vand.u32 %v877, 4294901760
    %v879 = vsub.f32 %v877, %v878
    %v880 = vand.u32 %v879, 4294901760
    %881 = vmatpush1.msra.mxu0 %v880
    %882 = vmatprep.subr.mxu0 0.0
    %v883 = vand.u32 %v757, 4294901760
    %v884 = vsub.f32 %v757, %v883
    %v885 = vand.u32 %v884, 4294901760
    %v886 = vsub.f32 %v884, %v885
    %v887 = vand.u32 %v886, 4294901760
    %888 = vmatpush1.msra.mxu0 %v887
    %889 = vmatprep.subr.mxu0 0.0
    %v890 = vand.u32 %v758, 4294901760
    %v891 = vsub.f32 %v758, %v890
    %v892 = vand.u32 %v891, 4294901760
    %v893 = vsub.f32 %v891, %v892
    %v894 = vand.u32 %v893, 4294901760
    %895 = vmatpush1.msra.mxu0 %v894
    %896 = vmatprep.subr.mxu0 0.0
    %v897 = vand.u32 %v759, 4294901760
    %v898 = vsub.f32 %v759, %v897
    %v899 = vand.u32 %v898, 4294901760
    %v900 = vsub.f32 %v898, %v899
    %v901 = vand.u32 %v900, 4294901760
    %902 = vmatpush1.msra.mxu0 %v901
    %903 = vmatprep.subr.mxu0 0.0
    %v904 = vand.u32 %v760, 4294901760
    %v905 = vsub.f32 %v760, %v904
    %v906 = vand.u32 %v905, 4294901760
    %v907 = vsub.f32 %v905, %v906
    %v908 = vand.u32 %v907, 4294901760
    %909 = vmatpush1.msra.mxu0 %v908
    %910 = vmatprep.subr.mxu0 0.0
    %v911 = vand.u32 %v761, 4294901760
    %v912 = vsub.f32 %v761, %v911
    %v913 = vand.u32 %v912, 4294901760
    %v914 = vsub.f32 %v912, %v913
    %v915 = vand.u32 %v914, 4294901760
    %916 = vmatpush1.msra.mxu0 %v915
    %917 = vmatprep.subr.mxu0 0.0
    %v918 = vand.u32 %v762, 4294901760
    %v919 = vsub.f32 %v762, %v918
    %v920 = vand.u32 %v919, 4294901760
    %v921 = vsub.f32 %v919, %v920
    %v922 = vand.u32 %v921, 4294901760
    %923 = vmatpush1.msra.mxu0 %v922
    %924 = vmatprep.subr.mxu0 0.0
    %v925 = vand.u32 %v763, 4294901760
    %v926 = vsub.f32 %v763, %v925
    %v927 = vand.u32 %v926, 4294901760
    %v928 = vsub.f32 %v926, %v927
    %v929 = vand.u32 %v928, 4294901760
    %930 = vmatpush1.msra.mxu0 %v929
    %931 = vmatprep.subr.mxu0 0.0
    %v932 = vand.u32 %v764, 4294901760
    %v933 = vsub.f32 %v764, %v932
    %v934 = vand.u32 %v933, 4294901760
    %v935 = vsub.f32 %v933, %v934
    %v936 = vand.u32 %v935, 4294901760
    %937 = vmatpush1.msra.mxu0 %v936
    %938 = vmatprep.subr.mxu0 0.0
    %v939 = vand.u32 %v765, 4294901760
    %v940 = vsub.f32 %v765, %v939
    %v941 = vand.u32 %v940, 4294901760
    %v942 = vsub.f32 %v940, %v941
    %v943 = vand.u32 %v942, 4294901760
    %944 = vmatpush1.msra.mxu0 %v943
    %945 = vmatprep.subr.mxu0 0.0
    %v946 = vand.u32 %v766, 4294901760
    %v947 = vsub.f32 %v766, %v946
    %v948 = vand.u32 %v947, 4294901760
    %v949 = vsub.f32 %v947, %v948
    %v950 = vand.u32 %v949, 4294901760
    %951 = vmatpush1.msra.mxu0 %v950
    %952 = vmatprep.subr.mxu0 0.0
    %v953 = vand.u32 %v767, 4294901760
    %v954 = vsub.f32 %v767, %v953
    %v955 = vand.u32 %v954, 4294901760
    %v956 = vsub.f32 %v954, %v955
    %v957 = vand.u32 %v956, 4294901760
    %958 = vmatpush1.msra.mxu0 %v957
    %959 = vmatprep.subr.mxu0 0.0
    %v960 = vand.u32 %v768, 4294901760
    %v961 = vsub.f32 %v768, %v960
    %v962 = vand.u32 %v961, 4294901760
    %v963 = vsub.f32 %v961, %v962
    %v964 = vand.u32 %v963, 4294901760
    %965 = vmatpush1.msra.mxu0 %v964
    %966 = vmatprep.subr.mxu0 0.0
    %v967 = vand.u32 %v769, 4294901760
    %v968 = vsub.f32 %v769, %v967
    %v969 = vand.u32 %v968, 4294901760
    %v970 = vsub.f32 %v968, %v969
    %v971 = vand.u32 %v970, 4294901760
    %972 = vmatpush1.msra.mxu0 %v971
    %973 = vmatprep.subr.mxu0 0.0
    %974 = vmatpush1.msra.mxu0 0.0
    %975 = vmatprep.subr.mxu0 0.0
    %976 = vmatpush1.msra.mxu0 0.0
    %977 = vmatprep.subr.mxu0 0.0
    %978 = vmatpush1.msra.mxu0 0.0
    %979 = vmatprep.subr.mxu0 0.0
    %980 = vmatpush1.msra.mxu0 0.0
    %981 = vmatprep.subr.mxu0 0.0
    %982 = vmatpush1.msra.mxu0 0.0
    %983 = vmatprep.subr.mxu0 0.0
    %984 = vmatpush1.msra.mxu0 0.0
    %985 = vmatprep.subr.mxu0 0.0
    %986 = vmatpush1.msra.mxu0 0.0
    %987 = vmatprep.subr.mxu0 0.0
    %988 = vmatpush1.msra.mxu0 0.0
    %989 = vmatprep.subr.mxu0 0.0
    %990 = vmatpush1.msra.mxu0 0.0
    %991 = vmatprep.subr.mxu0 0.0
    %992 = vmatpush1.msra.mxu0 0.0
    %993 = vmatprep.subr.mxu0 0.0
    %994 = vmatpush1.msra.mxu0 0.0
    %995 = vmatprep.subr.mxu0 0.0
    %996 = vmatpush1.msra.mxu0 0.0
    %997 = vmatprep.subr.mxu0 0.0
    %998 = vmatpush1.msra.mxu0 0.0
    %999 = vmatprep.subr.mxu0 0.0
    %1000 = vmatpush1.msra.mxu0 0.0
    %1001 = vmatprep.subr.mxu0 0.0
    %1002 = vmatpush1.msra.mxu0 0.0
    %1003 = vmatprep.subr.mxu0 0.0
    %1004 = vmatpush1.msra.mxu0 0.0
    %1005 = vmatprep.mubr.f32.mxu0 0.0
    %v1006 = vand.u32 %v753, 4294901760
    %1007 = vmatmul.mubr.f32.gmra.mrb[0].mxu0 %v1006
    %v1008 = vpop.f32.mrb[0].mxu0
    %v1009 = vadd.f32 %v858, %v1008
    %v1010 = vpop.f32.mrb[0].mxu0
    %1011 = vdwg.mxu0
    %1012 = vmatprep.subr.mxu0 0.0
    %v1013 = vand.u32 %v754, 4294901760
    %v1014 = vsub.f32 %v754, %v1013
    %1015 = vmatpush1.msra.mxu0 %v1014
    %1016 = vmatprep.subr.mxu0 0.0
    %v1017 = vand.u32 %v755, 4294901760
    %v1018 = vsub.f32 %v755, %v1017
    %1019 = vmatpush1.msra.mxu0 %v1018
    %1020 = vmatprep.subr.mxu0 0.0
    %v1021 = vand.u32 %v756, 4294901760
    %v1022 = vsub.f32 %v756, %v1021
    %1023 = vmatpush1.msra.mxu0 %v1022
    %1024 = vmatprep.subr.mxu0 0.0
    %v1025 = vand.u32 %v757, 4294901760
    %v1026 = vsub.f32 %v757, %v1025
    %1027 = vmatpush1.msra.mxu0 %v1026
    %1028 = vmatprep.subr.mxu0 0.0
    %v1029 = vand.u32 %v758, 4294901760
    %v1030 = vsub.f32 %v758, %v1029
    %1031 = vmatpush1.msra.mxu0 %v1030
    %1032 = vmatprep.subr.mxu0 0.0
    %v1033 = vand.u32 %v759, 4294901760
    %v1034 = vsub.f32 %v759, %v1033
    %1035 = vmatpush1.msra.mxu0 %v1034
    %1036 = vmatprep.subr.mxu0 0.0
    %v1037 = vand.u32 %v760, 4294901760
    %v1038 = vsub.f32 %v760, %v1037
    %1039 = vmatpush1.msra.mxu0 %v1038
    %1040 = vmatprep.subr.mxu0 0.0
    %v1041 = vand.u32 %v761, 4294901760
    %v1042 = vsub.f32 %v761, %v1041
    %1043 = vmatpush1.msra.mxu0 %v1042
    %1044 = vmatprep.subr.mxu0 0.0
    %v1045 = vand.u32 %v762, 4294901760
    %v1046 = vsub.f32 %v762, %v1045
    %1047 = vmatpush1.msra.mxu0 %v1046
    %1048 = vmatprep.subr.mxu0 0.0
    %v1049 = vand.u32 %v763, 4294901760
    %v1050 = vsub.f32 %v763, %v1049
    %1051 = vmatpush1.msra.mxu0 %v1050
    %1052 = vmatprep.subr.mxu0 0.0
    %v1053 = vand.u32 %v764, 4294901760
    %v1054 = vsub.f32 %v764, %v1053
    %1055 = vmatpush1.msra.mxu0 %v1054
    %1056 = vmatprep.subr.mxu0 0.0
    %v1057 = vand.u32 %v765, 4294901760
    %v1058 = vsub.f32 %v765, %v1057
    %1059 = vmatpush1.msra.mxu0 %v1058
    %1060 = vmatprep.subr.mxu0 0.0
    %v1061 = vand.u32 %v766, 4294901760
    %v1062 = vsub.f32 %v766, %v1061
    %1063 = vmatpush1.msra.mxu0 %v1062
    %1064 = vmatprep.subr.mxu0 0.0
    %v1065 = vand.u32 %v767, 4294901760
    %v1066 = vsub.f32 %v767, %v1065
    %1067 = vmatpush1.msra.mxu0 %v1066
    %1068 = vmatprep.subr.mxu0 0.0
    %v1069 = vand.u32 %v768, 4294901760
    %v1070 = vsub.f32 %v768, %v1069
    %1071 = vmatpush1.msra.mxu0 %v1070
    %1072 = vmatprep.subr.mxu0 0.0
    %v1073 = vand.u32 %v769, 4294901760
    %v1074 = vsub.f32 %v769, %v1073
    %1075 = vmatpush1.msra.mxu0 %v1074
    %1076 = vmatprep.subr.mxu0 0.0
    %1077 = vmatpush1.msra.mxu0 0.0
    %1078 = vmatprep.subr.mxu0 0.0
    %1079 = vmatpush1.msra.mxu0 0.0
    %1080 = vmatprep.subr.mxu0 0.0
    %1081 = vmatpush1.msra.mxu0 0.0
    %1082 = vmatprep.subr.mxu0 0.0
    %1083 = vmatpush1.msra.mxu0 0.0
    %1084 = vmatprep.subr.mxu0 0.0
    %1085 = vmatpush1.msra.mxu0 0.0
    %1086 = vmatprep.subr.mxu0 0.0
    %1087 = vmatpush1.msra.mxu0 0.0
    %1088 = vmatprep.subr.mxu0 0.0
    %1089 = vmatpush1.msra.mxu0 0.0
    %1090 = vmatprep.subr.mxu0 0.0
    %1091 = vmatpush1.msra.mxu0 0.0
    %1092 = vmatprep.subr.mxu0 0.0
    %1093 = vmatpush1.msra.mxu0 0.0
    %1094 = vmatprep.subr.mxu0 0.0
    %1095 = vmatpush1.msra.mxu0 0.0
    %1096 = vmatprep.subr.mxu0 0.0
    %1097 = vmatpush1.msra.mxu0 0.0
    %1098 = vmatprep.subr.mxu0 0.0
    %1099 = vmatpush1.msra.mxu0 0.0
    %1100 = vmatprep.subr.mxu0 0.0
    %1101 = vmatpush1.msra.mxu0 0.0
    %1102 = vmatprep.subr.mxu0 0.0
    %1103 = vmatpush1.msra.mxu0 0.0
    %1104 = vmatprep.subr.mxu0 0.0
    %1105 = vmatpush1.msra.mxu0 0.0
    %1106 = vmatprep.subr.mxu0 0.0
    %1107 = vmatpush1.msra.mxu0 0.0
    %1108 = vmatprep.mubr.f32.mxu0 0.0
    %v1109 = vand.u32 %v753, 4294901760
    %v1110 = vsub.f32 %v753, %v1109
    %1111 = vmatmul.mubr.f32.gmra.mrb[0].mxu0 %v1110
    %v1112 = vpop.f32.mrb[0].mxu0
    %v1113 = vadd.f32 %v1009, %v1112
    %v1114 = vpop.f32.mrb[0].mxu0
    %1115 = vdwg.mxu0
    %1116 = vmatprep.subr.mxu0 0.0
    %v1117 = vand.u32 %v754, 4294901760
    %1118 = vmatpush1.msra.mxu0 %v1117
    %1119 = vmatprep.subr.mxu0 0.0
    %v1120 = vand.u32 %v755, 4294901760
    %1121 = vmatpush1.msra.mxu0 %v1120
    %1122 = vmatprep.subr.mxu0 0.0
    %v1123 = vand.u32 %v756, 4294901760
    %1124 = vmatpush1.msra.mxu0 %v1123
    %1125 = vmatprep.subr.mxu0 0.0
    %v1126 = vand.u32 %v757, 4294901760
    %1127 = vmatpush1.msra.mxu0 %v1126
    %1128 = vmatprep.subr.mxu0 0.0
    %v1129 = vand.u32 %v758, 4294901760
    %1130 = vmatpush1.msra.mxu0 %v1129
    %1131 = vmatprep.subr.mxu0 0.0
    %v1132 = vand.u32 %v759, 4294901760
    %1133 = vmatpush1.msra.mxu0 %v1132
    %1134 = vmatprep.subr.mxu0 0.0
    %v1135 = vand.u32 %v760, 4294901760
    %1136 = vmatpush1.msra.mxu0 %v1135
    %1137 = vmatprep.subr.mxu0 0.0
    %v1138 = vand.u32 %v761, 4294901760
    %1139 = vmatpush1.msra.mxu0 %v1138
    %1140 = vmatprep.subr.mxu0 0.0
    %v1141 = vand.u32 %v762, 4294901760
    %1142 = vmatpush1.msra.mxu0 %v1141
    %1143 = vmatprep.subr.mxu0 0.0
    %v1144 = vand.u32 %v763, 4294901760
    %1145 = vmatpush1.msra.mxu0 %v1144
    %1146 = vmatprep.subr.mxu0 0.0
    %v1147 = vand.u32 %v764, 4294901760
    %1148 = vmatpush1.msra.mxu0 %v1147
    %1149 = vmatprep.subr.mxu0 0.0
    %v1150 = vand.u32 %v765, 4294901760
    %1151 = vmatpush1.msra.mxu0 %v1150
    %1152 = vmatprep.subr.mxu0 0.0
    %v1153 = vand.u32 %v766, 4294901760
    %1154 = vmatpush1.msra.mxu0 %v1153
    %1155 = vmatprep.subr.mxu0 0.0
    %v1156 = vand.u32 %v767, 4294901760
    %1157 = vmatpush1.msra.mxu0 %v1156
    %1158 = vmatprep.subr.mxu0 0.0
    %v1159 = vand.u32 %v768, 4294901760
    %1160 = vmatpush1.msra.mxu0 %v1159
    %1161 = vmatprep.subr.mxu0 0.0
    %v1162 = vand.u32 %v769, 4294901760
    %1163 = vmatpush1.msra.mxu0 %v1162
    %1164 = vmatprep.subr.mxu0 0.0
    %1165 = vmatpush1.msra.mxu0 0.0
    %1166 = vmatprep.subr.mxu0 0.0
    %1167 = vmatpush1.msra.mxu0 0.0
    %1168 = vmatprep.subr.mxu0 0.0
    %1169 = vmatpush1.msra.mxu0 0.0
    %1170 = vmatprep.subr.mxu0 0.0
    %1171 = vmatpush1.msra.mxu0 0.0
    %1172 = vmatprep.subr.mxu0 0.0
    %1173 = vmatpush1.msra.mxu0 0.0
    %1174 = vmatprep.subr.mxu0 0.0
    %1175 = vmatpush1.msra.mxu0 0.0
    %1176 = vmatprep.subr.mxu0 0.0
    %1177 = vmatpush1.msra.mxu0 0.0
    %1178 = vmatprep.subr.mxu0 0.0
    %1179 = vmatpush1.msra.mxu0 0.0
    %1180 = vmatprep.subr.mxu0 0.0
    %1181 = vmatpush1.msra.mxu0 0.0
    %1182 = vmatprep.subr.mxu0 0.0
    %1183 = vmatpush1.msra.mxu0 0.0
    %1184 = vmatprep.subr.mxu0 0.0
    %1185 = vmatpush1.msra.mxu0 0.0
    %1186 = vmatprep.subr.mxu0 0.0
    %1187 = vmatpush1.msra.mxu0 0.0
    %1188 = vmatprep.subr.mxu0 0.0
    %1189 = vmatpush1.msra.mxu0 0.0
    %1190 = vmatprep.subr.mxu0 0.0
    %1191 = vmatpush1.msra.mxu0 0.0
    %1192 = vmatprep.subr.mxu0 0.0
    %1193 = vmatpush1.msra.mxu0 0.0
    %1194 = vmatprep.subr.mxu0 0.0
    %1195 = vmatpush1.msra.mxu0 0.0
    %1196 = vmatprep.mubr.f32.mxu0 0.0
    %v1197 = vand.u32 %v753, 4294901760
    %v1198 = vsub.f32 %v753, %v1197
    %v1199 = vand.u32 %v1198, 4294901760
    %1200 = vmatmul.mubr.f32.gmra.mrb[0].mxu0 %v1199
    %v1201 = vpop.f32.mrb[0].mxu0
    %v1202 = vadd.f32 %v1113, %v1201
    %v1203 = vpop.f32.mrb[0].mxu0
    %1204 = vdwg.mxu0
    %1205 = vmatprep.subr.mxu0 0.0
    %v1206 = vand.u32 %v754, 4294901760
    %v1207 = vsub.f32 %v754, %v1206
    %v1208 = vand.u32 %v1207, 4294901760
    %1209 = vmatpush1.msra.mxu0 %v1208
    %1210 = vmatprep.subr.mxu0 0.0
    %v1211 = vand.u32 %v755, 4294901760
    %v1212 = vsub.f32 %v755, %v1211
    %v1213 = vand.u32 %v1212, 4294901760
    %1214 = vmatpush1.msra.mxu0 %v1213
    %1215 = vmatprep.subr.mxu0 0.0
    %v1216 = vand.u32 %v756, 4294901760
    %v1217 = vsub.f32 %v756, %v1216
    %v1218 = vand.u32 %v1217, 4294901760
    %1219 = vmatpush1.msra.mxu0 %v1218
    %1220 = vmatprep.subr.mxu0 0.0
    %v1221 = vand.u32 %v757, 4294901760
    %v1222 = vsub.f32 %v757, %v1221
    %v1223 = vand.u32 %v1222, 4294901760
    %1224 = vmatpush1.msra.mxu0 %v1223
    %1225 = vmatprep.subr.mxu0 0.0
    %v1226 = vand.u32 %v758, 4294901760
    %v1227 = vsub.f32 %v758, %v1226
    %v1228 = vand.u32 %v1227, 4294901760
    %1229 = vmatpush1.msra.mxu0 %v1228
    %1230 = vmatprep.subr.mxu0 0.0
    %v1231 = vand.u32 %v759, 4294901760
    %v1232 = vsub.f32 %v759, %v1231
    %v1233 = vand.u32 %v1232, 4294901760
    %1234 = vmatpush1.msra.mxu0 %v1233
    %1235 = vmatprep.subr.mxu0 0.0
    %v1236 = vand.u32 %v760, 4294901760
    %v1237 = vsub.f32 %v760, %v1236
    %v1238 = vand.u32 %v1237, 4294901760
    %1239 = vmatpush1.msra.mxu0 %v1238
    %1240 = vmatprep.subr.mxu0 0.0
    %v1241 = vand.u32 %v761, 4294901760
    %v1242 = vsub.f32 %v761, %v1241
    %v1243 = vand.u32 %v1242, 4294901760
    %1244 = vmatpush1.msra.mxu0 %v1243
    %1245 = vmatprep.subr.mxu0 0.0
    %v1246 = vand.u32 %v762, 4294901760
    %v1247 = vsub.f32 %v762, %v1246
    %v1248 = vand.u32 %v1247, 4294901760
    %1249 = vmatpush1.msra.mxu0 %v1248
    %1250 = vmatprep.subr.mxu0 0.0
    %v1251 = vand.u32 %v763, 4294901760
    %v1252 = vsub.f32 %v763, %v1251
    %v1253 = vand.u32 %v1252, 4294901760
    %1254 = vmatpush1.msra.mxu0 %v1253
    %1255 = vmatprep.subr.mxu0 0.0
    %v1256 = vand.u32 %v764, 4294901760
    %v1257 = vsub.f32 %v764, %v1256
    %v1258 = vand.u32 %v1257, 4294901760
    %1259 = vmatpush1.msra.mxu0 %v1258
    %1260 = vmatprep.subr.mxu0 0.0
    %v1261 = vand.u32 %v765, 4294901760
    %v1262 = vsub.f32 %v765, %v1261
    %v1263 = vand.u32 %v1262, 4294901760
    %1264 = vmatpush1.msra.mxu0 %v1263
    %1265 = vmatprep.subr.mxu0 0.0
    %v1266 = vand.u32 %v766, 4294901760
    %v1267 = vsub.f32 %v766, %v1266
    %v1268 = vand.u32 %v1267, 4294901760
    %1269 = vmatpush1.msra.mxu0 %v1268
    %1270 = vmatprep.subr.mxu0 0.0
    %v1271 = vand.u32 %v767, 4294901760
    %v1272 = vsub.f32 %v767, %v1271
    %v1273 = vand.u32 %v1272, 4294901760
    %1274 = vmatpush1.msra.mxu0 %v1273
    %1275 = vmatprep.subr.mxu0 0.0
    %v1276 = vand.u32 %v768, 4294901760
    %v1277 = vsub.f32 %v768, %v1276
    %v1278 = vand.u32 %v1277, 4294901760
    %1279 = vmatpush1.msra.mxu0 %v1278
    %1280 = vmatprep.subr.mxu0 0.0
    %v1281 = vand.u32 %v769, 4294901760
    %v1282 = vsub.f32 %v769, %v1281
    %v1283 = vand.u32 %v1282, 4294901760
    %1284 = vmatpush1.msra.mxu0 %v1283
    %1285 = vmatprep.subr.mxu0 0.0
    %1286 = vmatpush1.msra.mxu0 0.0
    %1287 = vmatprep.subr.mxu0 0.0
    %1288 = vmatpush1.msra.mxu0 0.0
    %1289 = vmatprep.subr.mxu0 0.0
    %1290 = vmatpush1.msra.mxu0 0.0
    %1291 = vmatprep.subr.mxu0 0.0
    %1292 = vmatpush1.msra.mxu0 0.0
    %1293 = vmatprep.subr.mxu0 0.0
    %1294 = vmatpush1.msra.mxu0 0.0
    %1295 = vmatprep.subr.mxu0 0.0
    %1296 = vmatpush1.msra.mxu0 0.0
    %1297 = vmatprep.subr.mxu0 0.0
    %1298 = vmatpush1.msra.mxu0 0.0
    %1299 = vmatprep.subr.mxu0 0.0
    %1300 = vmatpush1.msra.mxu0 0.0
    %1301 = vmatprep.subr.mxu0 0.0
    %1302 = vmatpush1.msra.mxu0 0.0
    %1303 = vmatprep.subr.mxu0 0.0
    %1304 = vmatpush1.msra.mxu0 0.0
    %1305 = vmatprep.subr.mxu0 0.0
    %1306 = vmatpush1.msra.mxu0 0.0
    %1307 = vmatprep.subr.mxu0 0.0
    %1308 = vmatpush1.msra.mxu0 0.0
    %1309 = vmatprep.subr.mxu0 0.0
    %1310 = vmatpush1.msra.mxu0 0.0
    %1311 = vmatprep.subr.mxu0 0.0
    %1312 = vmatpush1.msra.mxu0 0.0
    %1313 = vmatprep.subr.mxu0 0.0
    %1314 = vmatpush1.msra.mxu0 0.0
    %1315 = vmatprep.subr.mxu0 0.0
    %1316 = vmatpush1.msra.mxu0 0.0
    %1317 = vmatprep.mubr.f32.mxu0 0.0
    %v1318 = vand.u32 %v753, 4294901760
    %1319 = vmatmul.mubr.f32.gmra.mrb[0].mxu0 %v1318
    %v1320 = vpop.f32.mrb[0].mxu0
    %v1321 = vadd.f32 %v1202, %v1320
    %v1322 = vpop.f32.mrb[0].mxu0
    %1323 = vdwg.mxu0
    %1324 = vmatprep.subr.mxu0 0.0
    %v1325 = vand.u32 %v754, 4294901760
    %1326 = vmatpush1.msra.mxu0 %v1325
    %1327 = vmatprep.subr.mxu0 0.0
    %v1328 = vand.u32 %v755, 4294901760
    %1329 = vmatpush1.msra.mxu0 %v1328
    %1330 = vmatprep.subr.mxu0 0.0
    %v1331 = vand.u32 %v756, 4294901760
    %1332 = vmatpush1.msra.mxu0 %v1331
    %1333 = vmatprep.subr.mxu0 0.0
    %v1334 = vand.u32 %v757, 4294901760
    %1335 = vmatpush1.msra.mxu0 %v1334
    %1336 = vmatprep.subr.mxu0 0.0
    %v1337 = vand.u32 %v758, 4294901760
    %1338 = vmatpush1.msra.mxu0 %v1337
    %1339 = vmatprep.subr.mxu0 0.0
    %v1340 = vand.u32 %v759, 4294901760
    %1341 = vmatpush1.msra.mxu0 %v1340
    %1342 = vmatprep.subr.mxu0 0.0
    %v1343 = vand.u32 %v760, 4294901760
    %1344 = vmatpush1.msra.mxu0 %v1343
    %1345 = vmatprep.subr.mxu0 0.0
    %v1346 = vand.u32 %v761, 4294901760
    %1347 = vmatpush1.msra.mxu0 %v1346
    %1348 = vmatprep.subr.mxu0 0.0
    %v1349 = vand.u32 %v762, 4294901760
    %1350 = vmatpush1.msra.mxu0 %v1349
    %1351 = vmatprep.subr.mxu0 0.0
    %v1352 = vand.u32 %v763, 4294901760
    %1353 = vmatpush1.msra.mxu0 %v1352
    %1354 = vmatprep.subr.mxu0 0.0
    %v1355 = vand.u32 %v764, 4294901760
    %1356 = vmatpush1.msra.mxu0 %v1355
    %1357 = vmatprep.subr.mxu0 0.0
    %v1358 = vand.u32 %v765, 4294901760
    %1359 = vmatpush1.msra.mxu0 %v1358
    %1360 = vmatprep.subr.mxu0 0.0
    %v1361 = vand.u32 %v766, 4294901760
    %1362 = vmatpush1.msra.mxu0 %v1361
    %1363 = vmatprep.subr.mxu0 0.0
    %v1364 = vand.u32 %v767, 4294901760
    %1365 = vmatpush1.msra.mxu0 %v1364
    %1366 = vmatprep.subr.mxu0 0.0
    %v1367 = vand.u32 %v768, 4294901760
    %1368 = vmatpush1.msra.mxu0 %v1367
    %1369 = vmatprep.subr.mxu0 0.0
    %v1370 = vand.u32 %v769, 4294901760
    %1371 = vmatpush1.msra.mxu0 %v1370
    %1372 = vmatprep.subr.mxu0 0.0
    %1373 = vmatpush1.msra.mxu0 0.0
    %1374 = vmatprep.subr.mxu0 0.0
    %1375 = vmatpush1.msra.mxu0 0.0
    %1376 = vmatprep.subr.mxu0 0.0
    %1377 = vmatpush1.msra.mxu0 0.0
    %1378 = vmatprep.subr.mxu0 0.0
    %1379 = vmatpush1.msra.mxu0 0.0
    %1380 = vmatprep.subr.mxu0 0.0
    %1381 = vmatpush1.msra.mxu0 0.0
    %1382 = vmatprep.subr.mxu0 0.0
    %1383 = vmatpush1.msra.mxu0 0.0
    %1384 = vmatprep.subr.mxu0 0.0
    %1385 = vmatpush1.msra.mxu0 0.0
    %1386 = vmatprep.subr.mxu0 0.0
    %1387 = vmatpush1.msra.mxu0 0.0
    %1388 = vmatprep.subr.mxu0 0.0
    %1389 = vmatpush1.msra.mxu0 0.0
    %1390 = vmatprep.subr.mxu0 0.0
    %1391 = vmatpush1.msra.mxu0 0.0
    %1392 = vmatprep.subr.mxu0 0.0
    %1393 = vmatpush1.msra.mxu0 0.0
    %1394 = vmatprep.subr.mxu0 0.0
    %1395 = vmatpush1.msra.mxu0 0.0
    %1396 = vmatprep.subr.mxu0 0.0
    %1397 = vmatpush1.msra.mxu0 0.0
    %1398 = vmatprep.subr.mxu0 0.0
    %1399 = vmatpush1.msra.mxu0 0.0
    %1400 = vmatprep.subr.mxu0 0.0
    %1401 = vmatpush1.msra.mxu0 0.0
    %1402 = vmatprep.subr.mxu0 0.0
    %1403 = vmatpush1.msra.mxu0 0.0
    %1404 = vmatprep.mubr.f32.mxu0 0.0
    %v1405 = vand.u32 %v753, 4294901760
    %1406 = vmatmul.mubr.f32.gmra.mrb[0].mxu0 %v1405
    %v1407 = vpop.f32.mrb[0].mxu0
    %v1408 = vadd.f32 %v1321, %v1407
    %v1409 = vpop.f32.mrb[0].mxu0
    %1410 = vdwg.mxu0
    %v1411 = vrcp.pop %v1408
    %v1412 = vmul.f32 %v753, %v1411
    %v1413 = vld [vmem:[%s4] sm:$0xff]
    %v1414 = vld [vmem:[%s4 + $0x8] sm:$0xff]
    %v1415 = vld [vmem:[%s4 + $0x10] sm:$0xff]
    %v1416 = vld [vmem:[%s4 + $0x18] sm:$0xff]
    %v1417 = vld [vmem:[%s4 + $0x20] sm:$0xff]
    %v1418 = vld [vmem:[%s4 + $0x28] sm:$0xff]
    %v1419 = vld [vmem:[%s4 + $0x30] sm:$0xff]
    %v1420 = vld [vmem:[%s4 + $0x38] sm:$0xff]
    %v1421 = vld [vmem:[%s4 + $0x40] sm:$0xff]
    %v1422 = vld [vmem:[%s4 + $0x48] sm:$0xff]
    %v1423 = vld [vmem:[%s4 + $0x50] sm:$0xff]
    %v1424 = vld [vmem:[%s4 + $0x58] sm:$0xff]
    %v1425 = vld [vmem:[%s4 + $0x60] sm:$0xff]
    %v1426 = vld [vmem:[%s4 + $0x68] sm:$0xff]
    %v1427 = vld [vmem:[%s4 + $0x70] sm:$0xff]
    %v1428 = vld [vmem:[%s4 + $0x78] sm:$0xff]
    %v1429 = vld [vmem:[%s5] sm:$0x1]
    %v1431 = vlaneseq
    %v1432 = vshrl.u32 %v1431, 7
    %v1433 = vsub.s32 0, %v1432
    %v1434 = vrot.slane %v1429, %v1433
    %1436 = vmatprep.subr.mxu0 0.0
    %v1437 = vand.u32 %v1413, 4294901760
    %1438 = vmatpush1.msra.mxu0 %v1437
    %1439 = vmatprep.subr.mxu0 0.0
    %v1440 = vand.u32 %v1414, 4294901760
    %1441 = vmatpush1.msra.mxu0 %v1440
    %1442 = vmatprep.subr.mxu0 0.0
    %v1443 = vand.u32 %v1415, 4294901760
    %1444 = vmatpush1.msra.mxu0 %v1443
    %1445 = vmatprep.subr.mxu0 0.0
    %v1446 = vand.u32 %v1416, 4294901760
    %1447 = vmatpush1.msra.mxu0 %v1446
    %1448 = vmatprep.subr.mxu0 0.0
    %v1449 = vand.u32 %v1417, 4294901760
    %1450 = vmatpush1.msra.mxu0 %v1449
    %1451 = vmatprep.subr.mxu0 0.0
    %v1452 = vand.u32 %v1418, 4294901760
    %1453 = vmatpush1.msra.mxu0 %v1452
    %1454 = vmatprep.subr.mxu0 0.0
    %v1455 = vand.u32 %v1419, 4294901760
    %1456 = vmatpush1.msra.mxu0 %v1455
    %1457 = vmatprep.subr.mxu0 0.0
    %v1458 = vand.u32 %v1420, 4294901760
    %1459 = vmatpush1.msra.mxu0 %v1458
    %1460 = vmatprep.subr.mxu0 0.0
    %v1461 = vand.u32 %v1421, 4294901760
    %1462 = vmatpush1.msra.mxu0 %v1461
    %1463 = vmatprep.subr.mxu0 0.0
    %v1464 = vand.u32 %v1422, 4294901760
    %1465 = vmatpush1.msra.mxu0 %v1464
    %1466 = vmatprep.subr.mxu0 0.0
    %v1467 = vand.u32 %v1423, 4294901760
    %1468 = vmatpush1.msra.mxu0 %v1467
    %1469 = vmatprep.subr.mxu0 0.0
    %v1470 = vand.u32 %v1424, 4294901760
    %1471 = vmatpush1.msra.mxu0 %v1470
    %1472 = vmatprep.subr.mxu0 0.0
    %v1473 = vand.u32 %v1425, 4294901760
    %1474 = vmatpush1.msra.mxu0 %v1473
    %1475 = vmatprep.subr.mxu0 0.0
    %v1476 = vand.u32 %v1426, 4294901760
    %1477 = vmatpush1.msra.mxu0 %v1476
    %1478 = vmatprep.subr.mxu0 0.0
    %v1479 = vand.u32 %v1427, 4294901760
    %1480 = vmatpush1.msra.mxu0 %v1479
    %1481 = vmatprep.subr.mxu0 0.0
    %v1482 = vand.u32 %v1428, 4294901760
    %1483 = vmatpush1.msra.mxu0 %v1482
    %1484 = vmatprep.subr.mxu0 0.0
    %1485 = vmatpush1.msra.mxu0 0.0
    %1486 = vmatprep.subr.mxu0 0.0
    %1487 = vmatpush1.msra.mxu0 0.0
    %1488 = vmatprep.subr.mxu0 0.0
    %1489 = vmatpush1.msra.mxu0 0.0
    %1490 = vmatprep.subr.mxu0 0.0
    %1491 = vmatpush1.msra.mxu0 0.0
    %1492 = vmatprep.subr.mxu0 0.0
    %1493 = vmatpush1.msra.mxu0 0.0
    %1494 = vmatprep.subr.mxu0 0.0
    %1495 = vmatpush1.msra.mxu0 0.0
    %1496 = vmatprep.subr.mxu0 0.0
    %1497 = vmatpush1.msra.mxu0 0.0
    %1498 = vmatprep.subr.mxu0 0.0
    %1499 = vmatpush1.msra.mxu0 0.0
    %1500 = vmatprep.subr.mxu0 0.0
    %1501 = vmatpush1.msra.mxu0 0.0
    %1502 = vmatprep.subr.mxu0 0.0
    %1503 = vmatpush1.msra.mxu0 0.0
    %1504 = vmatprep.subr.mxu0 0.0
    %1505 = vmatpush1.msra.mxu0 0.0
    %1506 = vmatprep.subr.mxu0 0.0
    %1507 = vmatpush1.msra.mxu0 0.0
    %1508 = vmatprep.subr.mxu0 0.0
    %1509 = vmatpush1.msra.mxu0 0.0
    %1510 = vmatprep.subr.mxu0 0.0
    %1511 = vmatpush1.msra.mxu0 0.0
    %1512 = vmatprep.subr.mxu0 0.0
    %1513 = vmatpush1.msra.mxu0 0.0
    %1514 = vmatprep.subr.mxu0 0.0
    %1515 = vmatpush1.msra.mxu0 0.0
    %1516 = vmatprep.mubr.f32.mxu0 0.0
    %v1517 = vand.u32 %v1412, 4294901760
    %v1518 = vsub.f32 %v1412, %v1517
    %v1519 = vand.u32 %v1518, 4294901760
    %v1520 = vsub.f32 %v1518, %v1519
    %v1521 = vand.u32 %v1520, 4294901760
    %1522 = vmatmul.mubr.f32.gmra.mrb[0].mxu0 %v1521
    %v1523 = vpop.f32.mrb[0].mxu0
    %v1524 = vadd.f32 %v1434, %v1523
    %v1525 = vpop.f32.mrb[0].mxu0
    %1526 = vdwg.mxu0
    %1527 = vmatprep.subr.mxu0 0.0
    %v1528 = vand.u32 %v1413, 4294901760
    %v1529 = vsub.f32 %v1413, %v1528
    %v1530 = vand.u32 %v1529, 4294901760
    %v1531 = vsub.f32 %v1529, %v1530
    %v1532 = vand.u32 %v1531, 4294901760
    %1533 = vmatpush1.msra.mxu0 %v1532
    %1534 = vmatprep.subr.mxu0 0.0
    %v1535 = vand.u32 %v1414, 4294901760
    %v1536 = vsub.f32 %v1414, %v1535
    %v1537 = vand.u32 %v1536, 4294901760
    %v1538 = vsub.f32 %v1536, %v1537
    %v1539 = vand.u32 %v1538, 4294901760
    %1540 = vmatpush1.msra.mxu0 %v1539
    %1541 = vmatprep.subr.mxu0 0.0
    %v1542 = vand.u32 %v1415, 4294901760
    %v1543 = vsub.f32 %v1415, %v1542
    %v1544 = vand.u32 %v1543, 4294901760
    %v1545 = vsub.f32 %v1543, %v1544
    %v1546 = vand.u32 %v1545, 4294901760
    %1547 = vmatpush1.msra.mxu0 %v1546
    %1548 = vmatprep.subr.mxu0 0.0
    %v1549 = vand.u32 %v1416, 4294901760
    %v1550 = vsub.f32 %v1416, %v1549
    %v1551 = vand.u32 %v1550, 4294901760
    %v1552 = vsub.f32 %v1550, %v1551
    %v1553 = vand.u32 %v1552, 4294901760
    %1554 = vmatpush1.msra.mxu0 %v1553
    %1555 = vmatprep.subr.mxu0 0.0
    %v1556 = vand.u32 %v1417, 4294901760
    %v1557 = vsub.f32 %v1417, %v1556
    %v1558 = vand.u32 %v1557, 4294901760
    %v1559 = vsub.f32 %v1557, %v1558
    %v1560 = vand.u32 %v1559, 4294901760
    %1561 = vmatpush1.msra.mxu0 %v1560
    %1562 = vmatprep.subr.mxu0 0.0
    %v1563 = vand.u32 %v1418, 4294901760
    %v1564 = vsub.f32 %v1418, %v1563
    %v1565 = vand.u32 %v1564, 4294901760
    %v1566 = vsub.f32 %v1564, %v1565
    %v1567 = vand.u32 %v1566, 4294901760
    %1568 = vmatpush1.msra.mxu0 %v1567
    %1569 = vmatprep.subr.mxu0 0.0
    %v1570 = vand.u32 %v1419, 4294901760
    %v1571 = vsub.f32 %v1419, %v1570
    %v1572 = vand.u32 %v1571, 4294901760
    %v1573 = vsub.f32 %v1571, %v1572
    %v1574 = vand.u32 %v1573, 4294901760
    %1575 = vmatpush1.msra.mxu0 %v1574
    %1576 = vmatprep.subr.mxu0 0.0
    %v1577 = vand.u32 %v1420, 4294901760
    %v1578 = vsub.f32 %v1420, %v1577
    %v1579 = vand.u32 %v1578, 4294901760
    %v1580 = vsub.f32 %v1578, %v1579
    %v1581 = vand.u32 %v1580, 4294901760
    %1582 = vmatpush1.msra.mxu0 %v1581
    %1583 = vmatprep.subr.mxu0 0.0
    %v1584 = vand.u32 %v1421, 4294901760
    %v1585 = vsub.f32 %v1421, %v1584
    %v1586 = vand.u32 %v1585, 4294901760
    %v1587 = vsub.f32 %v1585, %v1586
    %v1588 = vand.u32 %v1587, 4294901760
    %1589 = vmatpush1.msra.mxu0 %v1588
    %1590 = vmatprep.subr.mxu0 0.0
    %v1591 = vand.u32 %v1422, 4294901760
    %v1592 = vsub.f32 %v1422, %v1591
    %v1593 = vand.u32 %v1592, 4294901760
    %v1594 = vsub.f32 %v1592, %v1593
    %v1595 = vand.u32 %v1594, 4294901760
    %1596 = vmatpush1.msra.mxu0 %v1595
    %1597 = vmatprep.subr.mxu0 0.0
    %v1598 = vand.u32 %v1423, 4294901760
    %v1599 = vsub.f32 %v1423, %v1598
    %v1600 = vand.u32 %v1599, 4294901760
    %v1601 = vsub.f32 %v1599, %v1600
    %v1602 = vand.u32 %v1601, 4294901760
    %1603 = vmatpush1.msra.mxu0 %v1602
    %1604 = vmatprep.subr.mxu0 0.0
    %v1605 = vand.u32 %v1424, 4294901760
    %v1606 = vsub.f32 %v1424, %v1605
    %v1607 = vand.u32 %v1606, 4294901760
    %v1608 = vsub.f32 %v1606, %v1607
    %v1609 = vand.u32 %v1608, 4294901760
    %1610 = vmatpush1.msra.mxu0 %v1609
    %1611 = vmatprep.subr.mxu0 0.0
    %v1612 = vand.u32 %v1425, 4294901760
    %v1613 = vsub.f32 %v1425, %v1612
    %v1614 = vand.u32 %v1613, 4294901760
    %v1615 = vsub.f32 %v1613, %v1614
    %v1616 = vand.u32 %v1615, 4294901760
    %1617 = vmatpush1.msra.mxu0 %v1616
    %1618 = vmatprep.subr.mxu0 0.0
    %v1619 = vand.u32 %v1426, 4294901760
    %v1620 = vsub.f32 %v1426, %v1619
    %v1621 = vand.u32 %v1620, 4294901760
    %v1622 = vsub.f32 %v1620, %v1621
    %v1623 = vand.u32 %v1622, 4294901760
    %1624 = vmatpush1.msra.mxu0 %v1623
    %1625 = vmatprep.subr.mxu0 0.0
    %v1626 = vand.u32 %v1427, 4294901760
    %v1627 = vsub.f32 %v1427, %v1626
    %v1628 = vand.u32 %v1627, 4294901760
    %v1629 = vsub.f32 %v1627, %v1628
    %v1630 = vand.u32 %v1629, 4294901760
    %1631 = vmatpush1.msra.mxu0 %v1630
    %1632 = vmatprep.subr.mxu0 0.0
    %v1633 = vand.u32 %v1428, 4294901760
    %v1634 = vsub.f32 %v1428, %v1633
    %v1635 = vand.u32 %v1634, 4294901760
    %v1636 = vsub.f32 %v1634, %v1635
    %v1637 = vand.u32 %v1636, 4294901760
    %1638 = vmatpush1.msra.mxu0 %v1637
    %1639 = vmatprep.subr.mxu0 0.0
    %1640 = vmatpush1.msra.mxu0 0.0
    %1641 = vmatprep.subr.mxu0 0.0
    %1642 = vmatpush1.msra.mxu0 0.0
    %1643 = vmatprep.subr.mxu0 0.0
    %1644 = vmatpush1.msra.mxu0 0.0
    %1645 = vmatprep.subr.mxu0 0.0
    %1646 = vmatpush1.msra.mxu0 0.0
    %1647 = vmatprep.subr.mxu0 0.0
    %1648 = vmatpush1.msra.mxu0 0.0
    %1649 = vmatprep.subr.mxu0 0.0
    %1650 = vmatpush1.msra.mxu0 0.0
    %1651 = vmatprep.subr.mxu0 0.0
    %1652 = vmatpush1.msra.mxu0 0.0
    %1653 = vmatprep.subr.mxu0 0.0
    %1654 = vmatpush1.msra.mxu0 0.0
    %1655 = vmatprep.subr.mxu0 0.0
    %1656 = vmatpush1.msra.mxu0 0.0
    %1657 = vmatprep.subr.mxu0 0.0
    %1658 = vmatpush1.msra.mxu0 0.0
    %1659 = vmatprep.subr.mxu0 0.0
    %1660 = vmatpush1.msra.mxu0 0.0
    %1661 = vmatprep.subr.mxu0 0.0
    %1662 = vmatpush1.msra.mxu0 0.0
    %1663 = vmatprep.subr.mxu0 0.0
    %1664 = vmatpush1.msra.mxu0 0.0
    %1665 = vmatprep.subr.mxu0 0.0
    %1666 = vmatpush1.msra.mxu0 0.0
    %1667 = vmatprep.subr.mxu0 0.0
    %1668 = vmatpush1.msra.mxu0 0.0
    %1669 = vmatprep.subr.mxu0 0.0
    %1670 = vmatpush1.msra.mxu0 0.0
    %1671 = vmatprep.mubr.f32.mxu0 0.0
    %v1672 = vand.u32 %v1412, 4294901760
    %1673 = vmatmul.mubr.f32.gmra.mrb[0].mxu0 %v1672
    %v1674 = vpop.f32.mrb[0].mxu0
    %v1675 = vadd.f32 %v1524, %v1674
    %v1676 = vpop.f32.mrb[0].mxu0
    %1677 = vdwg.mxu0
    %1678 = vmatprep.subr.mxu0 0.0
    %v1679 = vand.u32 %v1413, 4294901760
    %v1680 = vsub.f32 %v1413, %v1679
    %1681 = vmatpush1.msra.mxu0 %v1680
    %1682 = vmatprep.subr.mxu0 0.0
    %v1683 = vand.u32 %v1414, 4294901760
    %v1684 = vsub.f32 %v1414, %v1683
    %1685 = vmatpush1.msra.mxu0 %v1684
    %1686 = vmatprep.subr.mxu0 0.0
    %v1687 = vand.u32 %v1415, 4294901760
    %v1688 = vsub.f32 %v1415, %v1687
    %1689 = vmatpush1.msra.mxu0 %v1688
    %1690 = vmatprep.subr.mxu0 0.0
    %v1691 = vand.u32 %v1416, 4294901760
    %v1692 = vsub.f32 %v1416, %v1691
    %1693 = vmatpush1.msra.mxu0 %v1692
    %1694 = vmatprep.subr.mxu0 0.0
    %v1695 = vand.u32 %v1417, 4294901760
    %v1696 = vsub.f32 %v1417, %v1695
    %1697 = vmatpush1.msra.mxu0 %v1696
    %1698 = vmatprep.subr.mxu0 0.0
    %v1699 = vand.u32 %v1418, 4294901760
    %v1700 = vsub.f32 %v1418, %v1699
    %1701 = vmatpush1.msra.mxu0 %v1700
    %1702 = vmatprep.subr.mxu0 0.0
    %v1703 = vand.u32 %v1419, 4294901760
    %v1704 = vsub.f32 %v1419, %v1703
    %1705 = vmatpush1.msra.mxu0 %v1704
    %1706 = vmatprep.subr.mxu0 0.0
    %v1707 = vand.u32 %v1420, 4294901760
    %v1708 = vsub.f32 %v1420, %v1707
    %1709 = vmatpush1.msra.mxu0 %v1708
    %1710 = vmatprep.subr.mxu0 0.0
    %v1711 = vand.u32 %v1421, 4294901760
    %v1712 = vsub.f32 %v1421, %v1711
    %1713 = vmatpush1.msra.mxu0 %v1712
    %1714 = vmatprep.subr.mxu0 0.0
    %v1715 = vand.u32 %v1422, 4294901760
    %v1716 = vsub.f32 %v1422, %v1715
    %1717 = vmatpush1.msra.mxu0 %v1716
    %1718 = vmatprep.subr.mxu0 0.0
    %v1719 = vand.u32 %v1423, 4294901760
    %v1720 = vsub.f32 %v1423, %v1719
    %1721 = vmatpush1.msra.mxu0 %v1720
    %1722 = vmatprep.subr.mxu0 0.0
    %v1723 = vand.u32 %v1424, 4294901760
    %v1724 = vsub.f32 %v1424, %v1723
    %1725 = vmatpush1.msra.mxu0 %v1724
    %1726 = vmatprep.subr.mxu0 0.0
    %v1727 = vand.u32 %v1425, 4294901760
    %v1728 = vsub.f32 %v1425, %v1727
    %1729 = vmatpush1.msra.mxu0 %v1728
    %1730 = vmatprep.subr.mxu0 0.0
    %v1731 = vand.u32 %v1426, 4294901760
    %v1732 = vsub.f32 %v1426, %v1731
    %1733 = vmatpush1.msra.mxu0 %v1732
    %1734 = vmatprep.subr.mxu0 0.0
    %v1735 = vand.u32 %v1427, 4294901760
    %v1736 = vsub.f32 %v1427, %v1735
    %1737 = vmatpush1.msra.mxu0 %v1736
    %1738 = vmatprep.subr.mxu0 0.0
    %v1739 = vand.u32 %v1428, 4294901760
    %v1740 = vsub.f32 %v1428, %v1739
    %1741 = vmatpush1.msra.mxu0 %v1740
    %1742 = vmatprep.subr.mxu0 0.0
    %1743 = vmatpush1.msra.mxu0 0.0
    %1744 = vmatprep.subr.mxu0 0.0
    %1745 = vmatpush1.msra.mxu0 0.0
    %1746 = vmatprep.subr.mxu0 0.0
    %1747 = vmatpush1.msra.mxu0 0.0
    %1748 = vmatprep.subr.mxu0 0.0
    %1749 = vmatpush1.msra.mxu0 0.0
    %1750 = vmatprep.subr.mxu0 0.0
    %1751 = vmatpush1.msra.mxu0 0.0
    %1752 = vmatprep.subr.mxu0 0.0
    %1753 = vmatpush1.msra.mxu0 0.0
    %1754 = vmatprep.subr.mxu0 0.0
    %1755 = vmatpush1.msra.mxu0 0.0
    %1756 = vmatprep.subr.mxu0 0.0
    %1757 = vmatpush1.msra.mxu0 0.0
    %1758 = vmatprep.subr.mxu0 0.0
    %1759 = vmatpush1.msra.mxu0 0.0
    %1760 = vmatprep.subr.mxu0 0.0
    %1761 = vmatpush1.msra.mxu0 0.0
    %1762 = vmatprep.subr.mxu0 0.0
    %1763 = vmatpush1.msra.mxu0 0.0
    %1764 = vmatprep.subr.mxu0 0.0
    %1765 = vmatpush1.msra.mxu0 0.0
    %1766 = vmatprep.subr.mxu0 0.0
    %1767 = vmatpush1.msra.mxu0 0.0
    %1768 = vmatprep.subr.mxu0 0.0
    %1769 = vmatpush1.msra.mxu0 0.0
    %1770 = vmatprep.subr.mxu0 0.0
    %1771 = vmatpush1.msra.mxu0 0.0
    %1772 = vmatprep.subr.mxu0 0.0
    %1773 = vmatpush1.msra.mxu0 0.0
    %1774 = vmatprep.mubr.f32.mxu0 0.0
    %v1775 = vand.u32 %v1412, 4294901760
    %v1776 = vsub.f32 %v1412, %v1775
    %1777 = vmatmul.mubr.f32.gmra.mrb[0].mxu0 %v1776
    %v1778 = vpop.f32.mrb[0].mxu0
    %v1779 = vadd.f32 %v1675, %v1778
    %v1780 = vpop.f32.mrb[0].mxu0
    %1781 = vdwg.mxu0
    %1782 = vmatprep.subr.mxu0 0.0
    %v1783 = vand.u32 %v1413, 4294901760
    %1784 = vmatpush1.msra.mxu0 %v1783
    %1785 = vmatprep.subr.mxu0 0.0
    %v1786 = vand.u32 %v1414, 4294901760
    %1787 = vmatpush1.msra.mxu0 %v1786
    %1788 = vmatprep.subr.mxu0 0.0
    %v1789 = vand.u32 %v1415, 4294901760
    %1790 = vmatpush1.msra.mxu0 %v1789
    %1791 = vmatprep.subr.mxu0 0.0
    %v1792 = vand.u32 %v1416, 4294901760
    %1793 = vmatpush1.msra.mxu0 %v1792
    %1794 = vmatprep.subr.mxu0 0.0
    %v1795 = vand.u32 %v1417, 4294901760
    %1796 = vmatpush1.msra.mxu0 %v1795
    %1797 = vmatprep.subr.mxu0 0.0
    %v1798 = vand.u32 %v1418, 4294901760
    %1799 = vmatpush1.msra.mxu0 %v1798
    %1800 = vmatprep.subr.mxu0 0.0
    %v1801 = vand.u32 %v1419, 4294901760
    %1802 = vmatpush1.msra.mxu0 %v1801
    %1803 = vmatprep.subr.mxu0 0.0
    %v1804 = vand.u32 %v1420, 4294901760
    %1805 = vmatpush1.msra.mxu0 %v1804
    %1806 = vmatprep.subr.mxu0 0.0
    %v1807 = vand.u32 %v1421, 4294901760
    %1808 = vmatpush1.msra.mxu0 %v1807
    %1809 = vmatprep.subr.mxu0 0.0
    %v1810 = vand.u32 %v1422, 4294901760
    %1811 = vmatpush1.msra.mxu0 %v1810
    %1812 = vmatprep.subr.mxu0 0.0
    %v1813 = vand.u32 %v1423, 4294901760
    %1814 = vmatpush1.msra.mxu0 %v1813
    %1815 = vmatprep.subr.mxu0 0.0
    %v1816 = vand.u32 %v1424, 4294901760
    %1817 = vmatpush1.msra.mxu0 %v1816
    %1818 = vmatprep.subr.mxu0 0.0
    %v1819 = vand.u32 %v1425, 4294901760
    %1820 = vmatpush1.msra.mxu0 %v1819
    %1821 = vmatprep.subr.mxu0 0.0
    %v1822 = vand.u32 %v1426, 4294901760
    %1823 = vmatpush1.msra.mxu0 %v1822
    %1824 = vmatprep.subr.mxu0 0.0
    %v1825 = vand.u32 %v1427, 4294901760
    %1826 = vmatpush1.msra.mxu0 %v1825
    %1827 = vmatprep.subr.mxu0 0.0
    %v1828 = vand.u32 %v1428, 4294901760
    %1829 = vmatpush1.msra.mxu0 %v1828
    %1830 = vmatprep.subr.mxu0 0.0
    %1831 = vmatpush1.msra.mxu0 0.0
    %1832 = vmatprep.subr.mxu0 0.0
    %1833 = vmatpush1.msra.mxu0 0.0
    %1834 = vmatprep.subr.mxu0 0.0
    %1835 = vmatpush1.msra.mxu0 0.0
    %1836 = vmatprep.subr.mxu0 0.0
    %1837 = vmatpush1.msra.mxu0 0.0
    %1838 = vmatprep.subr.mxu0 0.0
    %1839 = vmatpush1.msra.mxu0 0.0
    %1840 = vmatprep.subr.mxu0 0.0
    %1841 = vmatpush1.msra.mxu0 0.0
    %1842 = vmatprep.subr.mxu0 0.0
    %1843 = vmatpush1.msra.mxu0 0.0
    %1844 = vmatprep.subr.mxu0 0.0
    %1845 = vmatpush1.msra.mxu0 0.0
    %1846 = vmatprep.subr.mxu0 0.0
    %1847 = vmatpush1.msra.mxu0 0.0
    %1848 = vmatprep.subr.mxu0 0.0
    %1849 = vmatpush1.msra.mxu0 0.0
    %1850 = vmatprep.subr.mxu0 0.0
    %1851 = vmatpush1.msra.mxu0 0.0
    %1852 = vmatprep.subr.mxu0 0.0
    %1853 = vmatpush1.msra.mxu0 0.0
    %1854 = vmatprep.subr.mxu0 0.0
    %1855 = vmatpush1.msra.mxu0 0.0
    %1856 = vmatprep.subr.mxu0 0.0
    %1857 = vmatpush1.msra.mxu0 0.0
    %1858 = vmatprep.subr.mxu0 0.0
    %1859 = vmatpush1.msra.mxu0 0.0
    %1860 = vmatprep.subr.mxu0 0.0
    %1861 = vmatpush1.msra.mxu0 0.0
    %1862 = vmatprep.mubr.f32.mxu0 0.0
    %v1863 = vand.u32 %v1412, 4294901760
    %v1864 = vsub.f32 %v1412, %v1863
    %v1865 = vand.u32 %v1864, 4294901760
    %1866 = vmatmul.mubr.f32.gmra.mrb[0].mxu0 %v1865
    %v1867 = vpop.f32.mrb[0].mxu0
    %v1868 = vadd.f32 %v1779, %v1867
    %v1869 = vpop.f32.mrb[0].mxu0
    %1870 = vdwg.mxu0
    %1871 = vmatprep.subr.mxu0 0.0
    %v1872 = vand.u32 %v1413, 4294901760
    %v1873 = vsub.f32 %v1413, %v1872
    %v1874 = vand.u32 %v1873, 4294901760
    %1875 = vmatpush1.msra.mxu0 %v1874
    %1876 = vmatprep.subr.mxu0 0.0
    %v1877 = vand.u32 %v1414, 4294901760
    %v1878 = vsub.f32 %v1414, %v1877
    %v1879 = vand.u32 %v1878, 4294901760
    %1880 = vmatpush1.msra.mxu0 %v1879
    %1881 = vmatprep.subr.mxu0 0.0
    %v1882 = vand.u32 %v1415, 4294901760
    %v1883 = vsub.f32 %v1415, %v1882
    %v1884 = vand.u32 %v1883, 4294901760
    %1885 = vmatpush1.msra.mxu0 %v1884
    %1886 = vmatprep.subr.mxu0 0.0
    %v1887 = vand.u32 %v1416, 4294901760
    %v1888 = vsub.f32 %v1416, %v1887
    %v1889 = vand.u32 %v1888, 4294901760
    %1890 = vmatpush1.msra.mxu0 %v1889
    %1891 = vmatprep.subr.mxu0 0.0
    %v1892 = vand.u32 %v1417, 4294901760
    %v1893 = vsub.f32 %v1417, %v1892
    %v1894 = vand.u32 %v1893, 4294901760
    %1895 = vmatpush1.msra.mxu0 %v1894
    %1896 = vmatprep.subr.mxu0 0.0
    %v1897 = vand.u32 %v1418, 4294901760
    %v1898 = vsub.f32 %v1418, %v1897
    %v1899 = vand.u32 %v1898, 4294901760
    %1900 = vmatpush1.msra.mxu0 %v1899
    %1901 = vmatprep.subr.mxu0 0.0
    %v1902 = vand.u32 %v1419, 4294901760
    %v1903 = vsub.f32 %v1419, %v1902
    %v1904 = vand.u32 %v1903, 4294901760
    %1905 = vmatpush1.msra.mxu0 %v1904
    %1906 = vmatprep.subr.mxu0 0.0
    %v1907 = vand.u32 %v1420, 4294901760
    %v1908 = vsub.f32 %v1420, %v1907
    %v1909 = vand.u32 %v1908, 4294901760
    %1910 = vmatpush1.msra.mxu0 %v1909
    %1911 = vmatprep.subr.mxu0 0.0
    %v1912 = vand.u32 %v1421, 4294901760
    %v1913 = vsub.f32 %v1421, %v1912
    %v1914 = vand.u32 %v1913, 4294901760
    %1915 = vmatpush1.msra.mxu0 %v1914
    %1916 = vmatprep.subr.mxu0 0.0
    %v1917 = vand.u32 %v1422, 4294901760
    %v1918 = vsub.f32 %v1422, %v1917
    %v1919 = vand.u32 %v1918, 4294901760
    %1920 = vmatpush1.msra.mxu0 %v1919
    %1921 = vmatprep.subr.mxu0 0.0
    %v1922 = vand.u32 %v1423, 4294901760
    %v1923 = vsub.f32 %v1423, %v1922
    %v1924 = vand.u32 %v1923, 4294901760
    %1925 = vmatpush1.msra.mxu0 %v1924
    %1926 = vmatprep.subr.mxu0 0.0
    %v1927 = vand.u32 %v1424, 4294901760
    %v1928 = vsub.f32 %v1424, %v1927
    %v1929 = vand.u32 %v1928, 4294901760
    %1930 = vmatpush1.msra.mxu0 %v1929
    %1931 = vmatprep.subr.mxu0 0.0
    %v1932 = vand.u32 %v1425, 4294901760
    %v1933 = vsub.f32 %v1425, %v1932
    %v1934 = vand.u32 %v1933, 4294901760
    %1935 = vmatpush1.msra.mxu0 %v1934
    %1936 = vmatprep.subr.mxu0 0.0
    %v1937 = vand.u32 %v1426, 4294901760
    %v1938 = vsub.f32 %v1426, %v1937
    %v1939 = vand.u32 %v1938, 4294901760
    %1940 = vmatpush1.msra.mxu0 %v1939
    %1941 = vmatprep.subr.mxu0 0.0
    %v1942 = vand.u32 %v1427, 4294901760
    %v1943 = vsub.f32 %v1427, %v1942
    %v1944 = vand.u32 %v1943, 4294901760
    %1945 = vmatpush1.msra.mxu0 %v1944
    %1946 = vmatprep.subr.mxu0 0.0
    %v1947 = vand.u32 %v1428, 4294901760
    %v1948 = vsub.f32 %v1428, %v1947
    %v1949 = vand.u32 %v1948, 4294901760
    %1950 = vmatpush1.msra.mxu0 %v1949
    %1951 = vmatprep.subr.mxu0 0.0
    %1952 = vmatpush1.msra.mxu0 0.0
    %1953 = vmatprep.subr.mxu0 0.0
    %1954 = vmatpush1.msra.mxu0 0.0
    %1955 = vmatprep.subr.mxu0 0.0
    %1956 = vmatpush1.msra.mxu0 0.0
    %1957 = vmatprep.subr.mxu0 0.0
    %1958 = vmatpush1.msra.mxu0 0.0
    %1959 = vmatprep.subr.mxu0 0.0
    %1960 = vmatpush1.msra.mxu0 0.0
    %1961 = vmatprep.subr.mxu0 0.0
    %1962 = vmatpush1.msra.mxu0 0.0
    %1963 = vmatprep.subr.mxu0 0.0
    %1964 = vmatpush1.msra.mxu0 0.0
    %1965 = vmatprep.subr.mxu0 0.0
    %1966 = vmatpush1.msra.mxu0 0.0
    %1967 = vmatprep.subr.mxu0 0.0
    %1968 = vmatpush1.msra.mxu0 0.0
    %1969 = vmatprep.subr.mxu0 0.0
    %1970 = vmatpush1.msra.mxu0 0.0
    %1971 = vmatprep.subr.mxu0 0.0
    %1972 = vmatpush1.msra.mxu0 0.0
    %1973 = vmatprep.subr.mxu0 0.0
    %1974 = vmatpush1.msra.mxu0 0.0
    %1975 = vmatprep.subr.mxu0 0.0
    %1976 = vmatpush1.msra.mxu0 0.0
    %1977 = vmatprep.subr.mxu0 0.0
    %1978 = vmatpush1.msra.mxu0 0.0
    %1979 = vmatprep.subr.mxu0 0.0
    %1980 = vmatpush1.msra.mxu0 0.0
    %1981 = vmatprep.subr.mxu0 0.0
    %1982 = vmatpush1.msra.mxu0 0.0
    %1983 = vmatprep.mubr.f32.mxu0 0.0
    %v1984 = vand.u32 %v1412, 4294901760
    %1985 = vmatmul.mubr.f32.gmra.mrb[0].mxu0 %v1984
    %v1986 = vpop.f32.mrb[0].mxu0
    %v1987 = vadd.f32 %v1868, %v1986
    %v1988 = vpop.f32.mrb[0].mxu0
    %1989 = vdwg.mxu0
    %1990 = vmatprep.subr.mxu0 0.0
    %v1991 = vand.u32 %v1413, 4294901760
    %1992 = vmatpush1.msra.mxu0 %v1991
    %1993 = vmatprep.subr.mxu0 0.0
    %v1994 = vand.u32 %v1414, 4294901760
    %1995 = vmatpush1.msra.mxu0 %v1994
    %1996 = vmatprep.subr.mxu0 0.0
    %v1997 = vand.u32 %v1415, 4294901760
    %1998 = vmatpush1.msra.mxu0 %v1997
    %1999 = vmatprep.subr.mxu0 0.0
    %v2000 = vand.u32 %v1416, 4294901760
    %2001 = vmatpush1.msra.mxu0 %v2000
    %2002 = vmatprep.subr.mxu0 0.0
    %v2003 = vand.u32 %v1417, 4294901760
    %2004 = vmatpush1.msra.mxu0 %v2003
    %2005 = vmatprep.subr.mxu0 0.0
    %v2006 = vand.u32 %v1418, 4294901760
    %2007 = vmatpush1.msra.mxu0 %v2006
    %2008 = vmatprep.subr.mxu0 0.0
    %v2009 = vand.u32 %v1419, 4294901760
    %2010 = vmatpush1.msra.mxu0 %v2009
    %2011 = vmatprep.subr.mxu0 0.0
    %v2012 = vand.u32 %v1420, 4294901760
    %2013 = vmatpush1.msra.mxu0 %v2012
    %2014 = vmatprep.subr.mxu0 0.0
    %v2015 = vand.u32 %v1421, 4294901760
    %2016 = vmatpush1.msra.mxu0 %v2015
    %2017 = vmatprep.subr.mxu0 0.0
    %v2018 = vand.u32 %v1422, 4294901760
    %2019 = vmatpush1.msra.mxu0 %v2018
    %2020 = vmatprep.subr.mxu0 0.0
    %v2021 = vand.u32 %v1423, 4294901760
    %2022 = vmatpush1.msra.mxu0 %v2021
    %2023 = vmatprep.subr.mxu0 0.0
    %v2024 = vand.u32 %v1424, 4294901760
    %2025 = vmatpush1.msra.mxu0 %v2024
    %2026 = vmatprep.subr.mxu0 0.0
    %v2027 = vand.u32 %v1425, 4294901760
    %2028 = vmatpush1.msra.mxu0 %v2027
    %2029 = vmatprep.subr.mxu0 0.0
    %v2030 = vand.u32 %v1426, 4294901760
    %2031 = vmatpush1.msra.mxu0 %v2030
    %2032 = vmatprep.subr.mxu0 0.0
    %v2033 = vand.u32 %v1427, 4294901760
    %2034 = vmatpush1.msra.mxu0 %v2033
    %2035 = vmatprep.subr.mxu0 0.0
    %v2036 = vand.u32 %v1428, 4294901760
    %2037 = vmatpush1.msra.mxu0 %v2036
    %2038 = vmatprep.subr.mxu0 0.0
    %2039 = vmatpush1.msra.mxu0 0.0
    %2040 = vmatprep.subr.mxu0 0.0
    %2041 = vmatpush1.msra.mxu0 0.0
    %2042 = vmatprep.subr.mxu0 0.0
    %2043 = vmatpush1.msra.mxu0 0.0
    %2044 = vmatprep.subr.mxu0 0.0
    %2045 = vmatpush1.msra.mxu0 0.0
    %2046 = vmatprep.subr.mxu0 0.0
    %2047 = vmatpush1.msra.mxu0 0.0
    %2048 = vmatprep.subr.mxu0 0.0
    %2049 = vmatpush1.msra.mxu0 0.0
    %2050 = vmatprep.subr.mxu0 0.0
    %2051 = vmatpush1.msra.mxu0 0.0
    %2052 = vmatprep.subr.mxu0 0.0
    %2053 = vmatpush1.msra.mxu0 0.0
    %2054 = vmatprep.subr.mxu0 0.0
    %2055 = vmatpush1.msra.mxu0 0.0
    %2056 = vmatprep.subr.mxu0 0.0
    %2057 = vmatpush1.msra.mxu0 0.0
    %2058 = vmatprep.subr.mxu0 0.0
    %2059 = vmatpush1.msra.mxu0 0.0
    %2060 = vmatprep.subr.mxu0 0.0
    %2061 = vmatpush1.msra.mxu0 0.0
    %2062 = vmatprep.subr.mxu0 0.0
    %2063 = vmatpush1.msra.mxu0 0.0
    %2064 = vmatprep.subr.mxu0 0.0
    %2065 = vmatpush1.msra.mxu0 0.0
    %2066 = vmatprep.subr.mxu0 0.0
    %2067 = vmatpush1.msra.mxu0 0.0
    %2068 = vmatprep.subr.mxu0 0.0
    %2069 = vmatpush1.msra.mxu0 0.0
    %2070 = vmatprep.mubr.f32.mxu0 0.0
    %v2071 = vand.u32 %v1412, 4294901760
    %2072 = vmatmul.mubr.f32.gmra.mrb[0].mxu0 %v2071
    %v2073 = vpop.f32.mrb[0].mxu0
    %v2074 = vadd.f32 %v1987, %v2073
    %v2075 = vpop.f32.mrb[0].mxu0
    %2076 = vdwg.mxu0
    %2077 = vrot.lane.b32.xlu0 %v2074, 8
    %v2078 = vpop.permute.xlu0 %2077
    %v2079 = vmax.f32 %v2074, %v2078
    %2080 = vrot.lane.b32.xlu0 %v2079, 16
    %v2081 = vpop.permute.xlu0 %2080
    %v2082 = vmax.f32 %v2079, %v2081
    %2083 = vrot.lane.b32.xlu0 %v2082, 32
    %v2084 = vpop.permute.xlu0 %2083
    %v2085 = vmax.f32 %v2082, %v2084
    %2086 = vrot.lane.b32.xlu0 %v2085, 64
    %v2087 = vpop.permute.xlu0 %2086
    %v2088 = vmax.f32 %v2085, %v2087
    %v2089 = vsub.f32 %v2074, %v2088
    %v2090 = vmul.f32 %v2089, 1.442695
    %v2091 = vpow.pop %v2090
    %2092 = vmatprep.subr.mxu0 0.0
    %v2093 = vand.u32 %v754, 4294901760
    %2094 = vmatpush1.msra.mxu0 %v2093
    %2095 = vmatprep.subr.mxu0 0.0
    %v2096 = vand.u32 %v755, 4294901760
    %2097 = vmatpush1.msra.mxu0 %v2096
    %2098 = vmatprep.subr.mxu0 0.0
    %v2099 = vand.u32 %v756, 4294901760
    %2100 = vmatpush1.msra.mxu0 %v2099
    %2101 = vmatprep.subr.mxu0 0.0
    %v2102 = vand.u32 %v757, 4294901760
    %2103 = vmatpush1.msra.mxu0 %v2102
    %2104 = vmatprep.subr.mxu0 0.0
    %v2105 = vand.u32 %v758, 4294901760
    %2106 = vmatpush1.msra.mxu0 %v2105
    %2107 = vmatprep.subr.mxu0 0.0
    %v2108 = vand.u32 %v759, 4294901760
    %2109 = vmatpush1.msra.mxu0 %v2108
    %2110 = vmatprep.subr.mxu0 0.0
    %v2111 = vand.u32 %v760, 4294901760
    %2112 = vmatpush1.msra.mxu0 %v2111
    %2113 = vmatprep.subr.mxu0 0.0
    %v2114 = vand.u32 %v761, 4294901760
    %2115 = vmatpush1.msra.mxu0 %v2114
    %2116 = vmatprep.subr.mxu0 0.0
    %v2117 = vand.u32 %v762, 4294901760
    %2118 = vmatpush1.msra.mxu0 %v2117
    %2119 = vmatprep.subr.mxu0 0.0
    %v2120 = vand.u32 %v763, 4294901760
    %2121 = vmatpush1.msra.mxu0 %v2120
    %2122 = vmatprep.subr.mxu0 0.0
    %v2123 = vand.u32 %v764, 4294901760
    %2124 = vmatpush1.msra.mxu0 %v2123
    %2125 = vmatprep.subr.mxu0 0.0
    %v2126 = vand.u32 %v765, 4294901760
    %2127 = vmatpush1.msra.mxu0 %v2126
    %2128 = vmatprep.subr.mxu0 0.0
    %v2129 = vand.u32 %v766, 4294901760
    %2130 = vmatpush1.msra.mxu0 %v2129
    %2131 = vmatprep.subr.mxu0 0.0
    %v2132 = vand.u32 %v767, 4294901760
    %2133 = vmatpush1.msra.mxu0 %v2132
    %2134 = vmatprep.subr.mxu0 0.0
    %v2135 = vand.u32 %v768, 4294901760
    %2136 = vmatpush1.msra.mxu0 %v2135
    %2137 = vmatprep.subr.mxu0 0.0
    %v2138 = vand.u32 %v769, 4294901760
    %2139 = vmatpush1.msra.mxu0 %v2138
    %2140 = vmatprep.subr.mxu0 0.0
    %2141 = vmatpush1.msra.mxu0 0.0
    %2142 = vmatprep.subr.mxu0 0.0
    %2143 = vmatpush1.msra.mxu0 0.0
    %2144 = vmatprep.subr.mxu0 0.0
    %2145 = vmatpush1.msra.mxu0 0.0
    %2146 = vmatprep.subr.mxu0 0.0
    %2147 = vmatpush1.msra.mxu0 0.0
    %2148 = vmatprep.subr.mxu0 0.0
    %2149 = vmatpush1.msra.mxu0 0.0
    %2150 = vmatprep.subr.mxu0 0.0
    %2151 = vmatpush1.msra.mxu0 0.0
    %2152 = vmatprep.subr.mxu0 0.0
    %2153 = vmatpush1.msra.mxu0 0.0
    %2154 = vmatprep.subr.mxu0 0.0
    %2155 = vmatpush1.msra.mxu0 0.0
    %2156 = vmatprep.subr.mxu0 0.0
    %2157 = vmatpush1.msra.mxu0 0.0
    %2158 = vmatprep.subr.mxu0 0.0
    %2159 = vmatpush1.msra.mxu0 0.0
    %2160 = vmatprep.subr.mxu0 0.0
    %2161 = vmatpush1.msra.mxu0 0.0
    %2162 = vmatprep.subr.mxu0 0.0
    %2163 = vmatpush1.msra.mxu0 0.0
    %2164 = vmatprep.subr.mxu0 0.0
    %2165 = vmatpush1.msra.mxu0 0.0
    %2166 = vmatprep.subr.mxu0 0.0
    %2167 = vmatpush1.msra.mxu0 0.0
    %2168 = vmatprep.subr.mxu0 0.0
    %2169 = vmatpush1.msra.mxu0 0.0
    %2170 = vmatprep.subr.mxu0 0.0
    %2171 = vmatpush1.msra.mxu0 0.0
    %2172 = vmatprep.mubr.f32.mxu0 0.0
    %v2173 = vand.u32 %v2091, 4294901760
    %v2174 = vsub.f32 %v2091, %v2173
    %v2175 = vand.u32 %v2174, 4294901760
    %v2176 = vsub.f32 %v2174, %v2175
    %v2177 = vand.u32 %v2176, 4294901760
    %2178 = vmatmul.mubr.f32.gmra.mrb[0].mxu0 %v2177
    %v2179 = vpop.f32.mrb[0].mxu0
    %v2180 = vadd.f32 0.0, %v2179
    %v2181 = vpop.f32.mrb[0].mxu0
    %2182 = vdwg.mxu0
    %2183 = vmatprep.subr.mxu0 0.0
    %v2184 = vand.u32 %v754, 4294901760
    %v2185 = vsub.f32 %v754, %v2184
    %v2186 = vand.u32 %v2185, 4294901760
    %v2187 = vsub.f32 %v2185, %v2186
    %v2188 = vand.u32 %v2187, 4294901760
    %2189 = vmatpush1.msra.mxu0 %v2188
    %2190 = vmatprep.subr.mxu0 0.0
    %v2191 = vand.u32 %v755, 4294901760
    %v2192 = vsub.f32 %v755, %v2191
    %v2193 = vand.u32 %v2192, 4294901760
    %v2194 = vsub.f32 %v2192, %v2193
    %v2195 = vand.u32 %v2194, 4294901760
    %2196 = vmatpush1.msra.mxu0 %v2195
    %2197 = vmatprep.subr.mxu0 0.0
    %v2198 = vand.u32 %v756, 4294901760
    %v2199 = vsub.f32 %v756, %v2198
    %v2200 = vand.u32 %v2199, 4294901760
    %v2201 = vsub.f32 %v2199, %v2200
    %v2202 = vand.u32 %v2201, 4294901760
    %2203 = vmatpush1.msra.mxu0 %v2202
    %2204 = vmatprep.subr.mxu0 0.0
    %v2205 = vand.u32 %v757, 4294901760
    %v2206 = vsub.f32 %v757, %v2205
    %v2207 = vand.u32 %v2206, 4294901760
    %v2208 = vsub.f32 %v2206, %v2207
    %v2209 = vand.u32 %v2208, 4294901760
    %2210 = vmatpush1.msra.mxu0 %v2209
    %2211 = vmatprep.subr.mxu0 0.0
    %v2212 = vand.u32 %v758, 4294901760
    %v2213 = vsub.f32 %v758, %v2212
    %v2214 = vand.u32 %v2213, 4294901760
    %v2215 = vsub.f32 %v2213, %v2214
    %v2216 = vand.u32 %v2215, 4294901760
    %2217 = vmatpush1.msra.mxu0 %v2216
    %2218 = vmatprep.subr.mxu0 0.0
    %v2219 = vand.u32 %v759, 4294901760
    %v2220 = vsub.f32 %v759, %v2219
    %v2221 = vand.u32 %v2220, 4294901760
    %v2222 = vsub.f32 %v2220, %v2221
    %v2223 = vand.u32 %v2222, 4294901760
    %2224 = vmatpush1.msra.mxu0 %v2223
    %2225 = vmatprep.subr.mxu0 0.0
    %v2226 = vand.u32 %v760, 4294901760
    %v2227 = vsub.f32 %v760, %v2226
    %v2228 = vand.u32 %v2227, 4294901760
    %v2229 = vsub.f32 %v2227, %v2228
    %v2230 = vand.u32 %v2229, 4294901760
    %2231 = vmatpush1.msra.mxu0 %v2230
    %2232 = vmatprep.subr.mxu0 0.0
    %v2233 = vand.u32 %v761, 4294901760
    %v2234 = vsub.f32 %v761, %v2233
    %v2235 = vand.u32 %v2234, 4294901760
    %v2236 = vsub.f32 %v2234, %v2235
    %v2237 = vand.u32 %v2236, 4294901760
    %2238 = vmatpush1.msra.mxu0 %v2237
    %2239 = vmatprep.subr.mxu0 0.0
    %v2240 = vand.u32 %v762, 4294901760
    %v2241 = vsub.f32 %v762, %v2240
    %v2242 = vand.u32 %v2241, 4294901760
    %v2243 = vsub.f32 %v2241, %v2242
    %v2244 = vand.u32 %v2243, 4294901760
    %2245 = vmatpush1.msra.mxu0 %v2244
    %2246 = vmatprep.subr.mxu0 0.0
    %v2247 = vand.u32 %v763, 4294901760
    %v2248 = vsub.f32 %v763, %v2247
    %v2249 = vand.u32 %v2248, 4294901760
    %v2250 = vsub.f32 %v2248, %v2249
    %v2251 = vand.u32 %v2250, 4294901760
    %2252 = vmatpush1.msra.mxu0 %v2251
    %2253 = vmatprep.subr.mxu0 0.0
    %v2254 = vand.u32 %v764, 4294901760
    %v2255 = vsub.f32 %v764, %v2254
    %v2256 = vand.u32 %v2255, 4294901760
    %v2257 = vsub.f32 %v2255, %v2256
    %v2258 = vand.u32 %v2257, 4294901760
    %2259 = vmatpush1.msra.mxu0 %v2258
    %2260 = vmatprep.subr.mxu0 0.0
    %v2261 = vand.u32 %v765, 4294901760
    %v2262 = vsub.f32 %v765, %v2261
    %v2263 = vand.u32 %v2262, 4294901760
    %v2264 = vsub.f32 %v2262, %v2263
    %v2265 = vand.u32 %v2264, 4294901760
    %2266 = vmatpush1.msra.mxu0 %v2265
    %2267 = vmatprep.subr.mxu0 0.0
    %v2268 = vand.u32 %v766, 4294901760
    %v2269 = vsub.f32 %v766, %v2268
    %v2270 = vand.u32 %v2269, 4294901760
    %v2271 = vsub.f32 %v2269, %v2270
    %v2272 = vand.u32 %v2271, 4294901760
    %2273 = vmatpush1.msra.mxu0 %v2272
    %2274 = vmatprep.subr.mxu0 0.0
    %v2275 = vand.u32 %v767, 4294901760
    %v2276 = vsub.f32 %v767, %v2275
    %v2277 = vand.u32 %v2276, 4294901760
    %v2278 = vsub.f32 %v2276, %v2277
    %v2279 = vand.u32 %v2278, 4294901760
    %2280 = vmatpush1.msra.mxu0 %v2279
    %2281 = vmatprep.subr.mxu0 0.0
    %v2282 = vand.u32 %v768, 4294901760
    %v2283 = vsub.f32 %v768, %v2282
    %v2284 = vand.u32 %v2283, 4294901760
    %v2285 = vsub.f32 %v2283, %v2284
    %v2286 = vand.u32 %v2285, 4294901760
    %2287 = vmatpush1.msra.mxu0 %v2286
    %2288 = vmatprep.subr.mxu0 0.0
    %v2289 = vand.u32 %v769, 4294901760
    %v2290 = vsub.f32 %v769, %v2289
    %v2291 = vand.u32 %v2290, 4294901760
    %v2292 = vsub.f32 %v2290, %v2291
    %v2293 = vand.u32 %v2292, 4294901760
    %2294 = vmatpush1.msra.mxu0 %v2293
    %2295 = vmatprep.subr.mxu0 0.0
    %2296 = vmatpush1.msra.mxu0 0.0
    %2297 = vmatprep.subr.mxu0 0.0
    %2298 = vmatpush1.msra.mxu0 0.0
    %2299 = vmatprep.subr.mxu0 0.0
    %2300 = vmatpush1.msra.mxu0 0.0
    %2301 = vmatprep.subr.mxu0 0.0
    %2302 = vmatpush1.msra.mxu0 0.0
    %2303 = vmatprep.subr.mxu0 0.0
    %2304 = vmatpush1.msra.mxu0 0.0
    %2305 = vmatprep.subr.mxu0 0.0
    %2306 = vmatpush1.msra.mxu0 0.0
    %2307 = vmatprep.subr.mxu0 0.0
    %2308 = vmatpush1.msra.mxu0 0.0
    %2309 = vmatprep.subr.mxu0 0.0
    %2310 = vmatpush1.msra.mxu0 0.0
    %2311 = vmatprep.subr.mxu0 0.0
    %2312 = vmatpush1.msra.mxu0 0.0
    %2313 = vmatprep.subr.mxu0 0.0
    %2314 = vmatpush1.msra.mxu0 0.0
    %2315 = vmatprep.subr.mxu0 0.0
    %2316 = vmatpush1.msra.mxu0 0.0
    %2317 = vmatprep.subr.mxu0 0.0
    %2318 = vmatpush1.msra.mxu0 0.0
    %2319 = vmatprep.subr.mxu0 0.0
    %2320 = vmatpush1.msra.mxu0 0.0
    %2321 = vmatprep.subr.mxu0 0.0
    %2322 = vmatpush1.msra.mxu0 0.0
    %2323 = vmatprep.subr.mxu0 0.0
    %2324 = vmatpush1.msra.mxu0 0.0
    %2325 = vmatprep.subr.mxu0 0.0
    %2326 = vmatpush1.msra.mxu0 0.0
    %2327 = vmatprep.mubr.f32.mxu0 0.0
    %v2328 = vand.u32 %v2091, 4294901760
    %2329 = vmatmul.mubr.f32.gmra.mrb[0].mxu0 %v2328
    %v2330 = vpop.f32.mrb[0].mxu0
    %v2331 = vadd.f32 %v2180, %v2330
    %v2332 = vpop.f32.mrb[0].mxu0
    %2333 = vdwg.mxu0
    %2334 = vmatprep.subr.mxu0 0.0
    %v2335 = vand.u32 %v754, 4294901760
    %v2336 = vsub.f32 %v754, %v2335
    %2337 = vmatpush1.msra.mxu0 %v2336
    %2338 = vmatprep.subr.mxu0 0.0
    %v2339 = vand.u32 %v755, 4294901760
    %v2340 = vsub.f32 %v755, %v2339
    %2341 = vmatpush1.msra.mxu0 %v2340
    %2342 = vmatprep.subr.mxu0 0.0
    %v2343 = vand.u32 %v756, 4294901760
    %v2344 = vsub.f32 %v756, %v2343
    %2345 = vmatpush1.msra.mxu0 %v2344
    %2346 = vmatprep.subr.mxu0 0.0
    %v2347 = vand.u32 %v757, 4294901760
    %v2348 = vsub.f32 %v757, %v2347
    %2349 = vmatpush1.msra.mxu0 %v2348
    %2350 = vmatprep.subr.mxu0 0.0
    %v2351 = vand.u32 %v758, 4294901760
    %v2352 = vsub.f32 %v758, %v2351
    %2353 = vmatpush1.msra.mxu0 %v2352
    %2354 = vmatprep.subr.mxu0 0.0
    %v2355 = vand.u32 %v759, 4294901760
    %v2356 = vsub.f32 %v759, %v2355
    %2357 = vmatpush1.msra.mxu0 %v2356
    %2358 = vmatprep.subr.mxu0 0.0
    %v2359 = vand.u32 %v760, 4294901760
    %v2360 = vsub.f32 %v760, %v2359
    %2361 = vmatpush1.msra.mxu0 %v2360
    %2362 = vmatprep.subr.mxu0 0.0
    %v2363 = vand.u32 %v761, 4294901760
    %v2364 = vsub.f32 %v761, %v2363
    %2365 = vmatpush1.msra.mxu0 %v2364
    %2366 = vmatprep.subr.mxu0 0.0
    %v2367 = vand.u32 %v762, 4294901760
    %v2368 = vsub.f32 %v762, %v2367
    %2369 = vmatpush1.msra.mxu0 %v2368
    %2370 = vmatprep.subr.mxu0 0.0
    %v2371 = vand.u32 %v763, 4294901760
    %v2372 = vsub.f32 %v763, %v2371
    %2373 = vmatpush1.msra.mxu0 %v2372
    %2374 = vmatprep.subr.mxu0 0.0
    %v2375 = vand.u32 %v764, 4294901760
    %v2376 = vsub.f32 %v764, %v2375
    %2377 = vmatpush1.msra.mxu0 %v2376
    %2378 = vmatprep.subr.mxu0 0.0
    %v2379 = vand.u32 %v765, 4294901760
    %v2380 = vsub.f32 %v765, %v2379
    %2381 = vmatpush1.msra.mxu0 %v2380
    %2382 = vmatprep.subr.mxu0 0.0
    %v2383 = vand.u32 %v766, 4294901760
    %v2384 = vsub.f32 %v766, %v2383
    %2385 = vmatpush1.msra.mxu0 %v2384
    %2386 = vmatprep.subr.mxu0 0.0
    %v2387 = vand.u32 %v767, 4294901760
    %v2388 = vsub.f32 %v767, %v2387
    %2389 = vmatpush1.msra.mxu0 %v2388
    %2390 = vmatprep.subr.mxu0 0.0
    %v2391 = vand.u32 %v768, 4294901760
    %v2392 = vsub.f32 %v768, %v2391
    %2393 = vmatpush1.msra.mxu0 %v2392
    %2394 = vmatprep.subr.mxu0 0.0
    %v2395 = vand.u32 %v769, 4294901760
    %v2396 = vsub.f32 %v769, %v2395
    %2397 = vmatpush1.msra.mxu0 %v2396
    %2398 = vmatprep.subr.mxu0 0.0
    %2399 = vmatpush1.msra.mxu0 0.0
    %2400 = vmatprep.subr.mxu0 0.0
    %2401 = vmatpush1.msra.mxu0 0.0
    %2402 = vmatprep.subr.mxu0 0.0
    %2403 = vmatpush1.msra.mxu0 0.0
    %2404 = vmatprep.subr.mxu0 0.0
    %2405 = vmatpush1.msra.mxu0 0.0
    %2406 = vmatprep.subr.mxu0 0.0
    %2407 = vmatpush1.msra.mxu0 0.0
    %2408 = vmatprep.subr.mxu0 0.0
    %2409 = vmatpush1.msra.mxu0 0.0
    %2410 = vmatprep.subr.mxu0 0.0
    %2411 = vmatpush1.msra.mxu0 0.0
    %2412 = vmatprep.subr.mxu0 0.0
    %2413 = vmatpush1.msra.mxu0 0.0
    %2414 = vmatprep.subr.mxu0 0.0
    %2415 = vmatpush1.msra.mxu0 0.0
    %2416 = vmatprep.subr.mxu0 0.0
    %2417 = vmatpush1.msra.mxu0 0.0
    %2418 = vmatprep.subr.mxu0 0.0
    %2419 = vmatpush1.msra.mxu0 0.0
    %2420 = vmatprep.subr.mxu0 0.0
    %2421 = vmatpush1.msra.mxu0 0.0
    %2422 = vmatprep.subr.mxu0 0.0
    %2423 = vmatpush1.msra.mxu0 0.0
    %2424 = vmatprep.subr.mxu0 0.0
    %2425 = vmatpush1.msra.mxu0 0.0
    %2426 = vmatprep.subr.mxu0 0.0
    %2427 = vmatpush1.msra.mxu0 0.0
    %2428 = vmatprep.subr.mxu0 0.0
    %2429 = vmatpush1.msra.mxu0 0.0
    %2430 = vmatprep.mubr.f32.mxu0 0.0
    %v2431 = vand.u32 %v2091, 4294901760
    %v2432 = vsub.f32 %v2091, %v2431
    %2433 = vmatmul.mubr.f32.gmra.mrb[0].mxu0 %v2432
    %v2434 = vpop.f32.mrb[0].mxu0
    %v2435 = vadd.f32 %v2331, %v2434
    %v2436 = vpop.f32.mrb[0].mxu0
    %2437 = vdwg.mxu0
    %2438 = vmatprep.subr.mxu0 0.0
    %v2439 = vand.u32 %v754, 4294901760
    %2440 = vmatpush1.msra.mxu0 %v2439
    %2441 = vmatprep.subr.mxu0 0.0
    %v2442 = vand.u32 %v755, 4294901760
    %2443 = vmatpush1.msra.mxu0 %v2442
    %2444 = vmatprep.subr.mxu0 0.0
    %v2445 = vand.u32 %v756, 4294901760
    %2446 = vmatpush1.msra.mxu0 %v2445
    %2447 = vmatprep.subr.mxu0 0.0
    %v2448 = vand.u32 %v757, 4294901760
    %2449 = vmatpush1.msra.mxu0 %v2448
    %2450 = vmatprep.subr.mxu0 0.0
    %v2451 = vand.u32 %v758, 4294901760
    %2452 = vmatpush1.msra.mxu0 %v2451
    %2453 = vmatprep.subr.mxu0 0.0
    %v2454 = vand.u32 %v759, 4294901760
    %2455 = vmatpush1.msra.mxu0 %v2454
    %2456 = vmatprep.subr.mxu0 0.0
    %v2457 = vand.u32 %v760, 4294901760
    %2458 = vmatpush1.msra.mxu0 %v2457
    %2459 = vmatprep.subr.mxu0 0.0
    %v2460 = vand.u32 %v761, 4294901760
    %2461 = vmatpush1.msra.mxu0 %v2460
    %2462 = vmatprep.subr.mxu0 0.0
    %v2463 = vand.u32 %v762, 4294901760
    %2464 = vmatpush1.msra.mxu0 %v2463
    %2465 = vmatprep.subr.mxu0 0.0
    %v2466 = vand.u32 %v763, 4294901760
    %2467 = vmatpush1.msra.mxu0 %v2466
    %2468 = vmatprep.subr.mxu0 0.0
    %v2469 = vand.u32 %v764, 4294901760
    %2470 = vmatpush1.msra.mxu0 %v2469
    %2471 = vmatprep.subr.mxu0 0.0
    %v2472 = vand.u32 %v765, 4294901760
    %2473 = vmatpush1.msra.mxu0 %v2472
    %2474 = vmatprep.subr.mxu0 0.0
    %v2475 = vand.u32 %v766, 4294901760
    %2476 = vmatpush1.msra.mxu0 %v2475
    %2477 = vmatprep.subr.mxu0 0.0
    %v2478 = vand.u32 %v767, 4294901760
    %2479 = vmatpush1.msra.mxu0 %v2478
    %2480 = vmatprep.subr.mxu0 0.0
    %v2481 = vand.u32 %v768, 4294901760
    %2482 = vmatpush1.msra.mxu0 %v2481
    %2483 = vmatprep.subr.mxu0 0.0
    %v2484 = vand.u32 %v769, 4294901760
    %2485 = vmatpush1.msra.mxu0 %v2484
    %2486 = vmatprep.subr.mxu0 0.0
    %2487 = vmatpush1.msra.mxu0 0.0
    %2488 = vmatprep.subr.mxu0 0.0
    %2489 = vmatpush1.msra.mxu0 0.0
    %2490 = vmatprep.subr.mxu0 0.0
    %2491 = vmatpush1.msra.mxu0 0.0
    %2492 = vmatprep.subr.mxu0 0.0
    %2493 = vmatpush1.msra.mxu0 0.0
    %2494 = vmatprep.subr.mxu0 0.0
    %2495 = vmatpush1.msra.mxu0 0.0
    %2496 = vmatprep.subr.mxu0 0.0
    %2497 = vmatpush1.msra.mxu0 0.0
    %2498 = vmatprep.subr.mxu0 0.0
    %2499 = vmatpush1.msra.mxu0 0.0
    %2500 = vmatprep.subr.mxu0 0.0
    %2501 = vmatpush1.msra.mxu0 0.0
    %2502 = vmatprep.subr.mxu0 0.0
    %2503 = vmatpush1.msra.mxu0 0.0
    %2504 = vmatprep.subr.mxu0 0.0
    %2505 = vmatpush1.msra.mxu0 0.0
    %2506 = vmatprep.subr.mxu0 0.0
    %2507 = vmatpush1.msra.mxu0 0.0
    %2508 = vmatprep.subr.mxu0 0.0
    %2509 = vmatpush1.msra.mxu0 0.0
    %2510 = vmatprep.subr.mxu0 0.0
    %2511 = vmatpush1.msra.mxu0 0.0
    %2512 = vmatprep.subr.mxu0 0.0
    %2513 = vmatpush1.msra.mxu0 0.0
    %2514 = vmatprep.subr.mxu0 0.0
    %2515 = vmatpush1.msra.mxu0 0.0
    %2516 = vmatprep.subr.mxu0 0.0
    %2517 = vmatpush1.msra.mxu0 0.0
    %2518 = vmatprep.mubr.f32.mxu0 0.0
    %v2519 = vand.u32 %v2091, 4294901760
    %v2520 = vsub.f32 %v2091, %v2519
    %v2521 = vand.u32 %v2520, 4294901760
    %2522 = vmatmul.mubr.f32.gmra.mrb[0].mxu0 %v2521
    %v2523 = vpop.f32.mrb[0].mxu0
    %v2524 = vadd.f32 %v2435, %v2523
    %v2525 = vpop.f32.mrb[0].mxu0
    %2526 = vdwg.mxu0
    %2527 = vmatprep.subr.mxu0 0.0
    %v2528 = vand.u32 %v754, 4294901760
    %v2529 = vsub.f32 %v754, %v2528
    %v2530 = vand.u32 %v2529, 4294901760
    %2531 = vmatpush1.msra.mxu0 %v2530
    %2532 = vmatprep.subr.mxu0 0.0
    %v2533 = vand.u32 %v755, 4294901760
    %v2534 = vsub.f32 %v755, %v2533
    %v2535 = vand.u32 %v2534, 4294901760
    %2536 = vmatpush1.msra.mxu0 %v2535
    %2537 = vmatprep.subr.mxu0 0.0
    %v2538 = vand.u32 %v756, 4294901760
    %v2539 = vsub.f32 %v756, %v2538
    %v2540 = vand.u32 %v2539, 4294901760
    %2541 = vmatpush1.msra.mxu0 %v2540
    %2542 = vmatprep.subr.mxu0 0.0
    %v2543 = vand.u32 %v757, 4294901760
    %v2544 = vsub.f32 %v757, %v2543
    %v2545 = vand.u32 %v2544, 4294901760
    %2546 = vmatpush1.msra.mxu0 %v2545
    %2547 = vmatprep.subr.mxu0 0.0
    %v2548 = vand.u32 %v758, 4294901760
    %v2549 = vsub.f32 %v758, %v2548
    %v2550 = vand.u32 %v2549, 4294901760
    %2551 = vmatpush1.msra.mxu0 %v2550
    %2552 = vmatprep.subr.mxu0 0.0
    %v2553 = vand.u32 %v759, 4294901760
    %v2554 = vsub.f32 %v759, %v2553
    %v2555 = vand.u32 %v2554, 4294901760
    %2556 = vmatpush1.msra.mxu0 %v2555
    %2557 = vmatprep.subr.mxu0 0.0
    %v2558 = vand.u32 %v760, 4294901760
    %v2559 = vsub.f32 %v760, %v2558
    %v2560 = vand.u32 %v2559, 4294901760
    %2561 = vmatpush1.msra.mxu0 %v2560
    %2562 = vmatprep.subr.mxu0 0.0
    %v2563 = vand.u32 %v761, 4294901760
    %v2564 = vsub.f32 %v761, %v2563
    %v2565 = vand.u32 %v2564, 4294901760
    %2566 = vmatpush1.msra.mxu0 %v2565
    %2567 = vmatprep.subr.mxu0 0.0
    %v2568 = vand.u32 %v762, 4294901760
    %v2569 = vsub.f32 %v762, %v2568
    %v2570 = vand.u32 %v2569, 4294901760
    %2571 = vmatpush1.msra.mxu0 %v2570
    %2572 = vmatprep.subr.mxu0 0.0
    %v2573 = vand.u32 %v763, 4294901760
    %v2574 = vsub.f32 %v763, %v2573
    %v2575 = vand.u32 %v2574, 4294901760
    %2576 = vmatpush1.msra.mxu0 %v2575
    %2577 = vmatprep.subr.mxu0 0.0
    %v2578 = vand.u32 %v764, 4294901760
    %v2579 = vsub.f32 %v764, %v2578
    %v2580 = vand.u32 %v2579, 4294901760
    %2581 = vmatpush1.msra.mxu0 %v2580
    %2582 = vmatprep.subr.mxu0 0.0
    %v2583 = vand.u32 %v765, 4294901760
    %v2584 = vsub.f32 %v765, %v2583
    %v2585 = vand.u32 %v2584, 4294901760
    %2586 = vmatpush1.msra.mxu0 %v2585
    %2587 = vmatprep.subr.mxu0 0.0
    %v2588 = vand.u32 %v766, 4294901760
    %v2589 = vsub.f32 %v766, %v2588
    %v2590 = vand.u32 %v2589, 4294901760
    %2591 = vmatpush1.msra.mxu0 %v2590
    %2592 = vmatprep.subr.mxu0 0.0
    %v2593 = vand.u32 %v767, 4294901760
    %v2594 = vsub.f32 %v767, %v2593
    %v2595 = vand.u32 %v2594, 4294901760
    %2596 = vmatpush1.msra.mxu0 %v2595
    %2597 = vmatprep.subr.mxu0 0.0
    %v2598 = vand.u32 %v768, 4294901760
    %v2599 = vsub.f32 %v768, %v2598
    %v2600 = vand.u32 %v2599, 4294901760
    %2601 = vmatpush1.msra.mxu0 %v2600
    %2602 = vmatprep.subr.mxu0 0.0
    %v2603 = vand.u32 %v769, 4294901760
    %v2604 = vsub.f32 %v769, %v2603
    %v2605 = vand.u32 %v2604, 4294901760
    %2606 = vmatpush1.msra.mxu0 %v2605
    %2607 = vmatprep.subr.mxu0 0.0
    %2608 = vmatpush1.msra.mxu0 0.0
    %2609 = vmatprep.subr.mxu0 0.0
    %2610 = vmatpush1.msra.mxu0 0.0
    %2611 = vmatprep.subr.mxu0 0.0
    %2612 = vmatpush1.msra.mxu0 0.0
    %2613 = vmatprep.subr.mxu0 0.0
    %2614 = vmatpush1.msra.mxu0 0.0
    %2615 = vmatprep.subr.mxu0 0.0
    %2616 = vmatpush1.msra.mxu0 0.0
    %2617 = vmatprep.subr.mxu0 0.0
    %2618 = vmatpush1.msra.mxu0 0.0
    %2619 = vmatprep.subr.mxu0 0.0
    %2620 = vmatpush1.msra.mxu0 0.0
    %2621 = vmatprep.subr.mxu0 0.0
    %2622 = vmatpush1.msra.mxu0 0.0
    %2623 = vmatprep.subr.mxu0 0.0
    %2624 = vmatpush1.msra.mxu0 0.0
    %2625 = vmatprep.subr.mxu0 0.0
    %2626 = vmatpush1.msra.mxu0 0.0
    %2627 = vmatprep.subr.mxu0 0.0
    %2628 = vmatpush1.msra.mxu0 0.0
    %2629 = vmatprep.subr.mxu0 0.0
    %2630 = vmatpush1.msra.mxu0 0.0
    %2631 = vmatprep.subr.mxu0 0.0
    %2632 = vmatpush1.msra.mxu0 0.0
    %2633 = vmatprep.subr.mxu0 0.0
    %2634 = vmatpush1.msra.mxu0 0.0
    %2635 = vmatprep.subr.mxu0 0.0
    %2636 = vmatpush1.msra.mxu0 0.0
    %2637 = vmatprep.subr.mxu0 0.0
    %2638 = vmatpush1.msra.mxu0 0.0
    %2639 = vmatprep.mubr.f32.mxu0 0.0
    %v2640 = vand.u32 %v2091, 4294901760
    %2641 = vmatmul.mubr.f32.gmra.mrb[0].mxu0 %v2640
    %v2642 = vpop.f32.mrb[0].mxu0
    %v2643 = vadd.f32 %v2524, %v2642
    %v2644 = vpop.f32.mrb[0].mxu0
    %2645 = vdwg.mxu0
    %2646 = vmatprep.subr.mxu0 0.0
    %v2647 = vand.u32 %v754, 4294901760
    %2648 = vmatpush1.msra.mxu0 %v2647
    %2649 = vmatprep.subr.mxu0 0.0
    %v2650 = vand.u32 %v755, 4294901760
    %2651 = vmatpush1.msra.mxu0 %v2650
    %2652 = vmatprep.subr.mxu0 0.0
    %v2653 = vand.u32 %v756, 4294901760
    %2654 = vmatpush1.msra.mxu0 %v2653
    %2655 = vmatprep.subr.mxu0 0.0
    %v2656 = vand.u32 %v757, 4294901760
    %2657 = vmatpush1.msra.mxu0 %v2656
    %2658 = vmatprep.subr.mxu0 0.0
    %v2659 = vand.u32 %v758, 4294901760
    %2660 = vmatpush1.msra.mxu0 %v2659
    %2661 = vmatprep.subr.mxu0 0.0
    %v2662 = vand.u32 %v759, 4294901760
    %2663 = vmatpush1.msra.mxu0 %v2662
    %2664 = vmatprep.subr.mxu0 0.0
    %v2665 = vand.u32 %v760, 4294901760
    %2666 = vmatpush1.msra.mxu0 %v2665
    %2667 = vmatprep.subr.mxu0 0.0
    %v2668 = vand.u32 %v761, 4294901760
    %2669 = vmatpush1.msra.mxu0 %v2668
    %2670 = vmatprep.subr.mxu0 0.0
    %v2671 = vand.u32 %v762, 4294901760
    %2672 = vmatpush1.msra.mxu0 %v2671
    %2673 = vmatprep.subr.mxu0 0.0
    %v2674 = vand.u32 %v763, 4294901760
    %2675 = vmatpush1.msra.mxu0 %v2674
    %2676 = vmatprep.subr.mxu0 0.0
    %v2677 = vand.u32 %v764, 4294901760
    %2678 = vmatpush1.msra.mxu0 %v2677
    %2679 = vmatprep.subr.mxu0 0.0
    %v2680 = vand.u32 %v765, 4294901760
    %2681 = vmatpush1.msra.mxu0 %v2680
    %2682 = vmatprep.subr.mxu0 0.0
    %v2683 = vand.u32 %v766, 4294901760
    %2684 = vmatpush1.msra.mxu0 %v2683
    %2685 = vmatprep.subr.mxu0 0.0
    %v2686 = vand.u32 %v767, 4294901760
    %2687 = vmatpush1.msra.mxu0 %v2686
    %2688 = vmatprep.subr.mxu0 0.0
    %v2689 = vand.u32 %v768, 4294901760
    %2690 = vmatpush1.msra.mxu0 %v2689
    %2691 = vmatprep.subr.mxu0 0.0
    %v2692 = vand.u32 %v769, 4294901760
    %2693 = vmatpush1.msra.mxu0 %v2692
    %2694 = vmatprep.subr.mxu0 0.0
    %2695 = vmatpush1.msra.mxu0 0.0
    %2696 = vmatprep.subr.mxu0 0.0
    %2697 = vmatpush1.msra.mxu0 0.0
    %2698 = vmatprep.subr.mxu0 0.0
    %2699 = vmatpush1.msra.mxu0 0.0
    %2700 = vmatprep.subr.mxu0 0.0
    %2701 = vmatpush1.msra.mxu0 0.0
    %2702 = vmatprep.subr.mxu0 0.0
    %2703 = vmatpush1.msra.mxu0 0.0
    %2704 = vmatprep.subr.mxu0 0.0
    %2705 = vmatpush1.msra.mxu0 0.0
    %2706 = vmatprep.subr.mxu0 0.0
    %2707 = vmatpush1.msra.mxu0 0.0
    %2708 = vmatprep.subr.mxu0 0.0
    %2709 = vmatpush1.msra.mxu0 0.0
    %2710 = vmatprep.subr.mxu0 0.0
    %2711 = vmatpush1.msra.mxu0 0.0
    %2712 = vmatprep.subr.mxu0 0.0
    %2713 = vmatpush1.msra.mxu0 0.0
    %2714 = vmatprep.subr.mxu0 0.0
    %2715 = vmatpush1.msra.mxu0 0.0
    %2716 = vmatprep.subr.mxu0 0.0
    %2717 = vmatpush1.msra.mxu0 0.0
    %2718 = vmatprep.subr.mxu0 0.0
    %2719 = vmatpush1.msra.mxu0 0.0
    %2720 = vmatprep.subr.mxu0 0.0
    %2721 = vmatpush1.msra.mxu0 0.0
    %2722 = vmatprep.subr.mxu0 0.0
    %2723 = vmatpush1.msra.mxu0 0.0
    %2724 = vmatprep.subr.mxu0 0.0
    %2725 = vmatpush1.msra.mxu0 0.0
    %2726 = vmatprep.mubr.f32.mxu0 0.0
    %v2727 = vand.u32 %v2091, 4294901760
    %2728 = vmatmul.mubr.f32.gmra.mrb[0].mxu0 %v2727
    %v2729 = vpop.f32.mrb[0].mxu0
    %v2730 = vadd.f32 %v2643, %v2729
    %v2731 = vpop.f32.mrb[0].mxu0
    %2732 = vdwg.mxu0
    %v2733 = vrcp.pop %v2730
    %v2734 = vld [vmem:[#allocation4] sm:$0xff]
    %v2735 = vld [vmem:[#allocation4 + $0x8] sm:$0xff]
    %v2736 = vld [vmem:[#allocation4 + $0x10] sm:$0xff]
    %v2737 = vld [vmem:[#allocation4 + $0x18] sm:$0xff]
    %v2738 = vld [vmem:[#allocation4 + $0x20] sm:$0xff]
    %v2739 = vld [vmem:[#allocation4 + $0x28] sm:$0xff]
    %v2740 = vld [vmem:[#allocation4 + $0x30] sm:$0xff]
    %v2741 = vld [vmem:[#allocation4 + $0x38] sm:$0xff]
    %v2742 = vld [vmem:[#allocation4 + $0x40] sm:$0xff]
    %v2743 = vld [vmem:[#allocation4 + $0x48] sm:$0xff]
    %v2744 = vld [vmem:[#allocation4 + $0x50] sm:$0xff]
    %v2745 = vld [vmem:[#allocation4 + $0x58] sm:$0xff]
    %v2746 = vld [vmem:[#allocation4 + $0x60] sm:$0xff]
    %v2747 = vld [vmem:[#allocation4 + $0x68] sm:$0xff]
    %v2748 = vld [vmem:[#allocation4 + $0x70] sm:$0xff]
    %v2749 = vld [vmem:[#allocation4 + $0x78] sm:$0xff]
    %2750 = vmatprep.subr.mxu0 0.0
    %v2751 = vand.u32 %v2734, 4294901760
    %2752 = vmatpush1.msra.mxu0 %v2751
    %2753 = vmatprep.subr.mxu0 0.0
    %v2754 = vand.u32 %v2735, 4294901760
    %2755 = vmatpush1.msra.mxu0 %v2754
    %2756 = vmatprep.subr.mxu0 0.0
    %v2757 = vand.u32 %v2736, 4294901760
    %2758 = vmatpush1.msra.mxu0 %v2757
    %2759 = vmatprep.subr.mxu0 0.0
    %v2760 = vand.u32 %v2737, 4294901760
    %2761 = vmatpush1.msra.mxu0 %v2760
    %2762 = vmatprep.subr.mxu0 0.0
    %v2763 = vand.u32 %v2738, 4294901760
    %2764 = vmatpush1.msra.mxu0 %v2763
    %2765 = vmatprep.subr.mxu0 0.0
    %v2766 = vand.u32 %v2739, 4294901760
    %2767 = vmatpush1.msra.mxu0 %v2766
    %2768 = vmatprep.subr.mxu0 0.0
    %v2769 = vand.u32 %v2740, 4294901760
    %2770 = vmatpush1.msra.mxu0 %v2769
    %2771 = vmatprep.subr.mxu0 0.0
    %v2772 = vand.u32 %v2741, 4294901760
    %2773 = vmatpush1.msra.mxu0 %v2772
    %2774 = vmatprep.subr.mxu0 0.0
    %v2775 = vand.u32 %v2742, 4294901760
    %2776 = vmatpush1.msra.mxu0 %v2775
    %2777 = vmatprep.subr.mxu0 0.0
    %v2778 = vand.u32 %v2743, 4294901760
    %2779 = vmatpush1.msra.mxu0 %v2778
    %2780 = vmatprep.subr.mxu0 0.0
    %v2781 = vand.u32 %v2744, 4294901760
    %2782 = vmatpush1.msra.mxu0 %v2781
    %2783 = vmatprep.subr.mxu0 0.0
    %v2784 = vand.u32 %v2745, 4294901760
    %2785 = vmatpush1.msra.mxu0 %v2784
    %2786 = vmatprep.subr.mxu0 0.0
    %v2787 = vand.u32 %v2746, 4294901760
    %2788 = vmatpush1.msra.mxu0 %v2787
    %2789 = vmatprep.subr.mxu0 0.0
    %v2790 = vand.u32 %v2747, 4294901760
    %2791 = vmatpush1.msra.mxu0 %v2790
    %2792 = vmatprep.subr.mxu0 0.0
    %v2793 = vand.u32 %v2748, 4294901760
    %2794 = vmatpush1.msra.mxu0 %v2793
    %2795 = vmatprep.subr.mxu0 0.0
    %v2796 = vand.u32 %v2749, 4294901760
    %2797 = vmatpush1.msra.mxu0 %v2796
    %2798 = vmatprep.subr.mxu0 0.0
    %2799 = vmatpush1.msra.mxu0 0.0
    %2800 = vmatprep.subr.mxu0 0.0
    %2801 = vmatpush1.msra.mxu0 0.0
    %2802 = vmatprep.subr.mxu0 0.0
    %2803 = vmatpush1.msra.mxu0 0.0
    %2804 = vmatprep.subr.mxu0 0.0
    %2805 = vmatpush1.msra.mxu0 0.0
    %2806 = vmatprep.subr.mxu0 0.0
    %2807 = vmatpush1.msra.mxu0 0.0
    %2808 = vmatprep.subr.mxu0 0.0
    %2809 = vmatpush1.msra.mxu0 0.0
    %2810 = vmatprep.subr.mxu0 0.0
    %2811 = vmatpush1.msra.mxu0 0.0
    %2812 = vmatprep.subr.mxu0 0.0
    %2813 = vmatpush1.msra.mxu0 0.0
    %2814 = vmatprep.subr.mxu0 0.0
    %2815 = vmatpush1.msra.mxu0 0.0
    %2816 = vmatprep.subr.mxu0 0.0
    %2817 = vmatpush1.msra.mxu0 0.0
    %2818 = vmatprep.subr.mxu0 0.0
    %2819 = vmatpush1.msra.mxu0 0.0
    %2820 = vmatprep.subr.mxu0 0.0
    %2821 = vmatpush1.msra.mxu0 0.0
    %2822 = vmatprep.subr.mxu0 0.0
    %2823 = vmatpush1.msra.mxu0 0.0
    %2824 = vmatprep.subr.mxu0 0.0
    %2825 = vmatpush1.msra.mxu0 0.0
    %2826 = vmatprep.subr.mxu0 0.0
    %2827 = vmatpush1.msra.mxu0 0.0
    %2828 = vmatprep.subr.mxu0 0.0
    %2829 = vmatpush1.msra.mxu0 0.0
    %2830 = vmatprep.mubr.f32.mxu0 0.0
    %v2831 = vand.u32 %v74, 4294901760
    %v2832 = vsub.f32 %v74, %v2831
    %v2833 = vand.u32 %v2832, 4294901760
    %v2834 = vsub.f32 %v2832, %v2833
    %v2835 = vand.u32 %v2834, 4294901760
    %2836 = vmatmul.mubr.f32.gmra.mrb[0].mxu0 %v2835
    %v2837 = vpop.f32.mrb[0].mxu0
    %v2838 = vadd.f32 0.0, %v2837
    %v2839 = vpop.f32.mrb[0].mxu0
    %2840 = vdwg.mxu0
    %2841 = vmatprep.subr.mxu0 0.0
    %v2842 = vand.u32 %v2734, 4294901760
    %v2843 = vsub.f32 %v2734, %v2842
    %v2844 = vand.u32 %v2843, 4294901760
    %v2845 = vsub.f32 %v2843, %v2844
    %v2846 = vand.u32 %v2845, 4294901760
    %2847 = vmatpush1.msra.mxu0 %v2846
    %2848 = vmatprep.subr.mxu0 0.0
    %v2849 = vand.u32 %v2735, 4294901760
    %v2850 = vsub.f32 %v2735, %v2849
    %v2851 = vand.u32 %v2850, 4294901760
    %v2852 = vsub.f32 %v2850, %v2851
    %v2853 = vand.u32 %v2852, 4294901760
    %2854 = vmatpush1.msra.mxu0 %v2853
    %2855 = vmatprep.subr.mxu0 0.0
    %v2856 = vand.u32 %v2736, 4294901760
    %v2857 = vsub.f32 %v2736, %v2856
    %v2858 = vand.u32 %v2857, 4294901760
    %v2859 = vsub.f32 %v2857, %v2858
    %v2860 = vand.u32 %v2859, 4294901760
    %2861 = vmatpush1.msra.mxu0 %v2860
    %2862 = vmatprep.subr.mxu0 0.0
    %v2863 = vand.u32 %v2737, 4294901760
    %v2864 = vsub.f32 %v2737, %v2863
    %v2865 = vand.u32 %v2864, 4294901760
    %v2866 = vsub.f32 %v2864, %v2865
    %v2867 = vand.u32 %v2866, 4294901760
    %2868 = vmatpush1.msra.mxu0 %v2867
    %2869 = vmatprep.subr.mxu0 0.0
    %v2870 = vand.u32 %v2738, 4294901760
    %v2871 = vsub.f32 %v2738, %v2870
    %v2872 = vand.u32 %v2871, 4294901760
    %v2873 = vsub.f32 %v2871, %v2872
    %v2874 = vand.u32 %v2873, 4294901760
    %2875 = vmatpush1.msra.mxu0 %v2874
    %2876 = vmatprep.subr.mxu0 0.0
    %v2877 = vand.u32 %v2739, 4294901760
    %v2878 = vsub.f32 %v2739, %v2877
    %v2879 = vand.u32 %v2878, 4294901760
    %v2880 = vsub.f32 %v2878, %v2879
    %v2881 = vand.u32 %v2880, 4294901760
    %2882 = vmatpush1.msra.mxu0 %v2881
    %2883 = vmatprep.subr.mxu0 0.0
    %v2884 = vand.u32 %v2740, 4294901760
    %v2885 = vsub.f32 %v2740, %v2884
    %v2886 = vand.u32 %v2885, 4294901760
    %v2887 = vsub.f32 %v2885, %v2886
    %v2888 = vand.u32 %v2887, 4294901760
    %2889 = vmatpush1.msra.mxu0 %v2888
    %2890 = vmatprep.subr.mxu0 0.0
    %v2891 = vand.u32 %v2741, 4294901760
    %v2892 = vsub.f32 %v2741, %v2891
    %v2893 = vand.u32 %v2892, 4294901760
    %v2894 = vsub.f32 %v2892, %v2893
    %v2895 = vand.u32 %v2894, 4294901760
    %2896 = vmatpush1.msra.mxu0 %v2895
    %2897 = vmatprep.subr.mxu0 0.0
    %v2898 = vand.u32 %v2742, 4294901760
    %v2899 = vsub.f32 %v2742, %v2898
    %v2900 = vand.u32 %v2899, 4294901760
    %v2901 = vsub.f32 %v2899, %v2900
    %v2902 = vand.u32 %v2901, 4294901760
    %2903 = vmatpush1.msra.mxu0 %v2902
    %2904 = vmatprep.subr.mxu0 0.0
    %v2905 = vand.u32 %v2743, 4294901760
    %v2906 = vsub.f32 %v2743, %v2905
    %v2907 = vand.u32 %v2906, 4294901760
    %v2908 = vsub.f32 %v2906, %v2907
    %v2909 = vand.u32 %v2908, 4294901760
    %2910 = vmatpush1.msra.mxu0 %v2909
    %2911 = vmatprep.subr.mxu0 0.0
    %v2912 = vand.u32 %v2744, 4294901760
    %v2913 = vsub.f32 %v2744, %v2912
    %v2914 = vand.u32 %v2913, 4294901760
    %v2915 = vsub.f32 %v2913, %v2914
    %v2916 = vand.u32 %v2915, 4294901760
    %2917 = vmatpush1.msra.mxu0 %v2916
    %2918 = vmatprep.subr.mxu0 0.0
    %v2919 = vand.u32 %v2745, 4294901760
    %v2920 = vsub.f32 %v2745, %v2919
    %v2921 = vand.u32 %v2920, 4294901760
    %v2922 = vsub.f32 %v2920, %v2921
    %v2923 = vand.u32 %v2922, 4294901760
    %2924 = vmatpush1.msra.mxu0 %v2923
    %2925 = vmatprep.subr.mxu0 0.0
    %v2926 = vand.u32 %v2746, 4294901760
    %v2927 = vsub.f32 %v2746, %v2926
    %v2928 = vand.u32 %v2927, 4294901760
    %v2929 = vsub.f32 %v2927, %v2928
    %v2930 = vand.u32 %v2929, 4294901760
    %2931 = vmatpush1.msra.mxu0 %v2930
    %2932 = vmatprep.subr.mxu0 0.0
    %v2933 = vand.u32 %v2747, 4294901760
    %v2934 = vsub.f32 %v2747, %v2933
    %v2935 = vand.u32 %v2934, 4294901760
    %v2936 = vsub.f32 %v2934, %v2935
    %v2937 = vand.u32 %v2936, 4294901760
    %2938 = vmatpush1.msra.mxu0 %v2937
    %2939 = vmatprep.subr.mxu0 0.0
    %v2940 = vand.u32 %v2748, 4294901760
    %v2941 = vsub.f32 %v2748, %v2940
    %v2942 = vand.u32 %v2941, 4294901760
    %v2943 = vsub.f32 %v2941, %v2942
    %v2944 = vand.u32 %v2943, 4294901760
    %2945 = vmatpush1.msra.mxu0 %v2944
    %2946 = vmatprep.subr.mxu0 0.0
    %v2947 = vand.u32 %v2749, 4294901760
    %v2948 = vsub.f32 %v2749, %v2947
    %v2949 = vand.u32 %v2948, 4294901760
    %v2950 = vsub.f32 %v2948, %v2949
    %v2951 = vand.u32 %v2950, 4294901760
    %2952 = vmatpush1.msra.mxu0 %v2951
    %2953 = vmatprep.subr.mxu0 0.0
    %2954 = vmatpush1.msra.mxu0 0.0
    %2955 = vmatprep.subr.mxu0 0.0
    %2956 = vmatpush1.msra.mxu0 0.0
    %2957 = vmatprep.subr.mxu0 0.0
    %2958 = vmatpush1.msra.mxu0 0.0
    %2959 = vmatprep.subr.mxu0 0.0
    %2960 = vmatpush1.msra.mxu0 0.0
    %2961 = vmatprep.subr.mxu0 0.0
    %2962 = vmatpush1.msra.mxu0 0.0
    %2963 = vmatprep.subr.mxu0 0.0
    %2964 = vmatpush1.msra.mxu0 0.0
    %2965 = vmatprep.subr.mxu0 0.0
    %2966 = vmatpush1.msra.mxu0 0.0
    %2967 = vmatprep.subr.mxu0 0.0
    %2968 = vmatpush1.msra.mxu0 0.0
    %2969 = vmatprep.subr.mxu0 0.0
    %2970 = vmatpush1.msra.mxu0 0.0
    %2971 = vmatprep.subr.mxu0 0.0
    %2972 = vmatpush1.msra.mxu0 0.0
    %2973 = vmatprep.subr.mxu0 0.0
    %2974 = vmatpush1.msra.mxu0 0.0
    %2975 = vmatprep.subr.mxu0 0.0
    %2976 = vmatpush1.msra.mxu0 0.0
    %2977 = vmatprep.subr.mxu0 0.0
    %2978 = vmatpush1.msra.mxu0 0.0
    %2979 = vmatprep.subr.mxu0 0.0
    %2980 = vmatpush1.msra.mxu0 0.0
    %2981 = vmatprep.subr.mxu0 0.0
    %2982 = vmatpush1.msra.mxu0 0.0
    %2983 = vmatprep.subr.mxu0 0.0
    %2984 = vmatpush1.msra.mxu0 0.0
    %2985 = vmatprep.mubr.f32.mxu0 0.0
    %v2986 = vand.u32 %v74, 4294901760
    %2987 = vmatmul.mubr.f32.gmra.mrb[0].mxu0 %v2986
    %v2988 = vpop.f32.mrb[0].mxu0
    %v2989 = vadd.f32 %v2838, %v2988
    %v2990 = vpop.f32.mrb[0].mxu0
    %2991 = vdwg.mxu0
    %2992 = vmatprep.subr.mxu0 0.0
    %v2993 = vand.u32 %v2734, 4294901760
    %v2994 = vsub.f32 %v2734, %v2993
    %2995 = vmatpush1.msra.mxu0 %v2994
    %2996 = vmatprep.subr.mxu0 0.0
    %v2997 = vand.u32 %v2735, 4294901760
    %v2998 = vsub.f32 %v2735, %v2997
    %2999 = vmatpush1.msra.mxu0 %v2998
    %3000 = vmatprep.subr.mxu0 0.0
    %v3001 = vand.u32 %v2736, 4294901760
    %v3002 = vsub.f32 %v2736, %v3001
    %3003 = vmatpush1.msra.mxu0 %v3002
    %3004 = vmatprep.subr.mxu0 0.0
    %v3005 = vand.u32 %v2737, 4294901760
    %v3006 = vsub.f32 %v2737, %v3005
    %3007 = vmatpush1.msra.mxu0 %v3006
    %3008 = vmatprep.subr.mxu0 0.0
    %v3009 = vand.u32 %v2738, 4294901760
    %v3010 = vsub.f32 %v2738, %v3009
    %3011 = vmatpush1.msra.mxu0 %v3010
    %3012 = vmatprep.subr.mxu0 0.0
    %v3013 = vand.u32 %v2739, 4294901760
    %v3014 = vsub.f32 %v2739, %v3013
    %3015 = vmatpush1.msra.mxu0 %v3014
    %3016 = vmatprep.subr.mxu0 0.0
    %v3017 = vand.u32 %v2740, 4294901760
    %v3018 = vsub.f32 %v2740, %v3017
    %3019 = vmatpush1.msra.mxu0 %v3018
    %3020 = vmatprep.subr.mxu0 0.0
    %v3021 = vand.u32 %v2741, 4294901760
    %v3022 = vsub.f32 %v2741, %v3021
    %3023 = vmatpush1.msra.mxu0 %v3022
    %3024 = vmatprep.subr.mxu0 0.0
    %v3025 = vand.u32 %v2742, 4294901760
    %v3026 = vsub.f32 %v2742, %v3025
    %3027 = vmatpush1.msra.mxu0 %v3026
    %3028 = vmatprep.subr.mxu0 0.0
    %v3029 = vand.u32 %v2743, 4294901760
    %v3030 = vsub.f32 %v2743, %v3029
    %3031 = vmatpush1.msra.mxu0 %v3030
    %3032 = vmatprep.subr.mxu0 0.0
    %v3033 = vand.u32 %v2744, 4294901760
    %v3034 = vsub.f32 %v2744, %v3033
    %3035 = vmatpush1.msra.mxu0 %v3034
    %3036 = vmatprep.subr.mxu0 0.0
    %v3037 = vand.u32 %v2745, 4294901760
    %v3038 = vsub.f32 %v2745, %v3037
    %3039 = vmatpush1.msra.mxu0 %v3038
    %3040 = vmatprep.subr.mxu0 0.0
    %v3041 = vand.u32 %v2746, 4294901760
    %v3042 = vsub.f32 %v2746, %v3041
    %3043 = vmatpush1.msra.mxu0 %v3042
    %3044 = vmatprep.subr.mxu0 0.0
    %v3045 = vand.u32 %v2747, 4294901760
    %v3046 = vsub.f32 %v2747, %v3045
    %3047 = vmatpush1.msra.mxu0 %v3046
    %3048 = vmatprep.subr.mxu0 0.0
    %v3049 = vand.u32 %v2748, 4294901760
    %v3050 = vsub.f32 %v2748, %v3049
    %3051 = vmatpush1.msra.mxu0 %v3050
    %3052 = vmatprep.subr.mxu0 0.0
    %v3053 = vand.u32 %v2749, 4294901760
    %v3054 = vsub.f32 %v2749, %v3053
    %3055 = vmatpush1.msra.mxu0 %v3054
    %3056 = vmatprep.subr.mxu0 0.0
    %3057 = vmatpush1.msra.mxu0 0.0
    %3058 = vmatprep.subr.mxu0 0.0
    %3059 = vmatpush1.msra.mxu0 0.0
    %3060 = vmatprep.subr.mxu0 0.0
    %3061 = vmatpush1.msra.mxu0 0.0
    %3062 = vmatprep.subr.mxu0 0.0
    %3063 = vmatpush1.msra.mxu0 0.0
    %3064 = vmatprep.subr.mxu0 0.0
    %3065 = vmatpush1.msra.mxu0 0.0
    %3066 = vmatprep.subr.mxu0 0.0
    %3067 = vmatpush1.msra.mxu0 0.0
    %3068 = vmatprep.subr.mxu0 0.0
    %3069 = vmatpush1.msra.mxu0 0.0
    %3070 = vmatprep.subr.mxu0 0.0
    %3071 = vmatpush1.msra.mxu0 0.0
    %3072 = vmatprep.subr.mxu0 0.0
    %3073 = vmatpush1.msra.mxu0 0.0
    %3074 = vmatprep.subr.mxu0 0.0
    %3075 = vmatpush1.msra.mxu0 0.0
    %3076 = vmatprep.subr.mxu0 0.0
    %3077 = vmatpush1.msra.mxu0 0.0
    %3078 = vmatprep.subr.mxu0 0.0
    %3079 = vmatpush1.msra.mxu0 0.0
    %3080 = vmatprep.subr.mxu0 0.0
    %3081 = vmatpush1.msra.mxu0 0.0
    %3082 = vmatprep.subr.mxu0 0.0
    %3083 = vmatpush1.msra.mxu0 0.0
    %3084 = vmatprep.subr.mxu0 0.0
    %3085 = vmatpush1.msra.mxu0 0.0
    %3086 = vmatprep.subr.mxu0 0.0
    %3087 = vmatpush1.msra.mxu0 0.0
    %3088 = vmatprep.mubr.f32.mxu0 0.0
    %v3089 = vand.u32 %v74, 4294901760
    %v3090 = vsub.f32 %v74, %v3089
    %3091 = vmatmul.mubr.f32.gmra.mrb[0].mxu0 %v3090
    %v3092 = vpop.f32.mrb[0].mxu0
    %v3093 = vadd.f32 %v2989, %v3092
    %v3094 = vpop.f32.mrb[0].mxu0
    %3095 = vdwg.mxu0
    %3096 = vmatprep.subr.mxu0 0.0
    %v3097 = vand.u32 %v2734, 4294901760
    %3098 = vmatpush1.msra.mxu0 %v3097
    %3099 = vmatprep.subr.mxu0 0.0
    %v3100 = vand.u32 %v2735, 4294901760
    %3101 = vmatpush1.msra.mxu0 %v3100
    %3102 = vmatprep.subr.mxu0 0.0
    %v3103 = vand.u32 %v2736, 4294901760
    %3104 = vmatpush1.msra.mxu0 %v3103
    %3105 = vmatprep.subr.mxu0 0.0
    %v3106 = vand.u32 %v2737, 4294901760
    %3107 = vmatpush1.msra.mxu0 %v3106
    %3108 = vmatprep.subr.mxu0 0.0
    %v3109 = vand.u32 %v2738, 4294901760
    %3110 = vmatpush1.msra.mxu0 %v3109
    %3111 = vmatprep.subr.mxu0 0.0
    %v3112 = vand.u32 %v2739, 4294901760
    %3113 = vmatpush1.msra.mxu0 %v3112
    %3114 = vmatprep.subr.mxu0 0.0
    %v3115 = vand.u32 %v2740, 4294901760
    %3116 = vmatpush1.msra.mxu0 %v3115
    %3117 = vmatprep.subr.mxu0 0.0
    %v3118 = vand.u32 %v2741, 4294901760
    %3119 = vmatpush1.msra.mxu0 %v3118
    %3120 = vmatprep.subr.mxu0 0.0
    %v3121 = vand.u32 %v2742, 4294901760
    %3122 = vmatpush1.msra.mxu0 %v3121
    %3123 = vmatprep.subr.mxu0 0.0
    %v3124 = vand.u32 %v2743, 4294901760
    %3125 = vmatpush1.msra.mxu0 %v3124
    %3126 = vmatprep.subr.mxu0 0.0
    %v3127 = vand.u32 %v2744, 4294901760
    %3128 = vmatpush1.msra.mxu0 %v3127
    %3129 = vmatprep.subr.mxu0 0.0
    %v3130 = vand.u32 %v2745, 4294901760
    %3131 = vmatpush1.msra.mxu0 %v3130
    %3132 = vmatprep.subr.mxu0 0.0
    %v3133 = vand.u32 %v2746, 4294901760
    %3134 = vmatpush1.msra.mxu0 %v3133
    %3135 = vmatprep.subr.mxu0 0.0
    %v3136 = vand.u32 %v2747, 4294901760
    %3137 = vmatpush1.msra.mxu0 %v3136
    %3138 = vmatprep.subr.mxu0 0.0
    %v3139 = vand.u32 %v2748, 4294901760
    %3140 = vmatpush1.msra.mxu0 %v3139
    %3141 = vmatprep.subr.mxu0 0.0
    %v3142 = vand.u32 %v2749, 4294901760
    %3143 = vmatpush1.msra.mxu0 %v3142
    %3144 = vmatprep.subr.mxu0 0.0
    %3145 = vmatpush1.msra.mxu0 0.0
    %3146 = vmatprep.subr.mxu0 0.0
    %3147 = vmatpush1.msra.mxu0 0.0
    %3148 = vmatprep.subr.mxu0 0.0
    %3149 = vmatpush1.msra.mxu0 0.0
    %3150 = vmatprep.subr.mxu0 0.0
    %3151 = vmatpush1.msra.mxu0 0.0
    %3152 = vmatprep.subr.mxu0 0.0
    %3153 = vmatpush1.msra.mxu0 0.0
    %3154 = vmatprep.subr.mxu0 0.0
    %3155 = vmatpush1.msra.mxu0 0.0
    %3156 = vmatprep.subr.mxu0 0.0
    %3157 = vmatpush1.msra.mxu0 0.0
    %3158 = vmatprep.subr.mxu0 0.0
    %3159 = vmatpush1.msra.mxu0 0.0
    %3160 = vmatprep.subr.mxu0 0.0
    %3161 = vmatpush1.msra.mxu0 0.0
    %3162 = vmatprep.subr.mxu0 0.0
    %3163 = vmatpush1.msra.mxu0 0.0
    %3164 = vmatprep.subr.mxu0 0.0
    %3165 = vmatpush1.msra.mxu0 0.0
    %3166 = vmatprep.subr.mxu0 0.0
    %3167 = vmatpush1.msra.mxu0 0.0
    %3168 = vmatprep.subr.mxu0 0.0
    %3169 = vmatpush1.msra.mxu0 0.0
    %3170 = vmatprep.subr.mxu0 0.0
    %3171 = vmatpush1.msra.mxu0 0.0
    %3172 = vmatprep.subr.mxu0 0.0
    %3173 = vmatpush1.msra.mxu0 0.0
    %3174 = vmatprep.subr.mxu0 0.0
    %3175 = vmatpush1.msra.mxu0 0.0
    %3176 = vmatprep.mubr.f32.mxu0 0.0
    %v3177 = vand.u32 %v74, 4294901760
    %v3178 = vsub.f32 %v74, %v3177
    %v3179 = vand.u32 %v3178, 4294901760
    %3180 = vmatmul.mubr.f32.gmra.mrb[0].mxu0 %v3179
    %v3181 = vpop.f32.mrb[0].mxu0
    %v3182 = vadd.f32 %v3093, %v3181
    %v3183 = vpop.f32.mrb[0].mxu0
    %3184 = vdwg.mxu0
    %3185 = vmatprep.subr.mxu0 0.0
    %v3186 = vand.u32 %v2734, 4294901760
    %v3187 = vsub.f32 %v2734, %v3186
    %v3188 = vand.u32 %v3187, 4294901760
    %3189 = vmatpush1.msra.mxu0 %v3188
    %3190 = vmatprep.subr.mxu0 0.0
    %v3191 = vand.u32 %v2735, 4294901760
    %v3192 = vsub.f32 %v2735, %v3191
    %v3193 = vand.u32 %v3192, 4294901760
    %3194 = vmatpush1.msra.mxu0 %v3193
    %3195 = vmatprep.subr.mxu0 0.0
    %v3196 = vand.u32 %v2736, 4294901760
    %v3197 = vsub.f32 %v2736, %v3196
    %v3198 = vand.u32 %v3197, 4294901760
    %3199 = vmatpush1.msra.mxu0 %v3198
    %3200 = vmatprep.subr.mxu0 0.0
    %v3201 = vand.u32 %v2737, 4294901760
    %v3202 = vsub.f32 %v2737, %v3201
    %v3203 = vand.u32 %v3202, 4294901760
    %3204 = vmatpush1.msra.mxu0 %v3203
    %3205 = vmatprep.subr.mxu0 0.0
    %v3206 = vand.u32 %v2738, 4294901760
    %v3207 = vsub.f32 %v2738, %v3206
    %v3208 = vand.u32 %v3207, 4294901760
    %3209 = vmatpush1.msra.mxu0 %v3208
    %3210 = vmatprep.subr.mxu0 0.0
    %v3211 = vand.u32 %v2739, 4294901760
    %v3212 = vsub.f32 %v2739, %v3211
    %v3213 = vand.u32 %v3212, 4294901760
    %3214 = vmatpush1.msra.mxu0 %v3213
    %3215 = vmatprep.subr.mxu0 0.0
    %v3216 = vand.u32 %v2740, 4294901760
    %v3217 = vsub.f32 %v2740, %v3216
    %v3218 = vand.u32 %v3217, 4294901760
    %3219 = vmatpush1.msra.mxu0 %v3218
    %3220 = vmatprep.subr.mxu0 0.0
    %v3221 = vand.u32 %v2741, 4294901760
    %v3222 = vsub.f32 %v2741, %v3221
    %v3223 = vand.u32 %v3222, 4294901760
    %3224 = vmatpush1.msra.mxu0 %v3223
    %3225 = vmatprep.subr.mxu0 0.0
    %v3226 = vand.u32 %v2742, 4294901760
    %v3227 = vsub.f32 %v2742, %v3226
    %v3228 = vand.u32 %v3227, 4294901760
    %3229 = vmatpush1.msra.mxu0 %v3228
    %3230 = vmatprep.subr.mxu0 0.0
    %v3231 = vand.u32 %v2743, 4294901760
    %v3232 = vsub.f32 %v2743, %v3231
    %v3233 = vand.u32 %v3232, 4294901760
    %3234 = vmatpush1.msra.mxu0 %v3233
    %3235 = vmatprep.subr.mxu0 0.0
    %v3236 = vand.u32 %v2744, 4294901760
    %v3237 = vsub.f32 %v2744, %v3236
    %v3238 = vand.u32 %v3237, 4294901760
    %3239 = vmatpush1.msra.mxu0 %v3238
    %3240 = vmatprep.subr.mxu0 0.0
    %v3241 = vand.u32 %v2745, 4294901760
    %v3242 = vsub.f32 %v2745, %v3241
    %v3243 = vand.u32 %v3242, 4294901760
    %3244 = vmatpush1.msra.mxu0 %v3243
    %3245 = vmatprep.subr.mxu0 0.0
    %v3246 = vand.u32 %v2746, 4294901760
    %v3247 = vsub.f32 %v2746, %v3246
    %v3248 = vand.u32 %v3247, 4294901760
    %3249 = vmatpush1.msra.mxu0 %v3248
    %3250 = vmatprep.subr.mxu0 0.0
    %v3251 = vand.u32 %v2747, 4294901760
    %v3252 = vsub.f32 %v2747, %v3251
    %v3253 = vand.u32 %v3252, 4294901760
    %3254 = vmatpush1.msra.mxu0 %v3253
    %3255 = vmatprep.subr.mxu0 0.0
    %v3256 = vand.u32 %v2748, 4294901760
    %v3257 = vsub.f32 %v2748, %v3256
    %v3258 = vand.u32 %v3257, 4294901760
    %3259 = vmatpush1.msra.mxu0 %v3258
    %3260 = vmatprep.subr.mxu0 0.0
    %v3261 = vand.u32 %v2749, 4294901760
    %v3262 = vsub.f32 %v2749, %v3261
    %v3263 = vand.u32 %v3262, 4294901760
    %3264 = vmatpush1.msra.mxu0 %v3263
    %3265 = vmatprep.subr.mxu0 0.0
    %3266 = vmatpush1.msra.mxu0 0.0
    %3267 = vmatprep.subr.mxu0 0.0
    %3268 = vmatpush1.msra.mxu0 0.0
    %3269 = vmatprep.subr.mxu0 0.0
    %3270 = vmatpush1.msra.mxu0 0.0
    %3271 = vmatprep.subr.mxu0 0.0
    %3272 = vmatpush1.msra.mxu0 0.0
    %3273 = vmatprep.subr.mxu0 0.0
    %3274 = vmatpush1.msra.mxu0 0.0
    %3275 = vmatprep.subr.mxu0 0.0
    %3276 = vmatpush1.msra.mxu0 0.0
    %3277 = vmatprep.subr.mxu0 0.0
    %3278 = vmatpush1.msra.mxu0 0.0
    %3279 = vmatprep.subr.mxu0 0.0
    %3280 = vmatpush1.msra.mxu0 0.0
    %3281 = vmatprep.subr.mxu0 0.0
    %3282 = vmatpush1.msra.mxu0 0.0
    %3283 = vmatprep.subr.mxu0 0.0
    %3284 = vmatpush1.msra.mxu0 0.0
    %3285 = vmatprep.subr.mxu0 0.0
    %3286 = vmatpush1.msra.mxu0 0.0
    %3287 = vmatprep.subr.mxu0 0.0
    %3288 = vmatpush1.msra.mxu0 0.0
    %3289 = vmatprep.subr.mxu0 0.0
    %3290 = vmatpush1.msra.mxu0 0.0
    %3291 = vmatprep.subr.mxu0 0.0
    %3292 = vmatpush1.msra.mxu0 0.0
    %3293 = vmatprep.subr.mxu0 0.0
    %3294 = vmatpush1.msra.mxu0 0.0
    %3295 = vmatprep.subr.mxu0 0.0
    %3296 = vmatpush1.msra.mxu0 0.0
    %3297 = vmatprep.mubr.f32.mxu0 0.0
    %v3298 = vand.u32 %v74, 4294901760
    %3299 = vmatmul.mubr.f32.gmra.mrb[0].mxu0 %v3298
    %v3300 = vpop.f32.mrb[0].mxu0
    %v3301 = vadd.f32 %v3182, %v3300
    %v3302 = vpop.f32.mrb[0].mxu0
    %3303 = vdwg.mxu0
    %3304 = vmatprep.subr.mxu0 0.0
    %v3305 = vand.u32 %v2734, 4294901760
    %3306 = vmatpush1.msra.mxu0 %v3305
    %3307 = vmatprep.subr.mxu0 0.0
    %v3308 = vand.u32 %v2735, 4294901760
    %3309 = vmatpush1.msra.mxu0 %v3308
    %3310 = vmatprep.subr.mxu0 0.0
    %v3311 = vand.u32 %v2736, 4294901760
    %3312 = vmatpush1.msra.mxu0 %v3311
    %3313 = vmatprep.subr.mxu0 0.0
    %v3314 = vand.u32 %v2737, 4294901760
    %3315 = vmatpush1.msra.mxu0 %v3314
    %3316 = vmatprep.subr.mxu0 0.0
    %v3317 = vand.u32 %v2738, 4294901760
    %3318 = vmatpush1.msra.mxu0 %v3317
    %3319 = vmatprep.subr.mxu0 0.0
    %v3320 = vand.u32 %v2739, 4294901760
    %3321 = vmatpush1.msra.mxu0 %v3320
    %3322 = vmatprep.subr.mxu0 0.0
    %v3323 = vand.u32 %v2740, 4294901760
    %3324 = vmatpush1.msra.mxu0 %v3323
    %3325 = vmatprep.subr.mxu0 0.0
    %v3326 = vand.u32 %v2741, 4294901760
    %3327 = vmatpush1.msra.mxu0 %v3326
    %3328 = vmatprep.subr.mxu0 0.0
    %v3329 = vand.u32 %v2742, 4294901760
    %3330 = vmatpush1.msra.mxu0 %v3329
    %3331 = vmatprep.subr.mxu0 0.0
    %v3332 = vand.u32 %v2743, 4294901760
    %3333 = vmatpush1.msra.mxu0 %v3332
    %3334 = vmatprep.subr.mxu0 0.0
    %v3335 = vand.u32 %v2744, 4294901760
    %3336 = vmatpush1.msra.mxu0 %v3335
    %3337 = vmatprep.subr.mxu0 0.0
    %v3338 = vand.u32 %v2745, 4294901760
    %3339 = vmatpush1.msra.mxu0 %v3338
    %3340 = vmatprep.subr.mxu0 0.0
    %v3341 = vand.u32 %v2746, 4294901760
    %3342 = vmatpush1.msra.mxu0 %v3341
    %3343 = vmatprep.subr.mxu0 0.0
    %v3344 = vand.u32 %v2747, 4294901760
    %3345 = vmatpush1.msra.mxu0 %v3344
    %3346 = vmatprep.subr.mxu0 0.0
    %v3347 = vand.u32 %v2748, 4294901760
    %3348 = vmatpush1.msra.mxu0 %v3347
    %3349 = vmatprep.subr.mxu0 0.0
    %v3350 = vand.u32 %v2749, 4294901760
    %3351 = vmatpush1.msra.mxu0 %v3350
    %3352 = vmatprep.subr.mxu0 0.0
    %3353 = vmatpush1.msra.mxu0 0.0
    %3354 = vmatprep.subr.mxu0 0.0
    %3355 = vmatpush1.msra.mxu0 0.0
    %3356 = vmatprep.subr.mxu0 0.0
    %3357 = vmatpush1.msra.mxu0 0.0
    %3358 = vmatprep.subr.mxu0 0.0
    %3359 = vmatpush1.msra.mxu0 0.0
    %3360 = vmatprep.subr.mxu0 0.0
    %3361 = vmatpush1.msra.mxu0 0.0
    %3362 = vmatprep.subr.mxu0 0.0
    %3363 = vmatpush1.msra.mxu0 0.0
    %3364 = vmatprep.subr.mxu0 0.0
    %3365 = vmatpush1.msra.mxu0 0.0
    %3366 = vmatprep.subr.mxu0 0.0
    %3367 = vmatpush1.msra.mxu0 0.0
    %3368 = vmatprep.subr.mxu0 0.0
    %3369 = vmatpush1.msra.mxu0 0.0
    %3370 = vmatprep.subr.mxu0 0.0
    %3371 = vmatpush1.msra.mxu0 0.0
    %3372 = vmatprep.subr.mxu0 0.0
    %3373 = vmatpush1.msra.mxu0 0.0
    %3374 = vmatprep.subr.mxu0 0.0
    %3375 = vmatpush1.msra.mxu0 0.0
    %3376 = vmatprep.subr.mxu0 0.0
    %3377 = vmatpush1.msra.mxu0 0.0
    %3378 = vmatprep.subr.mxu0 0.0
    %3379 = vmatpush1.msra.mxu0 0.0
    %3380 = vmatprep.subr.mxu0 0.0
    %3381 = vmatpush1.msra.mxu0 0.0
    %3382 = vmatprep.subr.mxu0 0.0
    %3383 = vmatpush1.msra.mxu0 0.0
    %3384 = vmatprep.mubr.f32.mxu0 0.0
    %v3385 = vand.u32 %v74, 4294901760
    %3386 = vmatmul.mubr.f32.gmra.mrb[0].mxu0 %v3385
    %v3387 = vpop.f32.mrb[0].mxu0
    %v3388 = vadd.f32 %v3301, %v3387
    %v3389 = vpop.f32.mrb[0].mxu0
    %3390 = vdwg.mxu0
    %v3391 = vadd.f32 %v2091, %v3388
    %v3392 = vmul.f32 %v3391, %v2733
    %3393 = vrot.lane.b32.xlu0 %v3392, 8
    %v3394 = vpop.permute.xlu0 %3393
    %v3395 = vmax.f32 %v3392, %v3394
    %3396 = vrot.lane.b32.xlu0 %v3395, 16
    %v3397 = vpop.permute.xlu0 %3396
    %v3398 = vmax.f32 %v3395, %v3397
    %3399 = vrot.lane.b32.xlu0 %v3398, 32
    %v3400 = vpop.permute.xlu0 %3399
    %v3401 = vmax.f32 %v3398, %v3400
    %3402 = vrot.lane.b32.xlu0 %v3401, 64
    %v3403 = vpop.permute.xlu0 %3402
    %v3404 = vmax.f32 %v3401, %v3403
    %v3405 = vsub.f32 %v3392, %v3404
    %v3406 = vmul.f32 %v3405, 1.442695
    %v3407 = vpow.pop %v3406
    %3408 = vmatprep.subr.mxu0 0.0
    %v3409 = vand.u32 %v754, 4294901760
    %3410 = vmatpush1.msra.mxu0 %v3409
    %3411 = vmatprep.subr.mxu0 0.0
    %v3412 = vand.u32 %v755, 4294901760
    %3413 = vmatpush1.msra.mxu0 %v3412
    %3414 = vmatprep.subr.mxu0 0.0
    %v3415 = vand.u32 %v756, 4294901760
    %3416 = vmatpush1.msra.mxu0 %v3415
    %3417 = vmatprep.subr.mxu0 0.0
    %v3418 = vand.u32 %v757, 4294901760
    %3419 = vmatpush1.msra.mxu0 %v3418
    %3420 = vmatprep.subr.mxu0 0.0
    %v3421 = vand.u32 %v758, 4294901760
    %3422 = vmatpush1.msra.mxu0 %v3421
    %3423 = vmatprep.subr.mxu0 0.0
    %v3424 = vand.u32 %v759, 4294901760
    %3425 = vmatpush1.msra.mxu0 %v3424
    %3426 = vmatprep.subr.mxu0 0.0
    %v3427 = vand.u32 %v760, 4294901760
    %3428 = vmatpush1.msra.mxu0 %v3427
    %3429 = vmatprep.subr.mxu0 0.0
    %v3430 = vand.u32 %v761, 4294901760
    %3431 = vmatpush1.msra.mxu0 %v3430
    %3432 = vmatprep.subr.mxu0 0.0
    %v3433 = vand.u32 %v762, 4294901760
    %3434 = vmatpush1.msra.mxu0 %v3433
    %3435 = vmatprep.subr.mxu0 0.0
    %v3436 = vand.u32 %v763, 4294901760
    %3437 = vmatpush1.msra.mxu0 %v3436
    %3438 = vmatprep.subr.mxu0 0.0
    %v3439 = vand.u32 %v764, 4294901760
    %3440 = vmatpush1.msra.mxu0 %v3439
    %3441 = vmatprep.subr.mxu0 0.0
    %v3442 = vand.u32 %v765, 4294901760
    %3443 = vmatpush1.msra.mxu0 %v3442
    %3444 = vmatprep.subr.mxu0 0.0
    %v3445 = vand.u32 %v766, 4294901760
    %3446 = vmatpush1.msra.mxu0 %v3445
    %3447 = vmatprep.subr.mxu0 0.0
    %v3448 = vand.u32 %v767, 4294901760
    %3449 = vmatpush1.msra.mxu0 %v3448
    %3450 = vmatprep.subr.mxu0 0.0
    %v3451 = vand.u32 %v768, 4294901760
    %3452 = vmatpush1.msra.mxu0 %v3451
    %3453 = vmatprep.subr.mxu0 0.0
    %v3454 = vand.u32 %v769, 4294901760
    %3455 = vmatpush1.msra.mxu0 %v3454
    %3456 = vmatprep.subr.mxu0 0.0
    %3457 = vmatpush1.msra.mxu0 0.0
    %3458 = vmatprep.subr.mxu0 0.0
    %3459 = vmatpush1.msra.mxu0 0.0
    %3460 = vmatprep.subr.mxu0 0.0
    %3461 = vmatpush1.msra.mxu0 0.0
    %3462 = vmatprep.subr.mxu0 0.0
    %3463 = vmatpush1.msra.mxu0 0.0
    %3464 = vmatprep.subr.mxu0 0.0
    %3465 = vmatpush1.msra.mxu0 0.0
    %3466 = vmatprep.subr.mxu0 0.0
    %3467 = vmatpush1.msra.mxu0 0.0
    %3468 = vmatprep.subr.mxu0 0.0
    %3469 = vmatpush1.msra.mxu0 0.0
    %3470 = vmatprep.subr.mxu0 0.0
    %3471 = vmatpush1.msra.mxu0 0.0
    %3472 = vmatprep.subr.mxu0 0.0
    %3473 = vmatpush1.msra.mxu0 0.0
    %3474 = vmatprep.subr.mxu0 0.0
    %3475 = vmatpush1.msra.mxu0 0.0
    %3476 = vmatprep.subr.mxu0 0.0
    %3477 = vmatpush1.msra.mxu0 0.0
    %3478 = vmatprep.subr.mxu0 0.0
    %3479 = vmatpush1.msra.mxu0 0.0
    %3480 = vmatprep.subr.mxu0 0.0
    %3481 = vmatpush1.msra.mxu0 0.0
    %3482 = vmatprep.subr.mxu0 0.0
    %3483 = vmatpush1.msra.mxu0 0.0
    %3484 = vmatprep.subr.mxu0 0.0
    %3485 = vmatpush1.msra.mxu0 0.0
    %3486 = vmatprep.subr.mxu0 0.0
    %3487 = vmatpush1.msra.mxu0 0.0
    %3488 = vmatprep.mubr.f32.mxu0 0.0
    %v3489 = vand.u32 %v3407, 4294901760
    %v3490 = vsub.f32 %v3407, %v3489
    %v3491 = vand.u32 %v3490, 4294901760
    %v3492 = vsub.f32 %v3490, %v3491
    %v3493 = vand.u32 %v3492, 4294901760
    %3494 = vmatmul.mubr.f32.gmra.mrb[0].mxu0 %v3493
    %v3495 = vpop.f32.mrb[0].mxu0
    %v3496 = vadd.f32 0.0, %v3495
    %v3497 = vpop.f32.mrb[0].mxu0
    %3498 = vdwg.mxu0
    %3499 = vmatprep.subr.mxu0 0.0
    %v3500 = vand.u32 %v754, 4294901760
    %v3501 = vsub.f32 %v754, %v3500
    %v3502 = vand.u32 %v3501, 4294901760
    %v3503 = vsub.f32 %v3501, %v3502
    %v3504 = vand.u32 %v3503, 4294901760
    %3505 = vmatpush1.msra.mxu0 %v3504
    %3506 = vmatprep.subr.mxu0 0.0
    %v3507 = vand.u32 %v755, 4294901760
    %v3508 = vsub.f32 %v755, %v3507
    %v3509 = vand.u32 %v3508, 4294901760
    %v3510 = vsub.f32 %v3508, %v3509
    %v3511 = vand.u32 %v3510, 4294901760
    %3512 = vmatpush1.msra.mxu0 %v3511
    %3513 = vmatprep.subr.mxu0 0.0
    %v3514 = vand.u32 %v756, 4294901760
    %v3515 = vsub.f32 %v756, %v3514
    %v3516 = vand.u32 %v3515, 4294901760
    %v3517 = vsub.f32 %v3515, %v3516
    %v3518 = vand.u32 %v3517, 4294901760
    %3519 = vmatpush1.msra.mxu0 %v3518
    %3520 = vmatprep.subr.mxu0 0.0
    %v3521 = vand.u32 %v757, 4294901760
    %v3522 = vsub.f32 %v757, %v3521
    %v3523 = vand.u32 %v3522, 4294901760
    %v3524 = vsub.f32 %v3522, %v3523
    %v3525 = vand.u32 %v3524, 4294901760
    %3526 = vmatpush1.msra.mxu0 %v3525
    %3527 = vmatprep.subr.mxu0 0.0
    %v3528 = vand.u32 %v758, 4294901760
    %v3529 = vsub.f32 %v758, %v3528
    %v3530 = vand.u32 %v3529, 4294901760
    %v3531 = vsub.f32 %v3529, %v3530
    %v3532 = vand.u32 %v3531, 4294901760
    %3533 = vmatpush1.msra.mxu0 %v3532
    %3534 = vmatprep.subr.mxu0 0.0
    %v3535 = vand.u32 %v759, 4294901760
    %v3536 = vsub.f32 %v759, %v3535
    %v3537 = vand.u32 %v3536, 4294901760
    %v3538 = vsub.f32 %v3536, %v3537
    %v3539 = vand.u32 %v3538, 4294901760
    %3540 = vmatpush1.msra.mxu0 %v3539
    %3541 = vmatprep.subr.mxu0 0.0
    %v3542 = vand.u32 %v760, 4294901760
    %v3543 = vsub.f32 %v760, %v3542
    %v3544 = vand.u32 %v3543, 4294901760
    %v3545 = vsub.f32 %v3543, %v3544
    %v3546 = vand.u32 %v3545, 4294901760
    %3547 = vmatpush1.msra.mxu0 %v3546
    %3548 = vmatprep.subr.mxu0 0.0
    %v3549 = vand.u32 %v761, 4294901760
    %v3550 = vsub.f32 %v761, %v3549
    %v3551 = vand.u32 %v3550, 4294901760
    %v3552 = vsub.f32 %v3550, %v3551
    %v3553 = vand.u32 %v3552, 4294901760
    %3554 = vmatpush1.msra.mxu0 %v3553
    %3555 = vmatprep.subr.mxu0 0.0
    %v3556 = vand.u32 %v762, 4294901760
    %v3557 = vsub.f32 %v762, %v3556
    %v3558 = vand.u32 %v3557, 4294901760
    %v3559 = vsub.f32 %v3557, %v3558
    %v3560 = vand.u32 %v3559, 4294901760
    %3561 = vmatpush1.msra.mxu0 %v3560
    %3562 = vmatprep.subr.mxu0 0.0
    %v3563 = vand.u32 %v763, 4294901760
    %v3564 = vsub.f32 %v763, %v3563
    %v3565 = vand.u32 %v3564, 4294901760
    %v3566 = vsub.f32 %v3564, %v3565
    %v3567 = vand.u32 %v3566, 4294901760
    %3568 = vmatpush1.msra.mxu0 %v3567
    %3569 = vmatprep.subr.mxu0 0.0
    %v3570 = vand.u32 %v764, 4294901760
    %v3571 = vsub.f32 %v764, %v3570
    %v3572 = vand.u32 %v3571, 4294901760
    %v3573 = vsub.f32 %v3571, %v3572
    %v3574 = vand.u32 %v3573, 4294901760
    %3575 = vmatpush1.msra.mxu0 %v3574
    %3576 = vmatprep.subr.mxu0 0.0
    %v3577 = vand.u32 %v765, 4294901760
    %v3578 = vsub.f32 %v765, %v3577
    %v3579 = vand.u32 %v3578, 4294901760
    %v3580 = vsub.f32 %v3578, %v3579
    %v3581 = vand.u32 %v3580, 4294901760
    %3582 = vmatpush1.msra.mxu0 %v3581
    %3583 = vmatprep.subr.mxu0 0.0
    %v3584 = vand.u32 %v766, 4294901760
    %v3585 = vsub.f32 %v766, %v3584
    %v3586 = vand.u32 %v3585, 4294901760
    %v3587 = vsub.f32 %v3585, %v3586
    %v3588 = vand.u32 %v3587, 4294901760
    %3589 = vmatpush1.msra.mxu0 %v3588
    %3590 = vmatprep.subr.mxu0 0.0
    %v3591 = vand.u32 %v767, 4294901760
    %v3592 = vsub.f32 %v767, %v3591
    %v3593 = vand.u32 %v3592, 4294901760
    %v3594 = vsub.f32 %v3592, %v3593
    %v3595 = vand.u32 %v3594, 4294901760
    %3596 = vmatpush1.msra.mxu0 %v3595
    %3597 = vmatprep.subr.mxu0 0.0
    %v3598 = vand.u32 %v768, 4294901760
    %v3599 = vsub.f32 %v768, %v3598
    %v3600 = vand.u32 %v3599, 4294901760
    %v3601 = vsub.f32 %v3599, %v3600
    %v3602 = vand.u32 %v3601, 4294901760
    %3603 = vmatpush1.msra.mxu0 %v3602
    %3604 = vmatprep.subr.mxu0 0.0
    %v3605 = vand.u32 %v769, 4294901760
    %v3606 = vsub.f32 %v769, %v3605
    %v3607 = vand.u32 %v3606, 4294901760
    %v3608 = vsub.f32 %v3606, %v3607
    %v3609 = vand.u32 %v3608, 4294901760
    %3610 = vmatpush1.msra.mxu0 %v3609
    %3611 = vmatprep.subr.mxu0 0.0
    %3612 = vmatpush1.msra.mxu0 0.0
    %3613 = vmatprep.subr.mxu0 0.0
    %3614 = vmatpush1.msra.mxu0 0.0
    %3615 = vmatprep.subr.mxu0 0.0
    %3616 = vmatpush1.msra.mxu0 0.0
    %3617 = vmatprep.subr.mxu0 0.0
    %3618 = vmatpush1.msra.mxu0 0.0
    %3619 = vmatprep.subr.mxu0 0.0
    %3620 = vmatpush1.msra.mxu0 0.0
    %3621 = vmatprep.subr.mxu0 0.0
    %3622 = vmatpush1.msra.mxu0 0.0
    %3623 = vmatprep.subr.mxu0 0.0
    %3624 = vmatpush1.msra.mxu0 0.0
    %3625 = vmatprep.subr.mxu0 0.0
    %3626 = vmatpush1.msra.mxu0 0.0
    %3627 = vmatprep.subr.mxu0 0.0
    %3628 = vmatpush1.msra.mxu0 0.0
    %3629 = vmatprep.subr.mxu0 0.0
    %3630 = vmatpush1.msra.mxu0 0.0
    %3631 = vmatprep.subr.mxu0 0.0
    %3632 = vmatpush1.msra.mxu0 0.0
    %3633 = vmatprep.subr.mxu0 0.0
    %3634 = vmatpush1.msra.mxu0 0.0
    %3635 = vmatprep.subr.mxu0 0.0
    %3636 = vmatpush1.msra.mxu0 0.0
    %3637 = vmatprep.subr.mxu0 0.0
    %3638 = vmatpush1.msra.mxu0 0.0
    %3639 = vmatprep.subr.mxu0 0.0
    %3640 = vmatpush1.msra.mxu0 0.0
    %3641 = vmatprep.subr.mxu0 0.0
    %3642 = vmatpush1.msra.mxu0 0.0
    %3643 = vmatprep.mubr.f32.mxu0 0.0
    %v3644 = vand.u32 %v3407, 4294901760
    %3645 = vmatmul.mubr.f32.gmra.mrb[0].mxu0 %v3644
    %v3646 = vpop.f32.mrb[0].mxu0
    %v3647 = vadd.f32 %v3496, %v3646
    %v3648 = vpop.f32.mrb[0].mxu0
    %3649 = vdwg.mxu0
    %3650 = vmatprep.subr.mxu0 0.0
    %v3651 = vand.u32 %v754, 4294901760
    %v3652 = vsub.f32 %v754, %v3651
    %3653 = vmatpush1.msra.mxu0 %v3652
    %3654 = vmatprep.subr.mxu0 0.0
    %v3655 = vand.u32 %v755, 4294901760
    %v3656 = vsub.f32 %v755, %v3655
    %3657 = vmatpush1.msra.mxu0 %v3656
    %3658 = vmatprep.subr.mxu0 0.0
    %v3659 = vand.u32 %v756, 4294901760
    %v3660 = vsub.f32 %v756, %v3659
    %3661 = vmatpush1.msra.mxu0 %v3660
    %3662 = vmatprep.subr.mxu0 0.0
    %v3663 = vand.u32 %v757, 4294901760
    %v3664 = vsub.f32 %v757, %v3663
    %3665 = vmatpush1.msra.mxu0 %v3664
    %3666 = vmatprep.subr.mxu0 0.0
    %v3667 = vand.u32 %v758, 4294901760
    %v3668 = vsub.f32 %v758, %v3667
    %3669 = vmatpush1.msra.mxu0 %v3668
    %3670 = vmatprep.subr.mxu0 0.0
    %v3671 = vand.u32 %v759, 4294901760
    %v3672 = vsub.f32 %v759, %v3671
    %3673 = vmatpush1.msra.mxu0 %v3672
    %3674 = vmatprep.subr.mxu0 0.0
    %v3675 = vand.u32 %v760, 4294901760
    %v3676 = vsub.f32 %v760, %v3675
    %3677 = vmatpush1.msra.mxu0 %v3676
    %3678 = vmatprep.subr.mxu0 0.0
    %v3679 = vand.u32 %v761, 4294901760
    %v3680 = vsub.f32 %v761, %v3679
    %3681 = vmatpush1.msra.mxu0 %v3680
    %3682 = vmatprep.subr.mxu0 0.0
    %v3683 = vand.u32 %v762, 4294901760
    %v3684 = vsub.f32 %v762, %v3683
    %3685 = vmatpush1.msra.mxu0 %v3684
    %3686 = vmatprep.subr.mxu0 0.0
    %v3687 = vand.u32 %v763, 4294901760
    %v3688 = vsub.f32 %v763, %v3687
    %3689 = vmatpush1.msra.mxu0 %v3688
    %3690 = vmatprep.subr.mxu0 0.0
    %v3691 = vand.u32 %v764, 4294901760
    %v3692 = vsub.f32 %v764, %v3691
    %3693 = vmatpush1.msra.mxu0 %v3692
    %3694 = vmatprep.subr.mxu0 0.0
    %v3695 = vand.u32 %v765, 4294901760
    %v3696 = vsub.f32 %v765, %v3695
    %3697 = vmatpush1.msra.mxu0 %v3696
    %3698 = vmatprep.subr.mxu0 0.0
    %v3699 = vand.u32 %v766, 4294901760
    %v3700 = vsub.f32 %v766, %v3699
    %3701 = vmatpush1.msra.mxu0 %v3700
    %3702 = vmatprep.subr.mxu0 0.0
    %v3703 = vand.u32 %v767, 4294901760
    %v3704 = vsub.f32 %v767, %v3703
    %3705 = vmatpush1.msra.mxu0 %v3704
    %3706 = vmatprep.subr.mxu0 0.0
    %v3707 = vand.u32 %v768, 4294901760
    %v3708 = vsub.f32 %v768, %v3707
    %3709 = vmatpush1.msra.mxu0 %v3708
    %3710 = vmatprep.subr.mxu0 0.0
    %v3711 = vand.u32 %v769, 4294901760
    %v3712 = vsub.f32 %v769, %v3711
    %3713 = vmatpush1.msra.mxu0 %v3712
    %3714 = vmatprep.subr.mxu0 0.0
    %3715 = vmatpush1.msra.mxu0 0.0
    %3716 = vmatprep.subr.mxu0 0.0
    %3717 = vmatpush1.msra.mxu0 0.0
    %3718 = vmatprep.subr.mxu0 0.0
    %3719 = vmatpush1.msra.mxu0 0.0
    %3720 = vmatprep.subr.mxu0 0.0
    %3721 = vmatpush1.msra.mxu0 0.0
    %3722 = vmatprep.subr.mxu0 0.0
    %3723 = vmatpush1.msra.mxu0 0.0
    %3724 = vmatprep.subr.mxu0 0.0
    %3725 = vmatpush1.msra.mxu0 0.0
    %3726 = vmatprep.subr.mxu0 0.0
    %3727 = vmatpush1.msra.mxu0 0.0
    %3728 = vmatprep.subr.mxu0 0.0
    %3729 = vmatpush1.msra.mxu0 0.0
    %3730 = vmatprep.subr.mxu0 0.0
    %3731 = vmatpush1.msra.mxu0 0.0
    %3732 = vmatprep.subr.mxu0 0.0
    %3733 = vmatpush1.msra.mxu0 0.0
    %3734 = vmatprep.subr.mxu0 0.0
    %3735 = vmatpush1.msra.mxu0 0.0
    %3736 = vmatprep.subr.mxu0 0.0
    %3737 = vmatpush1.msra.mxu0 0.0
    %3738 = vmatprep.subr.mxu0 0.0
    %3739 = vmatpush1.msra.mxu0 0.0
    %3740 = vmatprep.subr.mxu0 0.0
    %3741 = vmatpush1.msra.mxu0 0.0
    %3742 = vmatprep.subr.mxu0 0.0
    %3743 = vmatpush1.msra.mxu0 0.0
    %3744 = vmatprep.subr.mxu0 0.0
    %3745 = vmatpush1.msra.mxu0 0.0
    %3746 = vmatprep.mubr.f32.mxu0 0.0
    %v3747 = vand.u32 %v3407, 4294901760
    %v3748 = vsub.f32 %v3407, %v3747
    %3749 = vmatmul.mubr.f32.gmra.mrb[0].mxu0 %v3748
    %v3750 = vpop.f32.mrb[0].mxu0
    %v3751 = vadd.f32 %v3647, %v3750
    %v3752 = vpop.f32.mrb[0].mxu0
    %3753 = vdwg.mxu0
    %3754 = vmatprep.subr.mxu0 0.0
    %v3755 = vand.u32 %v754, 4294901760
    %3756 = vmatpush1.msra.mxu0 %v3755
    %3757 = vmatprep.subr.mxu0 0.0
    %v3758 = vand.u32 %v755, 4294901760
    %3759 = vmatpush1.msra.mxu0 %v3758
    %3760 = vmatprep.subr.mxu0 0.0
    %v3761 = vand.u32 %v756, 4294901760
    %3762 = vmatpush1.msra.mxu0 %v3761
    %3763 = vmatprep.subr.mxu0 0.0
    %v3764 = vand.u32 %v757, 4294901760
    %3765 = vmatpush1.msra.mxu0 %v3764
    %3766 = vmatprep.subr.mxu0 0.0
    %v3767 = vand.u32 %v758, 4294901760
    %3768 = vmatpush1.msra.mxu0 %v3767
    %3769 = vmatprep.subr.mxu0 0.0
    %v3770 = vand.u32 %v759, 4294901760
    %3771 = vmatpush1.msra.mxu0 %v3770
    %3772 = vmatprep.subr.mxu0 0.0
    %v3773 = vand.u32 %v760, 4294901760
    %3774 = vmatpush1.msra.mxu0 %v3773
    %3775 = vmatprep.subr.mxu0 0.0
    %v3776 = vand.u32 %v761, 4294901760
    %3777 = vmatpush1.msra.mxu0 %v3776
    %3778 = vmatprep.subr.mxu0 0.0
    %v3779 = vand.u32 %v762, 4294901760
    %3780 = vmatpush1.msra.mxu0 %v3779
    %3781 = vmatprep.subr.mxu0 0.0
    %v3782 = vand.u32 %v763, 4294901760
    %3783 = vmatpush1.msra.mxu0 %v3782
    %3784 = vmatprep.subr.mxu0 0.0
    %v3785 = vand.u32 %v764, 4294901760
    %3786 = vmatpush1.msra.mxu0 %v3785
    %3787 = vmatprep.subr.mxu0 0.0
    %v3788 = vand.u32 %v765, 4294901760
    %3789 = vmatpush1.msra.mxu0 %v3788
    %3790 = vmatprep.subr.mxu0 0.0
    %v3791 = vand.u32 %v766, 4294901760
    %3792 = vmatpush1.msra.mxu0 %v3791
    %3793 = vmatprep.subr.mxu0 0.0
    %v3794 = vand.u32 %v767, 4294901760
    %3795 = vmatpush1.msra.mxu0 %v3794
    %3796 = vmatprep.subr.mxu0 0.0
    %v3797 = vand.u32 %v768, 4294901760
    %3798 = vmatpush1.msra.mxu0 %v3797
    %3799 = vmatprep.subr.mxu0 0.0
    %v3800 = vand.u32 %v769, 4294901760
    %3801 = vmatpush1.msra.mxu0 %v3800
    %3802 = vmatprep.subr.mxu0 0.0
    %3803 = vmatpush1.msra.mxu0 0.0
    %3804 = vmatprep.subr.mxu0 0.0
    %3805 = vmatpush1.msra.mxu0 0.0
    %3806 = vmatprep.subr.mxu0 0.0
    %3807 = vmatpush1.msra.mxu0 0.0
    %3808 = vmatprep.subr.mxu0 0.0
    %3809 = vmatpush1.msra.mxu0 0.0
    %3810 = vmatprep.subr.mxu0 0.0
    %3811 = vmatpush1.msra.mxu0 0.0
    %3812 = vmatprep.subr.mxu0 0.0
    %3813 = vmatpush1.msra.mxu0 0.0
    %3814 = vmatprep.subr.mxu0 0.0
    %3815 = vmatpush1.msra.mxu0 0.0
    %3816 = vmatprep.subr.mxu0 0.0
    %3817 = vmatpush1.msra.mxu0 0.0
    %3818 = vmatprep.subr.mxu0 0.0
    %3819 = vmatpush1.msra.mxu0 0.0
    %3820 = vmatprep.subr.mxu0 0.0
    %3821 = vmatpush1.msra.mxu0 0.0
    %3822 = vmatprep.subr.mxu0 0.0
    %3823 = vmatpush1.msra.mxu0 0.0
    %3824 = vmatprep.subr.mxu0 0.0
    %3825 = vmatpush1.msra.mxu0 0.0
    %3826 = vmatprep.subr.mxu0 0.0
    %3827 = vmatpush1.msra.mxu0 0.0
    %3828 = vmatprep.subr.mxu0 0.0
    %3829 = vmatpush1.msra.mxu0 0.0
    %3830 = vmatprep.subr.mxu0 0.0
    %3831 = vmatpush1.msra.mxu0 0.0
    %3832 = vmatprep.subr.mxu0 0.0
    %3833 = vmatpush1.msra.mxu0 0.0
    %3834 = vmatprep.mubr.f32.mxu0 0.0
    %v3835 = vand.u32 %v3407, 4294901760
    %v3836 = vsub.f32 %v3407, %v3835
    %v3837 = vand.u32 %v3836, 4294901760
    %3838 = vmatmul.mubr.f32.gmra.mrb[0].mxu0 %v3837
    %v3839 = vpop.f32.mrb[0].mxu0
    %v3840 = vadd.f32 %v3751, %v3839
    %v3841 = vpop.f32.mrb[0].mxu0
    %3842 = vdwg.mxu0
    %3843 = vmatprep.subr.mxu0 0.0
    %v3844 = vand.u32 %v754, 4294901760
    %v3845 = vsub.f32 %v754, %v3844
    %v3846 = vand.u32 %v3845, 4294901760
    %3847 = vmatpush1.msra.mxu0 %v3846
    %3848 = vmatprep.subr.mxu0 0.0
    %v3849 = vand.u32 %v755, 4294901760
    %v3850 = vsub.f32 %v755, %v3849
    %v3851 = vand.u32 %v3850, 4294901760
    %3852 = vmatpush1.msra.mxu0 %v3851
    %3853 = vmatprep.subr.mxu0 0.0
    %v3854 = vand.u32 %v756, 4294901760
    %v3855 = vsub.f32 %v756, %v3854
    %v3856 = vand.u32 %v3855, 4294901760
    %3857 = vmatpush1.msra.mxu0 %v3856
    %3858 = vmatprep.subr.mxu0 0.0
    %v3859 = vand.u32 %v757, 4294901760
    %v3860 = vsub.f32 %v757, %v3859
    %v3861 = vand.u32 %v3860, 4294901760
    %3862 = vmatpush1.msra.mxu0 %v3861
    %3863 = vmatprep.subr.mxu0 0.0
    %v3864 = vand.u32 %v758, 4294901760
    %v3865 = vsub.f32 %v758, %v3864
    %v3866 = vand.u32 %v3865, 4294901760
    %3867 = vmatpush1.msra.mxu0 %v3866
    %3868 = vmatprep.subr.mxu0 0.0
    %v3869 = vand.u32 %v759, 4294901760
    %v3870 = vsub.f32 %v759, %v3869
    %v3871 = vand.u32 %v3870, 4294901760
    %3872 = vmatpush1.msra.mxu0 %v3871
    %3873 = vmatprep.subr.mxu0 0.0
    %v3874 = vand.u32 %v760, 4294901760
    %v3875 = vsub.f32 %v760, %v3874
    %v3876 = vand.u32 %v3875, 4294901760
    %3877 = vmatpush1.msra.mxu0 %v3876
    %3878 = vmatprep.subr.mxu0 0.0
    %v3879 = vand.u32 %v761, 4294901760
    %v3880 = vsub.f32 %v761, %v3879
    %v3881 = vand.u32 %v3880, 4294901760
    %3882 = vmatpush1.msra.mxu0 %v3881
    %3883 = vmatprep.subr.mxu0 0.0
    %v3884 = vand.u32 %v762, 4294901760
    %v3885 = vsub.f32 %v762, %v3884
    %v3886 = vand.u32 %v3885, 4294901760
    %3887 = vmatpush1.msra.mxu0 %v3886
    %3888 = vmatprep.subr.mxu0 0.0
    %v3889 = vand.u32 %v763, 4294901760
    %v3890 = vsub.f32 %v763, %v3889
    %v3891 = vand.u32 %v3890, 4294901760
    %3892 = vmatpush1.msra.mxu0 %v3891
    %3893 = vmatprep.subr.mxu0 0.0
    %v3894 = vand.u32 %v764, 4294901760
    %v3895 = vsub.f32 %v764, %v3894
    %v3896 = vand.u32 %v3895, 4294901760
    %3897 = vmatpush1.msra.mxu0 %v3896
    %3898 = vmatprep.subr.mxu0 0.0
    %v3899 = vand.u32 %v765, 4294901760
    %v3900 = vsub.f32 %v765, %v3899
    %v3901 = vand.u32 %v3900, 4294901760
    %3902 = vmatpush1.msra.mxu0 %v3901
    %3903 = vmatprep.subr.mxu0 0.0
    %v3904 = vand.u32 %v766, 4294901760
    %v3905 = vsub.f32 %v766, %v3904
    %v3906 = vand.u32 %v3905, 4294901760
    %3907 = vmatpush1.msra.mxu0 %v3906
    %3908 = vmatprep.subr.mxu0 0.0
    %v3909 = vand.u32 %v767, 4294901760
    %v3910 = vsub.f32 %v767, %v3909
    %v3911 = vand.u32 %v3910, 4294901760
    %3912 = vmatpush1.msra.mxu0 %v3911
    %3913 = vmatprep.subr.mxu0 0.0
    %v3914 = vand.u32 %v768, 4294901760
    %v3915 = vsub.f32 %v768, %v3914
    %v3916 = vand.u32 %v3915, 4294901760
    %3917 = vmatpush1.msra.mxu0 %v3916
    %3918 = vmatprep.subr.mxu0 0.0
    %v3919 = vand.u32 %v769, 4294901760
    %v3920 = vsub.f32 %v769, %v3919
    %v3921 = vand.u32 %v3920, 4294901760
    %3922 = vmatpush1.msra.mxu0 %v3921
    %3923 = vmatprep.subr.mxu0 0.0
    %3924 = vmatpush1.msra.mxu0 0.0
    %3925 = vmatprep.subr.mxu0 0.0
    %3926 = vmatpush1.msra.mxu0 0.0
    %3927 = vmatprep.subr.mxu0 0.0
    %3928 = vmatpush1.msra.mxu0 0.0
    %3929 = vmatprep.subr.mxu0 0.0
    %3930 = vmatpush1.msra.mxu0 0.0
    %3931 = vmatprep.subr.mxu0 0.0
    %3932 = vmatpush1.msra.mxu0 0.0
    %3933 = vmatprep.subr.mxu0 0.0
    %3934 = vmatpush1.msra.mxu0 0.0
    %3935 = vmatprep.subr.mxu0 0.0
    %3936 = vmatpush1.msra.mxu0 0.0
    %3937 = vmatprep.subr.mxu0 0.0
    %3938 = vmatpush1.msra.mxu0 0.0
    %3939 = vmatprep.subr.mxu0 0.0
    %3940 = vmatpush1.msra.mxu0 0.0
    %3941 = vmatprep.subr.mxu0 0.0
    %3942 = vmatpush1.msra.mxu0 0.0
    %3943 = vmatprep.subr.mxu0 0.0
    %3944 = vmatpush1.msra.mxu0 0.0
    %3945 = vmatprep.subr.mxu0 0.0
    %3946 = vmatpush1.msra.mxu0 0.0
    %3947 = vmatprep.subr.mxu0 0.0
    %3948 = vmatpush1.msra.mxu0 0.0
    %3949 = vmatprep.subr.mxu0 0.0
    %3950 = vmatpush1.msra.mxu0 0.0
    %3951 = vmatprep.subr.mxu0 0.0
    %3952 = vmatpush1.msra.mxu0 0.0
    %3953 = vmatprep.subr.mxu0 0.0
    %3954 = vmatpush1.msra.mxu0 0.0
    %3955 = vmatprep.mubr.f32.mxu0 0.0
    %v3956 = vand.u32 %v3407, 4294901760
    %3957 = vmatmul.mubr.f32.gmra.mrb[0].mxu0 %v3956
    %v3958 = vpop.f32.mrb[0].mxu0
    %v3959 = vadd.f32 %v3840, %v3958
    %v3960 = vpop.f32.mrb[0].mxu0
    %3961 = vdwg.mxu0
    %3962 = vmatprep.subr.mxu0 0.0
    %v3963 = vand.u32 %v754, 4294901760
    %3964 = vmatpush1.msra.mxu0 %v3963
    %3965 = vmatprep.subr.mxu0 0.0
    %v3966 = vand.u32 %v755, 4294901760
    %3967 = vmatpush1.msra.mxu0 %v3966
    %3968 = vmatprep.subr.mxu0 0.0
    %v3969 = vand.u32 %v756, 4294901760
    %3970 = vmatpush1.msra.mxu0 %v3969
    %3971 = vmatprep.subr.mxu0 0.0
    %v3972 = vand.u32 %v757, 4294901760
    %3973 = vmatpush1.msra.mxu0 %v3972
    %3974 = vmatprep.subr.mxu0 0.0
    %v3975 = vand.u32 %v758, 4294901760
    %3976 = vmatpush1.msra.mxu0 %v3975
    %3977 = vmatprep.subr.mxu0 0.0
    %v3978 = vand.u32 %v759, 4294901760
    %3979 = vmatpush1.msra.mxu0 %v3978
    %3980 = vmatprep.subr.mxu0 0.0
    %v3981 = vand.u32 %v760, 4294901760
    %3982 = vmatpush1.msra.mxu0 %v3981
    %3983 = vmatprep.subr.mxu0 0.0
    %v3984 = vand.u32 %v761, 4294901760
    %3985 = vmatpush1.msra.mxu0 %v3984
    %3986 = vmatprep.subr.mxu0 0.0
    %v3987 = vand.u32 %v762, 4294901760
    %3988 = vmatpush1.msra.mxu0 %v3987
    %3989 = vmatprep.subr.mxu0 0.0
    %v3990 = vand.u32 %v763, 4294901760
    %3991 = vmatpush1.msra.mxu0 %v3990
    %3992 = vmatprep.subr.mxu0 0.0
    %v3993 = vand.u32 %v764, 4294901760
    %3994 = vmatpush1.msra.mxu0 %v3993
    %3995 = vmatprep.subr.mxu0 0.0
    %v3996 = vand.u32 %v765, 4294901760
    %3997 = vmatpush1.msra.mxu0 %v3996
    %3998 = vmatprep.subr.mxu0 0.0
    %v3999 = vand.u32 %v766, 4294901760
    %4000 = vmatpush1.msra.mxu0 %v3999
    %4001 = vmatprep.subr.mxu0 0.0
    %v4002 = vand.u32 %v767, 4294901760
    %4003 = vmatpush1.msra.mxu0 %v4002
    %4004 = vmatprep.subr.mxu0 0.0
    %v4005 = vand.u32 %v768, 4294901760
    %4006 = vmatpush1.msra.mxu0 %v4005
    %4007 = vmatprep.subr.mxu0 0.0
    %v4008 = vand.u32 %v769, 4294901760
    %4009 = vmatpush1.msra.mxu0 %v4008
    %4010 = vmatprep.subr.mxu0 0.0
    %4011 = vmatpush1.msra.mxu0 0.0
    %4012 = vmatprep.subr.mxu0 0.0
    %4013 = vmatpush1.msra.mxu0 0.0
    %4014 = vmatprep.subr.mxu0 0.0
    %4015 = vmatpush1.msra.mxu0 0.0
    %4016 = vmatprep.subr.mxu0 0.0
    %4017 = vmatpush1.msra.mxu0 0.0
    %4018 = vmatprep.subr.mxu0 0.0
    %4019 = vmatpush1.msra.mxu0 0.0
    %4020 = vmatprep.subr.mxu0 0.0
    %4021 = vmatpush1.msra.mxu0 0.0
    %4022 = vmatprep.subr.mxu0 0.0
    %4023 = vmatpush1.msra.mxu0 0.0
    %4024 = vmatprep.subr.mxu0 0.0
    %4025 = vmatpush1.msra.mxu0 0.0
    %4026 = vmatprep.subr.mxu0 0.0
    %4027 = vmatpush1.msra.mxu0 0.0
    %4028 = vmatprep.subr.mxu0 0.0
    %4029 = vmatpush1.msra.mxu0 0.0
    %4030 = vmatprep.subr.mxu0 0.0
    %4031 = vmatpush1.msra.mxu0 0.0
    %4032 = vmatprep.subr.mxu0 0.0
    %4033 = vmatpush1.msra.mxu0 0.0
    %4034 = vmatprep.subr.mxu0 0.0
    %4035 = vmatpush1.msra.mxu0 0.0
    %4036 = vmatprep.subr.mxu0 0.0
    %4037 = vmatpush1.msra.mxu0 0.0
    %4038 = vmatprep.subr.mxu0 0.0
    %4039 = vmatpush1.msra.mxu0 0.0
    %4040 = vmatprep.subr.mxu0 0.0
    %4041 = vmatpush1.msra.mxu0 0.0
    %4042 = vmatprep.mubr.f32.mxu0 0.0
    %v4043 = vand.u32 %v3407, 4294901760
    %4044 = vmatmul.mubr.f32.gmra.mrb[0].mxu0 %v4043
    %v4045 = vpop.f32.mrb[0].mxu0
    %v4046 = vadd.f32 %v3959, %v4045
    %v4047 = vpop.f32.mrb[0].mxu0
    %4048 = vdwg.mxu0
    %v4049 = vrcp.pop %v4046
    %v4050 = vmul.f32 %v3407, %v4049
    %v4051 = vld [vmem:[#allocation6] sm:$0xff]
    %v4052 = vld [vmem:[#allocation6 + $0x8] sm:$0xff]
    %v4053 = vld [vmem:[#allocation6 + $0x10] sm:$0xff]
    %v4054 = vld [vmem:[#allocation6 + $0x18] sm:$0xff]
    %v4055 = vld [vmem:[#allocation6 + $0x20] sm:$0xff]
    %v4056 = vld [vmem:[#allocation6 + $0x28] sm:$0xff]
    %v4057 = vld [vmem:[#allocation6 + $0x30] sm:$0xff]
    %v4058 = vld [vmem:[#allocation6 + $0x38] sm:$0xff]
    %v4059 = vld [vmem:[#allocation6 + $0x40] sm:$0xff]
    %v4060 = vld [vmem:[#allocation6 + $0x48] sm:$0xff]
    %v4061 = vld [vmem:[#allocation6 + $0x50] sm:$0xff]
    %v4062 = vld [vmem:[#allocation6 + $0x58] sm:$0xff]
    %v4063 = vld [vmem:[#allocation6 + $0x60] sm:$0xff]
    %v4064 = vld [vmem:[#allocation6 + $0x68] sm:$0xff]
    %v4065 = vld [vmem:[#allocation6 + $0x70] sm:$0xff]
    %v4066 = vld [vmem:[#allocation6 + $0x78] sm:$0xff]
    %4067 = vmatprep.subr.mxu0 0.0
    %v4068 = vand.u32 %v4051, 4294901760
    %4069 = vmatpush1.msra.mxu0 %v4068
    %4070 = vmatprep.subr.mxu0 0.0
    %v4071 = vand.u32 %v4052, 4294901760
    %4072 = vmatpush1.msra.mxu0 %v4071
    %4073 = vmatprep.subr.mxu0 0.0
    %v4074 = vand.u32 %v4053, 4294901760
    %4075 = vmatpush1.msra.mxu0 %v4074
    %4076 = vmatprep.subr.mxu0 0.0
    %v4077 = vand.u32 %v4054, 4294901760
    %4078 = vmatpush1.msra.mxu0 %v4077
    %4079 = vmatprep.subr.mxu0 0.0
    %v4080 = vand.u32 %v4055, 4294901760
    %4081 = vmatpush1.msra.mxu0 %v4080
    %4082 = vmatprep.subr.mxu0 0.0
    %v4083 = vand.u32 %v4056, 4294901760
    %4084 = vmatpush1.msra.mxu0 %v4083
    %4085 = vmatprep.subr.mxu0 0.0
    %v4086 = vand.u32 %v4057, 4294901760
    %4087 = vmatpush1.msra.mxu0 %v4086
    %4088 = vmatprep.subr.mxu0 0.0
    %v4089 = vand.u32 %v4058, 4294901760
    %4090 = vmatpush1.msra.mxu0 %v4089
    %4091 = vmatprep.subr.mxu0 0.0
    %v4092 = vand.u32 %v4059, 4294901760
    %4093 = vmatpush1.msra.mxu0 %v4092
    %4094 = vmatprep.subr.mxu0 0.0
    %v4095 = vand.u32 %v4060, 4294901760
    %4096 = vmatpush1.msra.mxu0 %v4095
    %4097 = vmatprep.subr.mxu0 0.0
    %v4098 = vand.u32 %v4061, 4294901760
    %4099 = vmatpush1.msra.mxu0 %v4098
    %4100 = vmatprep.subr.mxu0 0.0
    %v4101 = vand.u32 %v4062, 4294901760
    %4102 = vmatpush1.msra.mxu0 %v4101
    %4103 = vmatprep.subr.mxu0 0.0
    %v4104 = vand.u32 %v4063, 4294901760
    %4105 = vmatpush1.msra.mxu0 %v4104
    %4106 = vmatprep.subr.mxu0 0.0
    %v4107 = vand.u32 %v4064, 4294901760
    %4108 = vmatpush1.msra.mxu0 %v4107
    %4109 = vmatprep.subr.mxu0 0.0
    %v4110 = vand.u32 %v4065, 4294901760
    %4111 = vmatpush1.msra.mxu0 %v4110
    %4112 = vmatprep.subr.mxu0 0.0
    %v4113 = vand.u32 %v4066, 4294901760
    %4114 = vmatpush1.msra.mxu0 %v4113
    %4115 = vmatprep.subr.mxu0 0.0
    %4116 = vmatpush1.msra.mxu0 0.0
    %4117 = vmatprep.subr.mxu0 0.0
    %4118 = vmatpush1.msra.mxu0 0.0
    %4119 = vmatprep.subr.mxu0 0.0
    %4120 = vmatpush1.msra.mxu0 0.0
    %4121 = vmatprep.subr.mxu0 0.0
    %4122 = vmatpush1.msra.mxu0 0.0
    %4123 = vmatprep.subr.mxu0 0.0
    %4124 = vmatpush1.msra.mxu0 0.0
    %4125 = vmatprep.subr.mxu0 0.0
    %4126 = vmatpush1.msra.mxu0 0.0
    %4127 = vmatprep.subr.mxu0 0.0
    %4128 = vmatpush1.msra.mxu0 0.0
    %4129 = vmatprep.subr.mxu0 0.0
    %4130 = vmatpush1.msra.mxu0 0.0
    %4131 = vmatprep.subr.mxu0 0.0
    %4132 = vmatpush1.msra.mxu0 0.0
    %4133 = vmatprep.subr.mxu0 0.0
    %4134 = vmatpush1.msra.mxu0 0.0
    %4135 = vmatprep.subr.mxu0 0.0
    %4136 = vmatpush1.msra.mxu0 0.0
    %4137 = vmatprep.subr.mxu0 0.0
    %4138 = vmatpush1.msra.mxu0 0.0
    %4139 = vmatprep.subr.mxu0 0.0
    %4140 = vmatpush1.msra.mxu0 0.0
    %4141 = vmatprep.subr.mxu0 0.0
    %4142 = vmatpush1.msra.mxu0 0.0
    %4143 = vmatprep.subr.mxu0 0.0
    %4144 = vmatpush1.msra.mxu0 0.0
    %4145 = vmatprep.subr.mxu0 0.0
    %4146 = vmatpush1.msra.mxu0 0.0
    %4147 = vmatprep.mubr.f32.mxu0 0.0
    %v4148 = vand.u32 %v4050, 4294901760
    %v4149 = vsub.f32 %v4050, %v4148
    %v4150 = vand.u32 %v4149, 4294901760
    %v4151 = vsub.f32 %v4149, %v4150
    %v4152 = vand.u32 %v4151, 4294901760
    %4153 = vmatmul.mubr.f32.gmra.mrb[0].mxu0 %v4152
    %v4154 = vpop.f32.mrb[0].mxu0
    %v4155 = vadd.f32 0.0, %v4154
    %v4156 = vpop.f32.mrb[0].mxu0
    %4157 = vdwg.mxu0
    %4158 = vmatprep.subr.mxu0 0.0
    %v4159 = vand.u32 %v4051, 4294901760
    %v4160 = vsub.f32 %v4051, %v4159
    %v4161 = vand.u32 %v4160, 4294901760
    %v4162 = vsub.f32 %v4160, %v4161
    %v4163 = vand.u32 %v4162, 4294901760
    %4164 = vmatpush1.msra.mxu0 %v4163
    %4165 = vmatprep.subr.mxu0 0.0
    %v4166 = vand.u32 %v4052, 4294901760
    %v4167 = vsub.f32 %v4052, %v4166
    %v4168 = vand.u32 %v4167, 4294901760
    %v4169 = vsub.f32 %v4167, %v4168
    %v4170 = vand.u32 %v4169, 4294901760
    %4171 = vmatpush1.msra.mxu0 %v4170
    %4172 = vmatprep.subr.mxu0 0.0
    %v4173 = vand.u32 %v4053, 4294901760
    %v4174 = vsub.f32 %v4053, %v4173
    %v4175 = vand.u32 %v4174, 4294901760
    %v4176 = vsub.f32 %v4174, %v4175
    %v4177 = vand.u32 %v4176, 4294901760
    %4178 = vmatpush1.msra.mxu0 %v4177
    %4179 = vmatprep.subr.mxu0 0.0
    %v4180 = vand.u32 %v4054, 4294901760
    %v4181 = vsub.f32 %v4054, %v4180
    %v4182 = vand.u32 %v4181, 4294901760
    %v4183 = vsub.f32 %v4181, %v4182
    %v4184 = vand.u32 %v4183, 4294901760
    %4185 = vmatpush1.msra.mxu0 %v4184
    %4186 = vmatprep.subr.mxu0 0.0
    %v4187 = vand.u32 %v4055, 4294901760
    %v4188 = vsub.f32 %v4055, %v4187
    %v4189 = vand.u32 %v4188, 4294901760
    %v4190 = vsub.f32 %v4188, %v4189
    %v4191 = vand.u32 %v4190, 4294901760
    %4192 = vmatpush1.msra.mxu0 %v4191
    %4193 = vmatprep.subr.mxu0 0.0
    %v4194 = vand.u32 %v4056, 4294901760
    %v4195 = vsub.f32 %v4056, %v4194
    %v4196 = vand.u32 %v4195, 4294901760
    %v4197 = vsub.f32 %v4195, %v4196
    %v4198 = vand.u32 %v4197, 4294901760
    %4199 = vmatpush1.msra.mxu0 %v4198
    %4200 = vmatprep.subr.mxu0 0.0
    %v4201 = vand.u32 %v4057, 4294901760
    %v4202 = vsub.f32 %v4057, %v4201
    %v4203 = vand.u32 %v4202, 4294901760
    %v4204 = vsub.f32 %v4202, %v4203
    %v4205 = vand.u32 %v4204, 4294901760
    %4206 = vmatpush1.msra.mxu0 %v4205
    %4207 = vmatprep.subr.mxu0 0.0
    %v4208 = vand.u32 %v4058, 4294901760
    %v4209 = vsub.f32 %v4058, %v4208
    %v4210 = vand.u32 %v4209, 4294901760
    %v4211 = vsub.f32 %v4209, %v4210
    %v4212 = vand.u32 %v4211, 4294901760
    %4213 = vmatpush1.msra.mxu0 %v4212
    %4214 = vmatprep.subr.mxu0 0.0
    %v4215 = vand.u32 %v4059, 4294901760
    %v4216 = vsub.f32 %v4059, %v4215
    %v4217 = vand.u32 %v4216, 4294901760
    %v4218 = vsub.f32 %v4216, %v4217
    %v4219 = vand.u32 %v4218, 4294901760
    %4220 = vmatpush1.msra.mxu0 %v4219
    %4221 = vmatprep.subr.mxu0 0.0
    %v4222 = vand.u32 %v4060, 4294901760
    %v4223 = vsub.f32 %v4060, %v4222
    %v4224 = vand.u32 %v4223, 4294901760
    %v4225 = vsub.f32 %v4223, %v4224
    %v4226 = vand.u32 %v4225, 4294901760
    %4227 = vmatpush1.msra.mxu0 %v4226
    %4228 = vmatprep.subr.mxu0 0.0
    %v4229 = vand.u32 %v4061, 4294901760
    %v4230 = vsub.f32 %v4061, %v4229
    %v4231 = vand.u32 %v4230, 4294901760
    %v4232 = vsub.f32 %v4230, %v4231
    %v4233 = vand.u32 %v4232, 4294901760
    %4234 = vmatpush1.msra.mxu0 %v4233
    %4235 = vmatprep.subr.mxu0 0.0
    %v4236 = vand.u32 %v4062, 4294901760
    %v4237 = vsub.f32 %v4062, %v4236
    %v4238 = vand.u32 %v4237, 4294901760
    %v4239 = vsub.f32 %v4237, %v4238
    %v4240 = vand.u32 %v4239, 4294901760
    %4241 = vmatpush1.msra.mxu0 %v4240
    %4242 = vmatprep.subr.mxu0 0.0
    %v4243 = vand.u32 %v4063, 4294901760
    %v4244 = vsub.f32 %v4063, %v4243
    %v4245 = vand.u32 %v4244, 4294901760
    %v4246 = vsub.f32 %v4244, %v4245
    %v4247 = vand.u32 %v4246, 4294901760
    %4248 = vmatpush1.msra.mxu0 %v4247
    %4249 = vmatprep.subr.mxu0 0.0
    %v4250 = vand.u32 %v4064, 4294901760
    %v4251 = vsub.f32 %v4064, %v4250
    %v4252 = vand.u32 %v4251, 4294901760
    %v4253 = vsub.f32 %v4251, %v4252
    %v4254 = vand.u32 %v4253, 4294901760
    %4255 = vmatpush1.msra.mxu0 %v4254
    %4256 = vmatprep.subr.mxu0 0.0
    %v4257 = vand.u32 %v4065, 4294901760
    %v4258 = vsub.f32 %v4065, %v4257
    %v4259 = vand.u32 %v4258, 4294901760
    %v4260 = vsub.f32 %v4258, %v4259
    %v4261 = vand.u32 %v4260, 4294901760
    %4262 = vmatpush1.msra.mxu0 %v4261
    %4263 = vmatprep.subr.mxu0 0.0
    %v4264 = vand.u32 %v4066, 4294901760
    %v4265 = vsub.f32 %v4066, %v4264
    %v4266 = vand.u32 %v4265, 4294901760
    %v4267 = vsub.f32 %v4265, %v4266
    %v4268 = vand.u32 %v4267, 4294901760
    %4269 = vmatpush1.msra.mxu0 %v4268
    %4270 = vmatprep.subr.mxu0 0.0
    %4271 = vmatpush1.msra.mxu0 0.0
    %4272 = vmatprep.subr.mxu0 0.0
    %4273 = vmatpush1.msra.mxu0 0.0
    %4274 = vmatprep.subr.mxu0 0.0
    %4275 = vmatpush1.msra.mxu0 0.0
    %4276 = vmatprep.subr.mxu0 0.0
    %4277 = vmatpush1.msra.mxu0 0.0
    %4278 = vmatprep.subr.mxu0 0.0
    %4279 = vmatpush1.msra.mxu0 0.0
    %4280 = vmatprep.subr.mxu0 0.0
    %4281 = vmatpush1.msra.mxu0 0.0
    %4282 = vmatprep.subr.mxu0 0.0
    %4283 = vmatpush1.msra.mxu0 0.0
    %4284 = vmatprep.subr.mxu0 0.0
    %4285 = vmatpush1.msra.mxu0 0.0
    %4286 = vmatprep.subr.mxu0 0.0
    %4287 = vmatpush1.msra.mxu0 0.0
    %4288 = vmatprep.subr.mxu0 0.0
    %4289 = vmatpush1.msra.mxu0 0.0
    %4290 = vmatprep.subr.mxu0 0.0
    %4291 = vmatpush1.msra.mxu0 0.0
    %4292 = vmatprep.subr.mxu0 0.0
    %4293 = vmatpush1.msra.mxu0 0.0
    %4294 = vmatprep.subr.mxu0 0.0
    %4295 = vmatpush1.msra.mxu0 0.0
    %4296 = vmatprep.subr.mxu0 0.0
    %4297 = vmatpush1.msra.mxu0 0.0
    %4298 = vmatprep.subr.mxu0 0.0
    %4299 = vmatpush1.msra.mxu0 0.0
    %4300 = vmatprep.subr.mxu0 0.0
    %4301 = vmatpush1.msra.mxu0 0.0
    %4302 = vmatprep.mubr.f32.mxu0 0.0
    %v4303 = vand.u32 %v4050, 4294901760
    %4304 = vmatmul.mubr.f32.gmra.mrb[0].mxu0 %v4303
    %v4305 = vpop.f32.mrb[0].mxu0
    %v4306 = vadd.f32 %v4155, %v4305
    %v4307 = vpop.f32.mrb[0].mxu0
    %4308 = vdwg.mxu0
    %4309 = vmatprep.subr.mxu0 0.0
    %v4310 = vand.u32 %v4051, 4294901760
    %v4311 = vsub.f32 %v4051, %v4310
    %4312 = vmatpush1.msra.mxu0 %v4311
    %4313 = vmatprep.subr.mxu0 0.0
    %v4314 = vand.u32 %v4052, 4294901760
    %v4315 = vsub.f32 %v4052, %v4314
    %4316 = vmatpush1.msra.mxu0 %v4315
    %4317 = vmatprep.subr.mxu0 0.0
    %v4318 = vand.u32 %v4053, 4294901760
    %v4319 = vsub.f32 %v4053, %v4318
    %4320 = vmatpush1.msra.mxu0 %v4319
    %4321 = vmatprep.subr.mxu0 0.0
    %v4322 = vand.u32 %v4054, 4294901760
    %v4323 = vsub.f32 %v4054, %v4322
    %4324 = vmatpush1.msra.mxu0 %v4323
    %4325 = vmatprep.subr.mxu0 0.0
    %v4326 = vand.u32 %v4055, 4294901760
    %v4327 = vsub.f32 %v4055, %v4326
    %4328 = vmatpush1.msra.mxu0 %v4327
    %4329 = vmatprep.subr.mxu0 0.0
    %v4330 = vand.u32 %v4056, 4294901760
    %v4331 = vsub.f32 %v4056, %v4330
    %4332 = vmatpush1.msra.mxu0 %v4331
    %4333 = vmatprep.subr.mxu0 0.0
    %v4334 = vand.u32 %v4057, 4294901760
    %v4335 = vsub.f32 %v4057, %v4334
    %4336 = vmatpush1.msra.mxu0 %v4335
    %4337 = vmatprep.subr.mxu0 0.0
    %v4338 = vand.u32 %v4058, 4294901760
    %v4339 = vsub.f32 %v4058, %v4338
    %4340 = vmatpush1.msra.mxu0 %v4339
    %4341 = vmatprep.subr.mxu0 0.0
    %v4342 = vand.u32 %v4059, 4294901760
    %v4343 = vsub.f32 %v4059, %v4342
    %4344 = vmatpush1.msra.mxu0 %v4343
    %4345 = vmatprep.subr.mxu0 0.0
    %v4346 = vand.u32 %v4060, 4294901760
    %v4347 = vsub.f32 %v4060, %v4346
    %4348 = vmatpush1.msra.mxu0 %v4347
    %4349 = vmatprep.subr.mxu0 0.0
    %v4350 = vand.u32 %v4061, 4294901760
    %v4351 = vsub.f32 %v4061, %v4350
    %4352 = vmatpush1.msra.mxu0 %v4351
    %4353 = vmatprep.subr.mxu0 0.0
    %v4354 = vand.u32 %v4062, 4294901760
    %v4355 = vsub.f32 %v4062, %v4354
    %4356 = vmatpush1.msra.mxu0 %v4355
    %4357 = vmatprep.subr.mxu0 0.0
    %v4358 = vand.u32 %v4063, 4294901760
    %v4359 = vsub.f32 %v4063, %v4358
    %4360 = vmatpush1.msra.mxu0 %v4359
    %4361 = vmatprep.subr.mxu0 0.0
    %v4362 = vand.u32 %v4064, 4294901760
    %v4363 = vsub.f32 %v4064, %v4362
    %4364 = vmatpush1.msra.mxu0 %v4363
    %4365 = vmatprep.subr.mxu0 0.0
    %v4366 = vand.u32 %v4065, 4294901760
    %v4367 = vsub.f32 %v4065, %v4366
    %4368 = vmatpush1.msra.mxu0 %v4367
    %4369 = vmatprep.subr.mxu0 0.0
    %v4370 = vand.u32 %v4066, 4294901760
    %v4371 = vsub.f32 %v4066, %v4370
    %4372 = vmatpush1.msra.mxu0 %v4371
    %4373 = vmatprep.subr.mxu0 0.0
    %4374 = vmatpush1.msra.mxu0 0.0
    %4375 = vmatprep.subr.mxu0 0.0
    %4376 = vmatpush1.msra.mxu0 0.0
    %4377 = vmatprep.subr.mxu0 0.0
    %4378 = vmatpush1.msra.mxu0 0.0
    %4379 = vmatprep.subr.mxu0 0.0
    %4380 = vmatpush1.msra.mxu0 0.0
    %4381 = vmatprep.subr.mxu0 0.0
    %4382 = vmatpush1.msra.mxu0 0.0
    %4383 = vmatprep.subr.mxu0 0.0
    %4384 = vmatpush1.msra.mxu0 0.0
    %4385 = vmatprep.subr.mxu0 0.0
    %4386 = vmatpush1.msra.mxu0 0.0
    %4387 = vmatprep.subr.mxu0 0.0
    %4388 = vmatpush1.msra.mxu0 0.0
    %4389 = vmatprep.subr.mxu0 0.0
    %4390 = vmatpush1.msra.mxu0 0.0
    %4391 = vmatprep.subr.mxu0 0.0
    %4392 = vmatpush1.msra.mxu0 0.0
    %4393 = vmatprep.subr.mxu0 0.0
    %4394 = vmatpush1.msra.mxu0 0.0
    %4395 = vmatprep.subr.mxu0 0.0
    %4396 = vmatpush1.msra.mxu0 0.0
    %4397 = vmatprep.subr.mxu0 0.0
    %4398 = vmatpush1.msra.mxu0 0.0
    %4399 = vmatprep.subr.mxu0 0.0
    %4400 = vmatpush1.msra.mxu0 0.0
    %4401 = vmatprep.subr.mxu0 0.0
    %4402 = vmatpush1.msra.mxu0 0.0
    %4403 = vmatprep.subr.mxu0 0.0
    %4404 = vmatpush1.msra.mxu0 0.0
    %4405 = vmatprep.mubr.f32.mxu0 0.0
    %v4406 = vand.u32 %v4050, 4294901760
    %v4407 = vsub.f32 %v4050, %v4406
    %4408 = vmatmul.mubr.f32.gmra.mrb[0].mxu0 %v4407
    %v4409 = vpop.f32.mrb[0].mxu0
    %v4410 = vadd.f32 %v4306, %v4409
    %v4411 = vpop.f32.mrb[0].mxu0
    %4412 = vdwg.mxu0
    %4413 = vmatprep.subr.mxu0 0.0
    %v4414 = vand.u32 %v4051, 4294901760
    %4415 = vmatpush1.msra.mxu0 %v4414
    %4416 = vmatprep.subr.mxu0 0.0
    %v4417 = vand.u32 %v4052, 4294901760
    %4418 = vmatpush1.msra.mxu0 %v4417
    %4419 = vmatprep.subr.mxu0 0.0
    %v4420 = vand.u32 %v4053, 4294901760
    %4421 = vmatpush1.msra.mxu0 %v4420
    %4422 = vmatprep.subr.mxu0 0.0
    %v4423 = vand.u32 %v4054, 4294901760
    %4424 = vmatpush1.msra.mxu0 %v4423
    %4425 = vmatprep.subr.mxu0 0.0
    %v4426 = vand.u32 %v4055, 4294901760
    %4427 = vmatpush1.msra.mxu0 %v4426
    %4428 = vmatprep.subr.mxu0 0.0
    %v4429 = vand.u32 %v4056, 4294901760
    %4430 = vmatpush1.msra.mxu0 %v4429
    %4431 = vmatprep.subr.mxu0 0.0
    %v4432 = vand.u32 %v4057, 4294901760
    %4433 = vmatpush1.msra.mxu0 %v4432
    %4434 = vmatprep.subr.mxu0 0.0
    %v4435 = vand.u32 %v4058, 4294901760
    %4436 = vmatpush1.msra.mxu0 %v4435
    %4437 = vmatprep.subr.mxu0 0.0
    %v4438 = vand.u32 %v4059, 4294901760
    %4439 = vmatpush1.msra.mxu0 %v4438
    %4440 = vmatprep.subr.mxu0 0.0
    %v4441 = vand.u32 %v4060, 4294901760
    %4442 = vmatpush1.msra.mxu0 %v4441
    %4443 = vmatprep.subr.mxu0 0.0
    %v4444 = vand.u32 %v4061, 4294901760
    %4445 = vmatpush1.msra.mxu0 %v4444
    %4446 = vmatprep.subr.mxu0 0.0
    %v4447 = vand.u32 %v4062, 4294901760
    %4448 = vmatpush1.msra.mxu0 %v4447
    %4449 = vmatprep.subr.mxu0 0.0
    %v4450 = vand.u32 %v4063, 4294901760
    %4451 = vmatpush1.msra.mxu0 %v4450
    %4452 = vmatprep.subr.mxu0 0.0
    %v4453 = vand.u32 %v4064, 4294901760
    %4454 = vmatpush1.msra.mxu0 %v4453
    %4455 = vmatprep.subr.mxu0 0.0
    %v4456 = vand.u32 %v4065, 4294901760
    %4457 = vmatpush1.msra.mxu0 %v4456
    %4458 = vmatprep.subr.mxu0 0.0
    %v4459 = vand.u32 %v4066, 4294901760
    %4460 = vmatpush1.msra.mxu0 %v4459
    %4461 = vmatprep.subr.mxu0 0.0
    %4462 = vmatpush1.msra.mxu0 0.0
    %4463 = vmatprep.subr.mxu0 0.0
    %4464 = vmatpush1.msra.mxu0 0.0
    %4465 = vmatprep.subr.mxu0 0.0
    %4466 = vmatpush1.msra.mxu0 0.0
    %4467 = vmatprep.subr.mxu0 0.0
    %4468 = vmatpush1.msra.mxu0 0.0
    %4469 = vmatprep.subr.mxu0 0.0
    %4470 = vmatpush1.msra.mxu0 0.0
    %4471 = vmatprep.subr.mxu0 0.0
    %4472 = vmatpush1.msra.mxu0 0.0
    %4473 = vmatprep.subr.mxu0 0.0
    %4474 = vmatpush1.msra.mxu0 0.0
    %4475 = vmatprep.subr.mxu0 0.0
    %4476 = vmatpush1.msra.mxu0 0.0
    %4477 = vmatprep.subr.mxu0 0.0
    %4478 = vmatpush1.msra.mxu0 0.0
    %4479 = vmatprep.subr.mxu0 0.0
    %4480 = vmatpush1.msra.mxu0 0.0
    %4481 = vmatprep.subr.mxu0 0.0
    %4482 = vmatpush1.msra.mxu0 0.0
    %4483 = vmatprep.subr.mxu0 0.0
    %4484 = vmatpush1.msra.mxu0 0.0
    %4485 = vmatprep.subr.mxu0 0.0
    %4486 = vmatpush1.msra.mxu0 0.0
    %4487 = vmatprep.subr.mxu0 0.0
    %4488 = vmatpush1.msra.mxu0 0.0
    %4489 = vmatprep.subr.mxu0 0.0
    %4490 = vmatpush1.msra.mxu0 0.0
    %4491 = vmatprep.subr.mxu0 0.0
    %4492 = vmatpush1.msra.mxu0 0.0
    %4493 = vmatprep.mubr.f32.mxu0 0.0
    %v4494 = vand.u32 %v4050, 4294901760
    %v4495 = vsub.f32 %v4050, %v4494
    %v4496 = vand.u32 %v4495, 4294901760
    %4497 = vmatmul.mubr.f32.gmra.mrb[0].mxu0 %v4496
    %v4498 = vpop.f32.mrb[0].mxu0
    %v4499 = vadd.f32 %v4410, %v4498
    %v4500 = vpop.f32.mrb[0].mxu0
    %4501 = vdwg.mxu0
    %4502 = vmatprep.subr.mxu0 0.0
    %v4503 = vand.u32 %v4051, 4294901760
    %v4504 = vsub.f32 %v4051, %v4503
    %v4505 = vand.u32 %v4504, 4294901760
    %4506 = vmatpush1.msra.mxu0 %v4505
    %4507 = vmatprep.subr.mxu0 0.0
    %v4508 = vand.u32 %v4052, 4294901760
    %v4509 = vsub.f32 %v4052, %v4508
    %v4510 = vand.u32 %v4509, 4294901760
    %4511 = vmatpush1.msra.mxu0 %v4510
    %4512 = vmatprep.subr.mxu0 0.0
    %v4513 = vand.u32 %v4053, 4294901760
    %v4514 = vsub.f32 %v4053, %v4513
    %v4515 = vand.u32 %v4514, 4294901760
    %4516 = vmatpush1.msra.mxu0 %v4515
    %4517 = vmatprep.subr.mxu0 0.0
    %v4518 = vand.u32 %v4054, 4294901760
    %v4519 = vsub.f32 %v4054, %v4518
    %v4520 = vand.u32 %v4519, 4294901760
    %4521 = vmatpush1.msra.mxu0 %v4520
    %4522 = vmatprep.subr.mxu0 0.0
    %v4523 = vand.u32 %v4055, 4294901760
    %v4524 = vsub.f32 %v4055, %v4523
    %v4525 = vand.u32 %v4524, 4294901760
    %4526 = vmatpush1.msra.mxu0 %v4525
    %4527 = vmatprep.subr.mxu0 0.0
    %v4528 = vand.u32 %v4056, 4294901760
    %v4529 = vsub.f32 %v4056, %v4528
    %v4530 = vand.u32 %v4529, 4294901760
    %4531 = vmatpush1.msra.mxu0 %v4530
    %4532 = vmatprep.subr.mxu0 0.0
    %v4533 = vand.u32 %v4057, 4294901760
    %v4534 = vsub.f32 %v4057, %v4533
    %v4535 = vand.u32 %v4534, 4294901760
    %4536 = vmatpush1.msra.mxu0 %v4535
    %4537 = vmatprep.subr.mxu0 0.0
    %v4538 = vand.u32 %v4058, 4294901760
    %v4539 = vsub.f32 %v4058, %v4538
    %v4540 = vand.u32 %v4539, 4294901760
    %4541 = vmatpush1.msra.mxu0 %v4540
    %4542 = vmatprep.subr.mxu0 0.0
    %v4543 = vand.u32 %v4059, 4294901760
    %v4544 = vsub.f32 %v4059, %v4543
    %v4545 = vand.u32 %v4544, 4294901760
    %4546 = vmatpush1.msra.mxu0 %v4545
    %4547 = vmatprep.subr.mxu0 0.0
    %v4548 = vand.u32 %v4060, 4294901760
    %v4549 = vsub.f32 %v4060, %v4548
    %v4550 = vand.u32 %v4549, 4294901760
    %4551 = vmatpush1.msra.mxu0 %v4550
    %4552 = vmatprep.subr.mxu0 0.0
    %v4553 = vand.u32 %v4061, 4294901760
    %v4554 = vsub.f32 %v4061, %v4553
    %v4555 = vand.u32 %v4554, 4294901760
    %4556 = vmatpush1.msra.mxu0 %v4555
    %4557 = vmatprep.subr.mxu0 0.0
    %v4558 = vand.u32 %v4062, 4294901760
    %v4559 = vsub.f32 %v4062, %v4558
    %v4560 = vand.u32 %v4559, 4294901760
    %4561 = vmatpush1.msra.mxu0 %v4560
    %4562 = vmatprep.subr.mxu0 0.0
    %v4563 = vand.u32 %v4063, 4294901760
    %v4564 = vsub.f32 %v4063, %v4563
    %v4565 = vand.u32 %v4564, 4294901760
    %4566 = vmatpush1.msra.mxu0 %v4565
    %4567 = vmatprep.subr.mxu0 0.0
    %v4568 = vand.u32 %v4064, 4294901760
    %v4569 = vsub.f32 %v4064, %v4568
    %v4570 = vand.u32 %v4569, 4294901760
    %4571 = vmatpush1.msra.mxu0 %v4570
    %4572 = vmatprep.subr.mxu0 0.0
    %v4573 = vand.u32 %v4065, 4294901760
    %v4574 = vsub.f32 %v4065, %v4573
    %v4575 = vand.u32 %v4574, 4294901760
    %4576 = vmatpush1.msra.mxu0 %v4575
    %4577 = vmatprep.subr.mxu0 0.0
    %v4578 = vand.u32 %v4066, 4294901760
    %v4579 = vsub.f32 %v4066, %v4578
    %v4580 = vand.u32 %v4579, 4294901760
    %4581 = vmatpush1.msra.mxu0 %v4580
    %4582 = vmatprep.subr.mxu0 0.0
    %4583 = vmatpush1.msra.mxu0 0.0
    %4584 = vmatprep.subr.mxu0 0.0
    %4585 = vmatpush1.msra.mxu0 0.0
    %4586 = vmatprep.subr.mxu0 0.0
    %4587 = vmatpush1.msra.mxu0 0.0
    %4588 = vmatprep.subr.mxu0 0.0
    %4589 = vmatpush1.msra.mxu0 0.0
    %4590 = vmatprep.subr.mxu0 0.0
    %4591 = vmatpush1.msra.mxu0 0.0
    %4592 = vmatprep.subr.mxu0 0.0
    %4593 = vmatpush1.msra.mxu0 0.0
    %4594 = vmatprep.subr.mxu0 0.0
    %4595 = vmatpush1.msra.mxu0 0.0
    %4596 = vmatprep.subr.mxu0 0.0
    %4597 = vmatpush1.msra.mxu0 0.0
    %4598 = vmatprep.subr.mxu0 0.0
    %4599 = vmatpush1.msra.mxu0 0.0
    %4600 = vmatprep.subr.mxu0 0.0
    %4601 = vmatpush1.msra.mxu0 0.0
    %4602 = vmatprep.subr.mxu0 0.0
    %4603 = vmatpush1.msra.mxu0 0.0
    %4604 = vmatprep.subr.mxu0 0.0
    %4605 = vmatpush1.msra.mxu0 0.0
    %4606 = vmatprep.subr.mxu0 0.0
    %4607 = vmatpush1.msra.mxu0 0.0
    %4608 = vmatprep.subr.mxu0 0.0
    %4609 = vmatpush1.msra.mxu0 0.0
    %4610 = vmatprep.subr.mxu0 0.0
    %4611 = vmatpush1.msra.mxu0 0.0
    %4612 = vmatprep.subr.mxu0 0.0
    %4613 = vmatpush1.msra.mxu0 0.0
    %4614 = vmatprep.mubr.f32.mxu0 0.0
    %v4615 = vand.u32 %v4050, 4294901760
    %4616 = vmatmul.mubr.f32.gmra.mrb[0].mxu0 %v4615
    %v4617 = vpop.f32.mrb[0].mxu0
    %v4618 = vadd.f32 %v4499, %v4617
    %v4619 = vpop.f32.mrb[0].mxu0
    %4620 = vdwg.mxu0
    %4621 = vmatprep.subr.mxu0 0.0
    %v4622 = vand.u32 %v4051, 4294901760
    %4623 = vmatpush1.msra.mxu0 %v4622
    %4624 = vmatprep.subr.mxu0 0.0
    %v4625 = vand.u32 %v4052, 4294901760
    %4626 = vmatpush1.msra.mxu0 %v4625
    %4627 = vmatprep.subr.mxu0 0.0
    %v4628 = vand.u32 %v4053, 4294901760
    %4629 = vmatpush1.msra.mxu0 %v4628
    %4630 = vmatprep.subr.mxu0 0.0
    %v4631 = vand.u32 %v4054, 4294901760
    %4632 = vmatpush1.msra.mxu0 %v4631
    %4633 = vmatprep.subr.mxu0 0.0
    %v4634 = vand.u32 %v4055, 4294901760
    %4635 = vmatpush1.msra.mxu0 %v4634
    %4636 = vmatprep.subr.mxu0 0.0
    %v4637 = vand.u32 %v4056, 4294901760
    %4638 = vmatpush1.msra.mxu0 %v4637
    %4639 = vmatprep.subr.mxu0 0.0
    %v4640 = vand.u32 %v4057, 4294901760
    %4641 = vmatpush1.msra.mxu0 %v4640
    %4642 = vmatprep.subr.mxu0 0.0
    %v4643 = vand.u32 %v4058, 4294901760
    %4644 = vmatpush1.msra.mxu0 %v4643
    %4645 = vmatprep.subr.mxu0 0.0
    %v4646 = vand.u32 %v4059, 4294901760
    %4647 = vmatpush1.msra.mxu0 %v4646
    %4648 = vmatprep.subr.mxu0 0.0
    %v4649 = vand.u32 %v4060, 4294901760
    %4650 = vmatpush1.msra.mxu0 %v4649
    %4651 = vmatprep.subr.mxu0 0.0
    %v4652 = vand.u32 %v4061, 4294901760
    %4653 = vmatpush1.msra.mxu0 %v4652
    %4654 = vmatprep.subr.mxu0 0.0
    %v4655 = vand.u32 %v4062, 4294901760
    %4656 = vmatpush1.msra.mxu0 %v4655
    %4657 = vmatprep.subr.mxu0 0.0
    %v4658 = vand.u32 %v4063, 4294901760
    %4659 = vmatpush1.msra.mxu0 %v4658
    %4660 = vmatprep.subr.mxu0 0.0
    %v4661 = vand.u32 %v4064, 4294901760
    %4662 = vmatpush1.msra.mxu0 %v4661
    %4663 = vmatprep.subr.mxu0 0.0
    %v4664 = vand.u32 %v4065, 4294901760
    %4665 = vmatpush1.msra.mxu0 %v4664
    %4666 = vmatprep.subr.mxu0 0.0
    %v4667 = vand.u32 %v4066, 4294901760
    %4668 = vmatpush1.msra.mxu0 %v4667
    %4669 = vmatprep.subr.mxu0 0.0
    %4670 = vmatpush1.msra.mxu0 0.0
    %4671 = vmatprep.subr.mxu0 0.0
    %4672 = vmatpush1.msra.mxu0 0.0
    %4673 = vmatprep.subr.mxu0 0.0
    %4674 = vmatpush1.msra.mxu0 0.0
    %4675 = vmatprep.subr.mxu0 0.0
    %4676 = vmatpush1.msra.mxu0 0.0
    %4677 = vmatprep.subr.mxu0 0.0
    %4678 = vmatpush1.msra.mxu0 0.0
    %4679 = vmatprep.subr.mxu0 0.0
    %4680 = vmatpush1.msra.mxu0 0.0
    %4681 = vmatprep.subr.mxu0 0.0
    %4682 = vmatpush1.msra.mxu0 0.0
    %4683 = vmatprep.subr.mxu0 0.0
    %4684 = vmatpush1.msra.mxu0 0.0
    %4685 = vmatprep.subr.mxu0 0.0
    %4686 = vmatpush1.msra.mxu0 0.0
    %4687 = vmatprep.subr.mxu0 0.0
    %4688 = vmatpush1.msra.mxu0 0.0
    %4689 = vmatprep.subr.mxu0 0.0
    %4690 = vmatpush1.msra.mxu0 0.0
    %4691 = vmatprep.subr.mxu0 0.0
    %4692 = vmatpush1.msra.mxu0 0.0
    %4693 = vmatprep.subr.mxu0 0.0
    %4694 = vmatpush1.msra.mxu0 0.0
    %4695 = vmatprep.subr.mxu0 0.0
    %4696 = vmatpush1.msra.mxu0 0.0
    %4697 = vmatprep.subr.mxu0 0.0
    %4698 = vmatpush1.msra.mxu0 0.0
    %4699 = vmatprep.subr.mxu0 0.0
    %4700 = vmatpush1.msra.mxu0 0.0
    %4701 = vmatprep.mubr.f32.mxu0 0.0
    %v4702 = vand.u32 %v4050, 4294901760
    %4703 = vmatmul.mubr.f32.gmra.mrb[0].mxu0 %v4702
    %v4704 = vpop.f32.mrb[0].mxu0
    %v4705 = vadd.f32 %v4618, %v4704
    %v4706 = vpop.f32.mrb[0].mxu0
    %4707 = vdwg.mxu0
    %4708 = vst [vmem:[%s9] sm:$0xff] %v4705
    // Predicated region
    $region50: #{forward.1} parent=1 // pred_check
      _
    $region51: #{forward.1} parent=1 // pred_check_branch
      %4710 = sbr.rel (0) target = $region53
    $region52: #{forward.1} parent=1 // pred_region
      _
    $region53: #{forward.1} parent=1 // pred_fallthru
      _
    // Predicated region
    $region54: #{forward.1} parent=1 // pred_check
      _
    $region55: #{forward.1} parent=1 // pred_check_branch
      %4712 = sbr.rel (0) target = $region57
    $region56: #{forward.1} parent=1 // pred_region
      _
    $region57: #{forward.1} parent=1 // pred_fallthru
      _
    %4713 = vsyncpa [#allocation3], 1
    %4714 = vsyncpa [#allocation5], 1

</llo_original>
